<compile_context>
chip_gen: v5e
topology: v5e:2x2
jax: 0.10.0
libtpu: 0.0.40
codegen_flags: <defaults>
</compile_context>

<pallas_src>
import functools
import math

import jax
import jax.numpy as jnp
from jax import lax
from jax.experimental import pallas as pl
from jax.experimental.pallas import tpu as pltpu


def _layernorm(v, g, b, eps=1e-5):
    # v: (R, D), g/b: (1, D)
    mu = jnp.mean(v, axis=-1, keepdims=True)
    var = jnp.mean((v - mu) ** 2, axis=-1, keepdims=True)
    return (v - mu) * lax.rsqrt(var + eps) * g + b


def _perceiver_block_kernel(Bt, S_l, S_x, D, H, mxu_dtype,
                            lat_ref, x_ref,
                            ln1_g_ref, ln1_b_ref, ln2_g_ref, ln2_b_ref,
                            lnff_g_ref, lnff_b_ref,
                            wq_ref, wk_ref, wv_ref,
                            bq_ref, bk_ref, bv_ref,
                            wo_ref, bo_ref,
                            fc_w_ref, fc_b_ref, proj_w_ref, proj_b_ref,
                            o_ref):
    f32 = jnp.float32
    dh = D // H
    scale = 1.0 / math.sqrt(dh)
    Rl = Bt * S_l

    lat = lat_ref[...].astype(f32)        # (Bt*S_l, D)  batch-major merged rows
    xin = x_ref[...].astype(f32)          # (Bt*S_x, D)

    # --- pre-norms (f32) ---
    q_n = _layernorm(lat, ln1_g_ref[...], ln1_b_ref[...])   # ln_1(latents)
    x_n = _layernorm(xin, ln2_g_ref[...], ln2_b_ref[...])   # ln_2(x)

    # MXU operands (bf16 on v6e/v7x; no-op cast in the f32 path)
    q_m = q_n.astype(mxu_dtype)
    x_m = x_n.astype(mxu_dtype)

    # --- multi-head attention: per-head weight tiles, batch-batched einsums ---
    acc = jnp.zeros((Rl, D), f32)
    for h in range(H):                    # static unroll; each iter is full-width K=D work
        q_h = jnp.dot(q_m, wq_ref[h], preferred_element_type=f32) + bq_ref[h]   # (Rl, dh)
        k_l = jnp.dot(q_m, wk_ref[h], preferred_element_type=f32) + bk_ref[h]   # (Rl, dh)
        k_x = jnp.dot(x_m, wk_ref[h], preferred_element_type=f32) + bk_ref[h]   # (Rx, dh)
        v_l = jnp.dot(q_m, wv_ref[h], preferred_element_type=f32) + bv_ref[h]   # (Rl, dh)
        v_x = jnp.dot(x_m, wv_ref[h], preferred_element_type=f32) + bv_ref[h]   # (Rx, dh)

        # layout-trivial splits of the batch-major row axis (S_l, S_x multiples of 8)
        q3 = (q_h * scale).reshape(Bt, S_l, dh).astype(mxu_dtype)
        kl3 = k_l.reshape(Bt, S_l, dh).astype(mxu_dtype)
        kx3 = k_x.reshape(Bt, S_x, dh).astype(mxu_dtype)
        vl3 = v_l.reshape(Bt, S_l, dh).astype(mxu_dtype)
        vx3 = v_x.reshape(Bt, S_x, dh).astype(mxu_dtype)

        # kv = concat([ln1(latents), ln2(x)]) handled as two score blocks in one softmax
        s_l = jnp.einsum('bqd,bkd->bqk', q3, kl3, preferred_element_type=f32)    # (Bt,S_l,S_l)
        s_x = jnp.einsum('bqd,bkd->bqk', q3, kx3, preferred_element_type=f32)    # (Bt,S_l,S_x)

        m = jnp.maximum(jnp.max(s_l, axis=-1, keepdims=True),
                        jnp.max(s_x, axis=-1, keepdims=True))
        p_l = jnp.exp(s_l - m)
        p_x = jnp.exp(s_x - m)
        denom = (jnp.sum(p_l, axis=-1, keepdims=True)
                 + jnp.sum(p_x, axis=-1, keepdims=True))
        inv = pl.reciprocal(denom, approx=True)                                   # EUP slot

        o3 = (jnp.einsum('bqk,bkd->bqd', p_l.astype(mxu_dtype), vl3,
                         preferred_element_type=f32)
              + jnp.einsum('bqk,bkd->bqd', p_x.astype(mxu_dtype), vx3,
                           preferred_element_type=f32))
        o3 = o3 * inv                                                             # (Bt,S_l,dh)

        # accumulate into the output projection: concat_h(o_h) @ Wo^T == sum_h o_h @ Wo_h
        o_h = o3.reshape(Rl, dh).astype(mxu_dtype)
        acc = acc + jnp.dot(o_h, wo_ref[h], preferred_element_type=f32)

    lat = lat + acc + bo_ref[...]                          # residual 1 (+ out-proj bias)

    # --- MLP: Linear(D,4D) -> SquaredReLU -> Linear(4D,D), merged rows ---
    h_in = _layernorm(lat, lnff_g_ref[...], lnff_b_ref[...])
    mid = jnp.dot(h_in.astype(mxu_dtype), fc_w_ref[...],
                  preferred_element_type=f32) + fc_b_ref[...]
    mid = jnp.maximum(mid, 0.0)
    mid = mid * mid
    mlp = jnp.dot(mid.astype(mxu_dtype), proj_w_ref[...],
                  preferred_element_type=f32) + proj_b_ref[...]

    o_ref[...] = (lat + mlp).astype(o_ref.dtype)           # residual 2


def _pick_batch_tile(batch, max_tile=8):
    t = min(batch, max_tile)
    while batch % t:
        t -= 1
    return t


def perceiver_attention_block(x, latents, params, n_heads, *,
                              mxu_dtype=jnp.bfloat16, batch_tile=None):
    """x: (S_x, B, D), latents: (S_l, B, D)  ->  (S_l, B, D)"""
    S_x, B, D = x.shape
    S_l = latents.shape[0]
    H = n_heads
    assert D % H == 0
    dh = D // H

    Bt = batch_tile if batch_tile is not None else _pick_batch_tile(B)
    assert B % Bt == 0

    # Batch-major + free row merge: (S, B, D) -> (B, S, D) -> (B*S, D)
    lat_rows = jnp.transpose(latents, (1, 0, 2)).reshape(B * S_l, D)
    x_rows = jnp.transpose(x, (1, 0, 2)).reshape(B * S_x, D)

    f32 = jnp.float32

    def row(p):
        return p.reshape(1, -1).astype(f32)

    in_w = params['in_proj_w']          # (3D, D) packed [Wq; Wk; Wv]
    in_b = params['in_proj_b']          # (3D,)
    wq_t = in_w[0:D].T                  # (D, D), laid out for rows @ W
    wk_t = in_w[D:2 * D].T
    wv_t = in_w[2 * D:3 * D].T

    def heads_w(w_t):                   # (D, D) -> (H, D, dh) per-head tiles
        return jnp.transpose(w_t.reshape(D, H, dh), (1, 0, 2)).astype(mxu_dtype)

    def heads_b(b):                     # (D,) -> (H, 1, dh)
        return b.reshape(H, 1, dh).astype(f32)

    weights = [
        row(params['ln1_g']), row(params['ln1_b']),
        row(params['ln2_g']), row(params['ln2_b']),
        row(params['lnff_g']), row(params['lnff_b']),
        heads_w(wq_t), heads_w(wk_t), heads_w(wv_t),
        heads_b(in_b[0:D]), heads_b(in_b[D:2 * D]), heads_b(in_b[2 * D:3 * D]),
        params['out_proj_w'].T.reshape(H, dh, D).astype(mxu_dtype),   # per-head row groups
        row(params['out_proj_b']),
        params['c_fc_w'].T.astype(mxu_dtype),   row(params['c_fc_b']),
        params['c_proj_w'].T.astype(mxu_dtype), row(params['c_proj_b']),
    ]

    def const_spec(shape):
        n = len(shape)
        return pl.BlockSpec(shape, lambda i, _n=n: (0,) * _n)   # grid-invariant -> resident

    in_specs = [
        pl.BlockSpec((Bt * S_l, D), lambda i: (i, 0)),
        pl.BlockSpec((Bt * S_x, D), lambda i: (i, 0)),
    ] + [const_spec(w.shape) for w in weights]

    kernel = functools.partial(_perceiver_block_kernel, Bt, S_l, S_x, D, H, mxu_dtype)

    out_rows = pl.pallas_call(
        kernel,
        out_shape=jax.ShapeDtypeStruct((B * S_l, D), latents.dtype),
        grid_spec=pltpu.PrefetchScalarGridSpec(
            num_scalar_prefetch=0,
            grid=(B // Bt,),
            in_specs=in_specs,
            out_specs=pl.BlockSpec((Bt * S_l, D), lambda i: (i, 0)),
        ),
        compiler_params=pltpu.CompilerParams(
            dimension_semantics=("parallel",),     # independent batch tiles (v7x megacore)
        ),
    )(lat_rows, x_rows, *weights)

    return jnp.transpose(out_rows.reshape(B, S_l, D), (1, 0, 2))   # back to (S_l, B, D)


def reference(x, latents, params, n_heads):
    """Pure-JAX reference matching the PyTorch forward semantics."""
    D = x.shape[-1]
    dh = D // n_heads

    def ln(v, g, b):
        mu = v.mean(-1, keepdims=True)
        var = ((v - mu) ** 2).mean(-1, keepdims=True)
        return (v - mu) / jnp.sqrt(var + 1e-5) * g + b

    q_in = ln(latents, params['ln1_g'], params['ln1_b'])          # (S_l, B, D)
    kv_in = jnp.concatenate(
        [q_in, ln(x, params['ln2_g'], params['ln2_b'])], axis=0)   # (S_kv, B, D)

    Wq, Wk, Wv = jnp.split(params['in_proj_w'], 3, axis=0)
    bq, bk, bv = jnp.split(params['in_proj_b'], 3)
    q = q_in @ Wq.T + bq
    k = kv_in @ Wk.T + bk
    v = kv_in @ Wv.T + bv

    def split_heads(t):  # (S, B, D) -> (B, H, S, dh)
        S, B, _ = t.shape
        return t.reshape(S, B, n_heads, dh).transpose(1, 2, 0, 3)

    qh, kh, vh = split_heads(q), split_heads(k), split_heads(v)
    s = jnp.einsum('bhqd,bhkd->bhqk', qh, kh) / math.sqrt(dh)
    p = jax.nn.softmax(s, axis=-1)
    o = jnp.einsum('bhqk,bhkd->bhqd', p, vh)                       # (B,H,S_l,dh)
    o = o.transpose(2, 0, 1, 3).reshape(q_in.shape[0], x.shape[1], D)
    attn = o @ params['out_proj_w'].T + params['out_proj_b']

    latents = latents + attn
    h = ln(latents, params['lnff_g'], params['lnff_b'])
    h = h @ params['c_fc_w'].T + params['c_fc_b']
    h = jnp.maximum(h, 0.0) ** 2
    latents = latents + h @ params['c_proj_w'].T + params['c_proj_b']
    return latents


if __name__ == "__main__":
    key = jax.random.PRNGKey(0)
    D, H = 32, 4            # d_model, n_heads
    S_x, S_l, B = 16, 8, 2  # x sequence, latent sequence, batch

    keys = jax.random.split(key, 12)
    x = jax.random.normal(keys[0], (S_x, B, D), jnp.float32)
    latents = jax.random.normal(keys[1], (S_l, B, D), jnp.float32)

    params = {
        'ln1_g': 1.0 + 0.05 * jax.random.normal(keys[2], (D,), jnp.float32),
        'ln1_b': 0.05 * jax.random.normal(keys[3], (D,), jnp.float32),
        'ln2_g': 1.0 + 0.05 * jax.random.normal(keys[4], (D,), jnp.float32),
        'ln2_b': 0.05 * jax.random.normal(keys[5], (D,), jnp.float32),
        'lnff_g': 1.0 + 0.05 * jax.random.normal(keys[6], (D,), jnp.float32),
        'lnff_b': 0.05 * jax.random.normal(keys[7], (D,), jnp.float32),
        'in_proj_w': 0.05 * jax.random.normal(keys[8], (3 * D, D), jnp.float32),
        'in_proj_b': jnp.zeros((3 * D,), jnp.float32),
        'out_proj_w': 0.05 * jax.random.normal(keys[9], (D, D), jnp.float32),
        'out_proj_b': jnp.zeros((D,), jnp.float32),
        'c_fc_w': 0.05 * jax.random.normal(keys[10], (4 * D, D), jnp.float32),
        'c_fc_b': jnp.zeros((4 * D,), jnp.float32),
        'c_proj_w': 0.05 * jax.random.normal(keys[11], (D, 4 * D), jnp.float32),
        'c_proj_b': jnp.zeros((D,), jnp.float32),
    }

    ref = reference(x, latents, params, H)

    # f32 MXU path: bit-for-bit-ish vs reference.
    out_f32 = jax.block_until_ready(
        perceiver_attention_block(x, latents, params, H, mxu_dtype=jnp.float32))
    assert out_f32.shape == (S_l, B, D)
    assert jnp.allclose(out_f32, ref, atol=2e-3, rtol=2e-3), "f32 mismatch vs reference"

    # bf16 MXU-operand path (preferred on v6e/v7x); f32 accumulation.
    out_bf16 = jax.block_until_ready(
        perceiver_attention_block(x, latents, params, H, mxu_dtype=jnp.bfloat16))
    assert out_bf16.shape == (S_l, B, D)
    assert jnp.allclose(out_bf16, ref, atol=2e-2, rtol=2e-2), "bf16 mismatch vs reference"

    print("KERNEL_OK")
</pallas_src>

<mosaic_0001>
module attributes {stable_mosaic.version = 11 : i64} {
  func.func @_perceiver_block_kernel(%arg0: i32, %arg1: memref<16x32xf32, #tpu.memory_space<vmem>>, %arg2: memref<32x32xf32, #tpu.memory_space<vmem>>, %arg3: memref<1x32xf32, #tpu.memory_space<vmem>>, %arg4: memref<1x32xf32, #tpu.memory_space<vmem>>, %arg5: memref<1x32xf32, #tpu.memory_space<vmem>>, %arg6: memref<1x32xf32, #tpu.memory_space<vmem>>, %arg7: memref<1x32xf32, #tpu.memory_space<vmem>>, %arg8: memref<1x32xf32, #tpu.memory_space<vmem>>, %arg9: memref<4x32x8xf32, #tpu.memory_space<vmem>>, %arg10: memref<4x32x8xf32, #tpu.memory_space<vmem>>, %arg11: memref<4x32x8xf32, #tpu.memory_space<vmem>>, %arg12: memref<4x1x8xf32, #tpu.memory_space<vmem>>, %arg13: memref<4x1x8xf32, #tpu.memory_space<vmem>>, %arg14: memref<4x1x8xf32, #tpu.memory_space<vmem>>, %arg15: memref<4x8x32xf32, #tpu.memory_space<vmem>>, %arg16: memref<1x32xf32, #tpu.memory_space<vmem>>, %arg17: memref<32x128xf32, #tpu.memory_space<vmem>>, %arg18: memref<1x128xf32, #tpu.memory_space<vmem>>, %arg19: memref<128x32xf32, #tpu.memory_space<vmem>>, %arg20: memref<1x32xf32, #tpu.memory_space<vmem>>, %arg21: memref<16x32xf32, #tpu.memory_space<vmem>>) attributes {dimension_semantics = [#tpu.dimension_semantics<parallel>], iteration_bounds = array<i64: 1>, scalar_prefetch = 0 : i64, scratch_operands = 0 : i64, tpu.core_type = #tpu.core_type<tc>, window_params = [{transform_indices = @transform_0, window_bounds = array<i64: 16, 32>}, {transform_indices = @transform_1, window_bounds = array<i64: 32, 32>}, {pipeline_mode = #tpu.pipeline_mode<synchronous>, transform_indices = @transform_2, window_bounds = array<i64: 1, 32>}, {pipeline_mode = #tpu.pipeline_mode<synchronous>, transform_indices = @transform_3, window_bounds = array<i64: 1, 32>}, {pipeline_mode = #tpu.pipeline_mode<synchronous>, transform_indices = @transform_4, window_bounds = array<i64: 1, 32>}, {pipeline_mode = #tpu.pipeline_mode<synchronous>, transform_indices = @transform_5, window_bounds = array<i64: 1, 32>}, {pipeline_mode = #tpu.pipeline_mode<synchronous>, transform_indices = @transform_6, window_bounds = array<i64: 1, 32>}, {pipeline_mode = #tpu.pipeline_mode<synchronous>, transform_indices = @transform_7, window_bounds = array<i64: 1, 32>}, {pipeline_mode = #tpu.pipeline_mode<synchronous>, transform_indices = @transform_8, window_bounds = array<i64: 4, 32, 8>}, {pipeline_mode = #tpu.pipeline_mode<synchronous>, transform_indices = @transform_9, window_bounds = array<i64: 4, 32, 8>}, {pipeline_mode = #tpu.pipeline_mode<synchronous>, transform_indices = @transform_10, window_bounds = array<i64: 4, 32, 8>}, {pipeline_mode = #tpu.pipeline_mode<synchronous>, transform_indices = @transform_11, window_bounds = array<i64: 4, 1, 8>}, {pipeline_mode = #tpu.pipeline_mode<synchronous>, transform_indices = @transform_12, window_bounds = array<i64: 4, 1, 8>}, {pipeline_mode = #tpu.pipeline_mode<synchronous>, transform_indices = @transform_13, window_bounds = array<i64: 4, 1, 8>}, {pipeline_mode = #tpu.pipeline_mode<synchronous>, transform_indices = @transform_14, window_bounds = array<i64: 4, 8, 32>}, {pipeline_mode = #tpu.pipeline_mode<synchronous>, transform_indices = @transform_15, window_bounds = array<i64: 1, 32>}, {pipeline_mode = #tpu.pipeline_mode<synchronous>, transform_indices = @transform_16, window_bounds = array<i64: 32, 128>}, {pipeline_mode = #tpu.pipeline_mode<synchronous>, transform_indices = @transform_17, window_bounds = array<i64: 1, 128>}, {pipeline_mode = #tpu.pipeline_mode<synchronous>, transform_indices = @transform_18, window_bounds = array<i64: 128, 32>}, {pipeline_mode = #tpu.pipeline_mode<synchronous>, transform_indices = @transform_19, window_bounds = array<i64: 1, 32>}, {transform_indices = @transform_20, window_bounds = array<i64: 16, 32>}]} {
    %c0 = arith.constant 0 : index
    %c0_0 = arith.constant 0 : index
    %0 = vector.load %arg1[%c0, %c0_0] : memref<16x32xf32, #tpu.memory_space<vmem>>, vector<16x32xf32>
    %c0_1 = arith.constant 0 : index
    %c0_2 = arith.constant 0 : index
    %1 = vector.load %arg2[%c0_1, %c0_2] : memref<32x32xf32, #tpu.memory_space<vmem>>, vector<32x32xf32>
    %c0_3 = arith.constant 0 : index
    %c0_4 = arith.constant 0 : index
    %2 = vector.load %arg3[%c0_3, %c0_4] : memref<1x32xf32, #tpu.memory_space<vmem>>, vector<1x32xf32>
    %c0_5 = arith.constant 0 : index
    %c0_6 = arith.constant 0 : index
    %3 = vector.load %arg4[%c0_5, %c0_6] : memref<1x32xf32, #tpu.memory_space<vmem>>, vector<1x32xf32>
    %cst = arith.constant dense<0.000000e+00> : vector<16xf32>
    %4 = vector.multi_reduction <add>, %0, %cst [1] : vector<16x32xf32> to vector<16xf32>
    %5 = vector.shape_cast %4 : vector<16xf32> to vector<16x1xf32>
    %cst_7 = arith.constant 3.200000e+01 : f32
    %6 = vector.broadcast %cst_7 : f32 to vector<16x1xf32>
    %7 = arith.divf %5, %6 : vector<16x1xf32>
    %8 = vector.broadcast %7 : vector<16x1xf32> to vector<16x32xf32>
    %9 = arith.subf %0, %8 : vector<16x32xf32>
    %10 = arith.mulf %9, %9 : vector<16x32xf32>
    %cst_8 = arith.constant dense<0.000000e+00> : vector<16xf32>
    %11 = vector.multi_reduction <add>, %10, %cst_8 [1] : vector<16x32xf32> to vector<16xf32>
    %12 = vector.shape_cast %11 : vector<16xf32> to vector<16x1xf32>
    %cst_9 = arith.constant 3.200000e+01 : f32
    %13 = vector.broadcast %cst_9 : f32 to vector<16x1xf32>
    %14 = arith.divf %12, %13 : vector<16x1xf32>
    %15 = vector.broadcast %7 : vector<16x1xf32> to vector<16x32xf32>
    %16 = arith.subf %0, %15 : vector<16x32xf32>
    %cst_10 = arith.constant 9.99999974E-6 : f32
    %17 = vector.broadcast %cst_10 : f32 to vector<16x1xf32>
    %18 = arith.addf %14, %17 : vector<16x1xf32>
    %19 = math.rsqrt %18 : vector<16x1xf32>
    %20 = vector.broadcast %19 : vector<16x1xf32> to vector<16x32xf32>
    %21 = arith.mulf %16, %20 : vector<16x32xf32>
    %22 = vector.broadcast %2 : vector<1x32xf32> to vector<16x32xf32>
    %23 = arith.mulf %21, %22 : vector<16x32xf32>
    %24 = vector.broadcast %3 : vector<1x32xf32> to vector<16x32xf32>
    %25 = arith.addf %23, %24 : vector<16x32xf32>
    %c0_11 = arith.constant 0 : index
    %c0_12 = arith.constant 0 : index
    %26 = vector.load %arg5[%c0_11, %c0_12] : memref<1x32xf32, #tpu.memory_space<vmem>>, vector<1x32xf32>
    %c0_13 = arith.constant 0 : index
    %c0_14 = arith.constant 0 : index
    %27 = vector.load %arg6[%c0_13, %c0_14] : memref<1x32xf32, #tpu.memory_space<vmem>>, vector<1x32xf32>
    %cst_15 = arith.constant dense<0.000000e+00> : vector<32xf32>
    %28 = vector.multi_reduction <add>, %1, %cst_15 [1] : vector<32x32xf32> to vector<32xf32>
    %29 = vector.shape_cast %28 : vector<32xf32> to vector<32x1xf32>
    %cst_16 = arith.constant 3.200000e+01 : f32
    %30 = vector.broadcast %cst_16 : f32 to vector<32x1xf32>
    %31 = arith.divf %29, %30 : vector<32x1xf32>
    %32 = vector.broadcast %31 : vector<32x1xf32> to vector<32x32xf32>
    %33 = arith.subf %1, %32 : vector<32x32xf32>
    %34 = arith.mulf %33, %33 : vector<32x32xf32>
    %cst_17 = arith.constant dense<0.000000e+00> : vector<32xf32>
    %35 = vector.multi_reduction <add>, %34, %cst_17 [1] : vector<32x32xf32> to vector<32xf32>
    %36 = vector.shape_cast %35 : vector<32xf32> to vector<32x1xf32>
    %cst_18 = arith.constant 3.200000e+01 : f32
    %37 = vector.broadcast %cst_18 : f32 to vector<32x1xf32>
    %38 = arith.divf %36, %37 : vector<32x1xf32>
    %39 = vector.broadcast %31 : vector<32x1xf32> to vector<32x32xf32>
    %40 = arith.subf %1, %39 : vector<32x32xf32>
    %cst_19 = arith.constant 9.99999974E-6 : f32
    %41 = vector.broadcast %cst_19 : f32 to vector<32x1xf32>
    %42 = arith.addf %38, %41 : vector<32x1xf32>
    %43 = math.rsqrt %42 : vector<32x1xf32>
    %44 = vector.broadcast %43 : vector<32x1xf32> to vector<32x32xf32>
    %45 = arith.mulf %40, %44 : vector<32x32xf32>
    %46 = vector.broadcast %26 : vector<1x32xf32> to vector<32x32xf32>
    %47 = arith.mulf %45, %46 : vector<32x32xf32>
    %48 = vector.broadcast %27 : vector<1x32xf32> to vector<32x32xf32>
    %49 = arith.addf %47, %48 : vector<32x32xf32>
    %cst_20 = arith.constant 0.000000e+00 : f32
    %50 = vector.broadcast %cst_20 : f32 to vector<16x32xf32>
    %c0_21 = arith.constant 0 : index
    %c0_22 = arith.constant 0 : index
    %c0_23 = arith.constant 0 : index
    %51 = vector.load %arg9[%c0_21, %c0_22, %c0_23] : memref<4x32x8xf32, #tpu.memory_space<vmem>>, vector<1x32x8xf32>
    %52 = vector.shape_cast %51 : vector<1x32x8xf32> to vector<32x8xf32>
    %cst_24 = arith.constant dense<0.000000e+00> : vector<16x8xf32>
    %53 = tpu.matmul %25, %52, %cst_24 {dimension_numbers = #tpu.dot_dimension_numbers<[1], [0], [0], [1], [0, 0, 1, 1], [], []>} : vector<16x32xf32>, vector<32x8xf32>, vector<16x8xf32> -> vector<16x8xf32>
    %c0_25 = arith.constant 0 : index
    %c0_26 = arith.constant 0 : index
    %c0_27 = arith.constant 0 : index
    %54 = vector.load %arg12[%c0_25, %c0_26, %c0_27] : memref<4x1x8xf32, #tpu.memory_space<vmem>>, vector<1x1x8xf32>
    %55 = vector.shape_cast %54 : vector<1x1x8xf32> to vector<1x8xf32>
    %56 = vector.broadcast %55 : vector<1x8xf32> to vector<16x8xf32>
    %57 = arith.addf %53, %56 : vector<16x8xf32>
    %c0_28 = arith.constant 0 : index
    %c0_29 = arith.constant 0 : index
    %c0_30 = arith.constant 0 : index
    %58 = vector.load %arg10[%c0_28, %c0_29, %c0_30] : memref<4x32x8xf32, #tpu.memory_space<vmem>>, vector<1x32x8xf32>
    %59 = vector.shape_cast %58 : vector<1x32x8xf32> to vector<32x8xf32>
    %cst_31 = arith.constant dense<0.000000e+00> : vector<16x8xf32>
    %60 = tpu.matmul %25, %59, %cst_31 {dimension_numbers = #tpu.dot_dimension_numbers<[1], [0], [0], [1], [0, 0, 1, 1], [], []>} : vector<16x32xf32>, vector<32x8xf32>, vector<16x8xf32> -> vector<16x8xf32>
    %c0_32 = arith.constant 0 : index
    %c0_33 = arith.constant 0 : index
    %c0_34 = arith.constant 0 : index
    %61 = vector.load %arg13[%c0_32, %c0_33, %c0_34] : memref<4x1x8xf32, #tpu.memory_space<vmem>>, vector<1x1x8xf32>
    %62 = vector.shape_cast %61 : vector<1x1x8xf32> to vector<1x8xf32>
    %63 = vector.broadcast %62 : vector<1x8xf32> to vector<16x8xf32>
    %64 = arith.addf %60, %63 : vector<16x8xf32>
    %c0_35 = arith.constant 0 : index
    %c0_36 = arith.constant 0 : index
    %c0_37 = arith.constant 0 : index
    %65 = vector.load %arg10[%c0_35, %c0_36, %c0_37] : memref<4x32x8xf32, #tpu.memory_space<vmem>>, vector<1x32x8xf32>
    %66 = vector.shape_cast %65 : vector<1x32x8xf32> to vector<32x8xf32>
    %cst_38 = arith.constant dense<0.000000e+00> : vector<32x8xf32>
    %67 = tpu.matmul %49, %66, %cst_38 {dimension_numbers = #tpu.dot_dimension_numbers<[1], [0], [0], [1], [0, 0, 1, 1], [], []>} : vector<32x32xf32>, vector<32x8xf32>, vector<32x8xf32> -> vector<32x8xf32>
    %c0_39 = arith.constant 0 : index
    %c0_40 = arith.constant 0 : index
    %c0_41 = arith.constant 0 : index
    %68 = vector.load %arg13[%c0_39, %c0_40, %c0_41] : memref<4x1x8xf32, #tpu.memory_space<vmem>>, vector<1x1x8xf32>
    %69 = vector.shape_cast %68 : vector<1x1x8xf32> to vector<1x8xf32>
    %70 = vector.broadcast %69 : vector<1x8xf32> to vector<32x8xf32>
    %71 = arith.addf %67, %70 : vector<32x8xf32>
    %c0_42 = arith.constant 0 : index
    %c0_43 = arith.constant 0 : index
    %c0_44 = arith.constant 0 : index
    %72 = vector.load %arg11[%c0_42, %c0_43, %c0_44] : memref<4x32x8xf32, #tpu.memory_space<vmem>>, vector<1x32x8xf32>
    %73 = vector.shape_cast %72 : vector<1x32x8xf32> to vector<32x8xf32>
    %cst_45 = arith.constant dense<0.000000e+00> : vector<16x8xf32>
    %74 = tpu.matmul %25, %73, %cst_45 {dimension_numbers = #tpu.dot_dimension_numbers<[1], [0], [0], [1], [0, 0, 1, 1], [], []>} : vector<16x32xf32>, vector<32x8xf32>, vector<16x8xf32> -> vector<16x8xf32>
    %c0_46 = arith.constant 0 : index
    %c0_47 = arith.constant 0 : index
    %c0_48 = arith.constant 0 : index
    %75 = vector.load %arg14[%c0_46, %c0_47, %c0_48] : memref<4x1x8xf32, #tpu.memory_space<vmem>>, vector<1x1x8xf32>
    %76 = vector.shape_cast %75 : vector<1x1x8xf32> to vector<1x8xf32>
    %77 = vector.broadcast %76 : vector<1x8xf32> to vector<16x8xf32>
    %78 = arith.addf %74, %77 : vector<16x8xf32>
    %c0_49 = arith.constant 0 : index
    %c0_50 = arith.constant 0 : index
    %c0_51 = arith.constant 0 : index
    %79 = vector.load %arg11[%c0_49, %c0_50, %c0_51] : memref<4x32x8xf32, #tpu.memory_space<vmem>>, vector<1x32x8xf32>
    %80 = vector.shape_cast %79 : vector<1x32x8xf32> to vector<32x8xf32>
    %cst_52 = arith.constant dense<0.000000e+00> : vector<32x8xf32>
    %81 = tpu.matmul %49, %80, %cst_52 {dimension_numbers = #tpu.dot_dimension_numbers<[1], [0], [0], [1], [0, 0, 1, 1], [], []>} : vector<32x32xf32>, vector<32x8xf32>, vector<32x8xf32> -> vector<32x8xf32>
    %c0_53 = arith.constant 0 : index
    %c0_54 = arith.constant 0 : index
    %c0_55 = arith.constant 0 : index
    %82 = vector.load %arg14[%c0_53, %c0_54, %c0_55] : memref<4x1x8xf32, #tpu.memory_space<vmem>>, vector<1x1x8xf32>
    %83 = vector.shape_cast %82 : vector<1x1x8xf32> to vector<1x8xf32>
    %84 = vector.broadcast %83 : vector<1x8xf32> to vector<32x8xf32>
    %85 = arith.addf %81, %84 : vector<32x8xf32>
    %cst_56 = arith.constant 0.353553385 : f32
    %86 = vector.broadcast %cst_56 : f32 to vector<16x8xf32>
    %87 = arith.mulf %57, %86 : vector<16x8xf32>
    %88 = vector.shape_cast %87 : vector<16x8xf32> to vector<2x8x8xf32>
    %89 = vector.shape_cast %64 : vector<16x8xf32> to vector<2x8x8xf32>
    %90 = vector.shape_cast %71 : vector<32x8xf32> to vector<2x16x8xf32>
    %91 = vector.shape_cast %78 : vector<16x8xf32> to vector<2x8x8xf32>
    %92 = vector.shape_cast %85 : vector<32x8xf32> to vector<2x16x8xf32>
    "tpu.trace_start"() <{level = 10 : i32, message = "bqd,bkd->bqk"}> : () -> ()
    %cst_57 = arith.constant dense<0.000000e+00> : vector<2x8x8xf32>
    %93 = tpu.matmul %88, %89, %cst_57 {dimension_numbers = #tpu.dot_dimension_numbers<[2], [2], [1], [1], [0, 0, 0, 1, 1, 1], [0], [0]>} : vector<2x8x8xf32>, vector<2x8x8xf32>, vector<2x8x8xf32> -> vector<2x8x8xf32>
    %cst_58 = arith.constant dense<0.000000e+00> : vector<2x8x16xf32>
    %94 = tpu.matmul %88, %90, %cst_58 {dimension_numbers = #tpu.dot_dimension_numbers<[2], [2], [1], [1], [0, 0, 0, 1, 1, 1], [0], [0]>} : vector<2x8x8xf32>, vector<2x16x8xf32>, vector<2x8x16xf32> -> vector<2x8x16xf32>
    "tpu.trace_stop"() : () -> ()
    %cst_59 = arith.constant dense<0xFF800000> : vector<2x8xf32>
    %95 = vector.multi_reduction <maximumf>, %93, %cst_59 [2] : vector<2x8x8xf32> to vector<2x8xf32>
    %96 = vector.shape_cast %95 : vector<2x8xf32> to vector<2x8x1xf32>
    %cst_60 = arith.constant dense<0xFF800000> : vector<2x8xf32>
    %97 = vector.multi_reduction <maximumf>, %94, %cst_60 [2] : vector<2x8x16xf32> to vector<2x8xf32>
    %98 = vector.shape_cast %97 : vector<2x8xf32> to vector<2x8x1xf32>
    %99 = arith.maximumf %96, %98 : vector<2x8x1xf32>
    %100 = vector.broadcast %99 : vector<2x8x1xf32> to vector<2x8x8xf32>
    %101 = arith.subf %93, %100 : vector<2x8x8xf32>
    %102 = math.exp %101 : vector<2x8x8xf32>
    %103 = vector.broadcast %99 : vector<2x8x1xf32> to vector<2x8x16xf32>
    %104 = arith.subf %94, %103 : vector<2x8x16xf32>
    %105 = math.exp %104 : vector<2x8x16xf32>
    %cst_61 = arith.constant dense<0.000000e+00> : vector<2x8xf32>
    %106 = vector.multi_reduction <add>, %102, %cst_61 [2] : vector<2x8x8xf32> to vector<2x8xf32>
    %107 = vector.shape_cast %106 : vector<2x8xf32> to vector<2x8x1xf32>
    %cst_62 = arith.constant dense<0.000000e+00> : vector<2x8xf32>
    %108 = vector.multi_reduction <add>, %105, %cst_62 [2] : vector<2x8x16xf32> to vector<2x8xf32>
    %109 = vector.shape_cast %108 : vector<2x8xf32> to vector<2x8x1xf32>
    %110 = arith.addf %107, %109 : vector<2x8x1xf32>
    %111 = tpu.reciprocal %110 {approx = true} : vector<2x8x1xf32> -> vector<2x8x1xf32>
    "tpu.trace_start"() <{level = 10 : i32, message = "bqk,bkd->bqd"}> : () -> ()
    %cst_63 = arith.constant dense<0.000000e+00> : vector<2x8x8xf32>
    %112 = tpu.matmul %102, %91, %cst_63 {dimension_numbers = #tpu.dot_dimension_numbers<[2], [1], [1], [2], [0, 0, 0, 1, 1, 2], [0], [0]>} : vector<2x8x8xf32>, vector<2x8x8xf32>, vector<2x8x8xf32> -> vector<2x8x8xf32>
    %cst_64 = arith.constant dense<0.000000e+00> : vector<2x8x8xf32>
    %113 = tpu.matmul %105, %92, %cst_64 {dimension_numbers = #tpu.dot_dimension_numbers<[2], [1], [1], [2], [0, 0, 0, 1, 1, 2], [0], [0]>} : vector<2x8x16xf32>, vector<2x16x8xf32>, vector<2x8x8xf32> -> vector<2x8x8xf32>
    "tpu.trace_stop"() : () -> ()
    %114 = arith.addf %112, %113 : vector<2x8x8xf32>
    %115 = vector.broadcast %111 : vector<2x8x1xf32> to vector<2x8x8xf32>
    %116 = arith.mulf %114, %115 : vector<2x8x8xf32>
    %117 = vector.shape_cast %116 : vector<2x8x8xf32> to vector<16x8xf32>
    %c0_65 = arith.constant 0 : index
    %c0_66 = arith.constant 0 : index
    %c0_67 = arith.constant 0 : index
    %118 = vector.load %arg15[%c0_65, %c0_66, %c0_67] : memref<4x8x32xf32, #tpu.memory_space<vmem>>, vector<1x8x32xf32>
    %119 = vector.shape_cast %118 : vector<1x8x32xf32> to vector<8x32xf32>
    %cst_68 = arith.constant dense<0.000000e+00> : vector<16x32xf32>
    %120 = tpu.matmul %117, %119, %cst_68 {dimension_numbers = #tpu.dot_dimension_numbers<[1], [0], [0], [1], [0, 0, 1, 1], [], []>} : vector<16x8xf32>, vector<8x32xf32>, vector<16x32xf32> -> vector<16x32xf32>
    %121 = arith.addf %50, %120 : vector<16x32xf32>
    %c1 = arith.constant 1 : index
    %c0_69 = arith.constant 0 : index
    %c0_70 = arith.constant 0 : index
    %122 = vector.load %arg9[%c1, %c0_69, %c0_70] : memref<4x32x8xf32, #tpu.memory_space<vmem>>, vector<1x32x8xf32>
    %123 = vector.shape_cast %122 : vector<1x32x8xf32> to vector<32x8xf32>
    %cst_71 = arith.constant dense<0.000000e+00> : vector<16x8xf32>
    %124 = tpu.matmul %25, %123, %cst_71 {dimension_numbers = #tpu.dot_dimension_numbers<[1], [0], [0], [1], [0, 0, 1, 1], [], []>} : vector<16x32xf32>, vector<32x8xf32>, vector<16x8xf32> -> vector<16x8xf32>
    %c1_72 = arith.constant 1 : index
    %c0_73 = arith.constant 0 : index
    %c0_74 = arith.constant 0 : index
    %125 = vector.load %arg12[%c1_72, %c0_73, %c0_74] : memref<4x1x8xf32, #tpu.memory_space<vmem>>, vector<1x1x8xf32>
    %126 = vector.shape_cast %125 : vector<1x1x8xf32> to vector<1x8xf32>
    %127 = vector.broadcast %126 : vector<1x8xf32> to vector<16x8xf32>
    %128 = arith.addf %124, %127 : vector<16x8xf32>
    %c1_75 = arith.constant 1 : index
    %c0_76 = arith.constant 0 : index
    %c0_77 = arith.constant 0 : index
    %129 = vector.load %arg10[%c1_75, %c0_76, %c0_77] : memref<4x32x8xf32, #tpu.memory_space<vmem>>, vector<1x32x8xf32>
    %130 = vector.shape_cast %129 : vector<1x32x8xf32> to vector<32x8xf32>
    %cst_78 = arith.constant dense<0.000000e+00> : vector<16x8xf32>
    %131 = tpu.matmul %25, %130, %cst_78 {dimension_numbers = #tpu.dot_dimension_numbers<[1], [0], [0], [1], [0, 0, 1, 1], [], []>} : vector<16x32xf32>, vector<32x8xf32>, vector<16x8xf32> -> vector<16x8xf32>
    %c1_79 = arith.constant 1 : index
    %c0_80 = arith.constant 0 : index
    %c0_81 = arith.constant 0 : index
    %132 = vector.load %arg13[%c1_79, %c0_80, %c0_81] : memref<4x1x8xf32, #tpu.memory_space<vmem>>, vector<1x1x8xf32>
    %133 = vector.shape_cast %132 : vector<1x1x8xf32> to vector<1x8xf32>
    %134 = vector.broadcast %133 : vector<1x8xf32> to vector<16x8xf32>
    %135 = arith.addf %131, %134 : vector<16x8xf32>
    %c1_82 = arith.constant 1 : index
    %c0_83 = arith.constant 0 : index
    %c0_84 = arith.constant 0 : index
    %136 = vector.load %arg10[%c1_82, %c0_83, %c0_84] : memref<4x32x8xf32, #tpu.memory_space<vmem>>, vector<1x32x8xf32>
    %137 = vector.shape_cast %136 : vector<1x32x8xf32> to vector<32x8xf32>
    %cst_85 = arith.constant dense<0.000000e+00> : vector<32x8xf32>
    %138 = tpu.matmul %49, %137, %cst_85 {dimension_numbers = #tpu.dot_dimension_numbers<[1], [0], [0], [1], [0, 0, 1, 1], [], []>} : vector<32x32xf32>, vector<32x8xf32>, vector<32x8xf32> -> vector<32x8xf32>
    %c1_86 = arith.constant 1 : index
    %c0_87 = arith.constant 0 : index
    %c0_88 = arith.constant 0 : index
    %139 = vector.load %arg13[%c1_86, %c0_87, %c0_88] : memref<4x1x8xf32, #tpu.memory_space<vmem>>, vector<1x1x8xf32>
    %140 = vector.shape_cast %139 : vector<1x1x8xf32> to vector<1x8xf32>
    %141 = vector.broadcast %140 : vector<1x8xf32> to vector<32x8xf32>
    %142 = arith.addf %138, %141 : vector<32x8xf32>
    %c1_89 = arith.constant 1 : index
    %c0_90 = arith.constant 0 : index
    %c0_91 = arith.constant 0 : index
    %143 = vector.load %arg11[%c1_89, %c0_90, %c0_91] : memref<4x32x8xf32, #tpu.memory_space<vmem>>, vector<1x32x8xf32>
    %144 = vector.shape_cast %143 : vector<1x32x8xf32> to vector<32x8xf32>
    %cst_92 = arith.constant dense<0.000000e+00> : vector<16x8xf32>
    %145 = tpu.matmul %25, %144, %cst_92 {dimension_numbers = #tpu.dot_dimension_numbers<[1], [0], [0], [1], [0, 0, 1, 1], [], []>} : vector<16x32xf32>, vector<32x8xf32>, vector<16x8xf32> -> vector<16x8xf32>
    %c1_93 = arith.constant 1 : index
    %c0_94 = arith.constant 0 : index
    %c0_95 = arith.constant 0 : index
    %146 = vector.load %arg14[%c1_93, %c0_94, %c0_95] : memref<4x1x8xf32, #tpu.memory_space<vmem>>, vector<1x1x8xf32>
    %147 = vector.shape_cast %146 : vector<1x1x8xf32> to vector<1x8xf32>
    %148 = vector.broadcast %147 : vector<1x8xf32> to vector<16x8xf32>
    %149 = arith.addf %145, %148 : vector<16x8xf32>
    %c1_96 = arith.constant 1 : index
    %c0_97 = arith.constant 0 : index
    %c0_98 = arith.constant 0 : index
    %150 = vector.load %arg11[%c1_96, %c0_97, %c0_98] : memref<4x32x8xf32, #tpu.memory_space<vmem>>, vector<1x32x8xf32>
    %151 = vector.shape_cast %150 : vector<1x32x8xf32> to vector<32x8xf32>
    %cst_99 = arith.constant dense<0.000000e+00> : vector<32x8xf32>
    %152 = tpu.matmul %49, %151, %cst_99 {dimension_numbers = #tpu.dot_dimension_numbers<[1], [0], [0], [1], [0, 0, 1, 1], [], []>} : vector<32x32xf32>, vector<32x8xf32>, vector<32x8xf32> -> vector<32x8xf32>
    %c1_100 = arith.constant 1 : index
    %c0_101 = arith.constant 0 : index
    %c0_102 = arith.constant 0 : index
    %153 = vector.load %arg14[%c1_100, %c0_101, %c0_102] : memref<4x1x8xf32, #tpu.memory_space<vmem>>, vector<1x1x8xf32>
    %154 = vector.shape_cast %153 : vector<1x1x8xf32> to vector<1x8xf32>
    %155 = vector.broadcast %154 : vector<1x8xf32> to vector<32x8xf32>
    %156 = arith.addf %152, %155 : vector<32x8xf32>
    %cst_103 = arith.constant 0.353553385 : f32
    %157 = vector.broadcast %cst_103 : f32 to vector<16x8xf32>
    %158 = arith.mulf %128, %157 : vector<16x8xf32>
    %159 = vector.shape_cast %158 : vector<16x8xf32> to vector<2x8x8xf32>
    %160 = vector.shape_cast %135 : vector<16x8xf32> to vector<2x8x8xf32>
    %161 = vector.shape_cast %142 : vector<32x8xf32> to vector<2x16x8xf32>
    %162 = vector.shape_cast %149 : vector<16x8xf32> to vector<2x8x8xf32>
    %163 = vector.shape_cast %156 : vector<32x8xf32> to vector<2x16x8xf32>
    "tpu.trace_start"() <{level = 10 : i32, message = "bqd,bkd->bqk"}> : () -> ()
    %cst_104 = arith.constant dense<0.000000e+00> : vector<2x8x8xf32>
    %164 = tpu.matmul %159, %160, %cst_104 {dimension_numbers = #tpu.dot_dimension_numbers<[2], [2], [1], [1], [0, 0, 0, 1, 1, 1], [0], [0]>} : vector<2x8x8xf32>, vector<2x8x8xf32>, vector<2x8x8xf32> -> vector<2x8x8xf32>
    %cst_105 = arith.constant dense<0.000000e+00> : vector<2x8x16xf32>
    %165 = tpu.matmul %159, %161, %cst_105 {dimension_numbers = #tpu.dot_dimension_numbers<[2], [2], [1], [1], [0, 0, 0, 1, 1, 1], [0], [0]>} : vector<2x8x8xf32>, vector<2x16x8xf32>, vector<2x8x16xf32> -> vector<2x8x16xf32>
    "tpu.trace_stop"() : () -> ()
    %cst_106 = arith.constant dense<0xFF800000> : vector<2x8xf32>
    %166 = vector.multi_reduction <maximumf>, %164, %cst_106 [2] : vector<2x8x8xf32> to vector<2x8xf32>
    %167 = vector.shape_cast %166 : vector<2x8xf32> to vector<2x8x1xf32>
    %cst_107 = arith.constant dense<0xFF800000> : vector<2x8xf32>
    %168 = vector.multi_reduction <maximumf>, %165, %cst_107 [2] : vector<2x8x16xf32> to vector<2x8xf32>
    %169 = vector.shape_cast %168 : vector<2x8xf32> to vector<2x8x1xf32>
    %170 = arith.maximumf %167, %169 : vector<2x8x1xf32>
    %171 = vector.broadcast %170 : vector<2x8x1xf32> to vector<2x8x8xf32>
    %172 = arith.subf %164, %171 : vector<2x8x8xf32>
    %173 = math.exp %172 : vector<2x8x8xf32>
    %174 = vector.broadcast %170 : vector<2x8x1xf32> to vector<2x8x16xf32>
    %175 = arith.subf %165, %174 : vector<2x8x16xf32>
    %176 = math.exp %175 : vector<2x8x16xf32>
    %cst_108 = arith.constant dense<0.000000e+00> : vector<2x8xf32>
    %177 = vector.multi_reduction <add>, %173, %cst_108 [2] : vector<2x8x8xf32> to vector<2x8xf32>
    %178 = vector.shape_cast %177 : vector<2x8xf32> to vector<2x8x1xf32>
    %cst_109 = arith.constant dense<0.000000e+00> : vector<2x8xf32>
    %179 = vector.multi_reduction <add>, %176, %cst_109 [2] : vector<2x8x16xf32> to vector<2x8xf32>
    %180 = vector.shape_cast %179 : vector<2x8xf32> to vector<2x8x1xf32>
    %181 = arith.addf %178, %180 : vector<2x8x1xf32>
    %182 = tpu.reciprocal %181 {approx = true} : vector<2x8x1xf32> -> vector<2x8x1xf32>
    "tpu.trace_start"() <{level = 10 : i32, message = "bqk,bkd->bqd"}> : () -> ()
    %cst_110 = arith.constant dense<0.000000e+00> : vector<2x8x8xf32>
    %183 = tpu.matmul %173, %162, %cst_110 {dimension_numbers = #tpu.dot_dimension_numbers<[2], [1], [1], [2], [0, 0, 0, 1, 1, 2], [0], [0]>} : vector<2x8x8xf32>, vector<2x8x8xf32>, vector<2x8x8xf32> -> vector<2x8x8xf32>
    %cst_111 = arith.constant dense<0.000000e+00> : vector<2x8x8xf32>
    %184 = tpu.matmul %176, %163, %cst_111 {dimension_numbers = #tpu.dot_dimension_numbers<[2], [1], [1], [2], [0, 0, 0, 1, 1, 2], [0], [0]>} : vector<2x8x16xf32>, vector<2x16x8xf32>, vector<2x8x8xf32> -> vector<2x8x8xf32>
    "tpu.trace_stop"() : () -> ()
    %185 = arith.addf %183, %184 : vector<2x8x8xf32>
    %186 = vector.broadcast %182 : vector<2x8x1xf32> to vector<2x8x8xf32>
    %187 = arith.mulf %185, %186 : vector<2x8x8xf32>
    %188 = vector.shape_cast %187 : vector<2x8x8xf32> to vector<16x8xf32>
    %c1_112 = arith.constant 1 : index
    %c0_113 = arith.constant 0 : index
    %c0_114 = arith.constant 0 : index
    %189 = vector.load %arg15[%c1_112, %c0_113, %c0_114] : memref<4x8x32xf32, #tpu.memory_space<vmem>>, vector<1x8x32xf32>
    %190 = vector.shape_cast %189 : vector<1x8x32xf32> to vector<8x32xf32>
    %cst_115 = arith.constant dense<0.000000e+00> : vector<16x32xf32>
    %191 = tpu.matmul %188, %190, %cst_115 {dimension_numbers = #tpu.dot_dimension_numbers<[1], [0], [0], [1], [0, 0, 1, 1], [], []>} : vector<16x8xf32>, vector<8x32xf32>, vector<16x32xf32> -> vector<16x32xf32>
    %192 = arith.addf %121, %191 : vector<16x32xf32>
    %c2 = arith.constant 2 : index
    %c0_116 = arith.constant 0 : index
    %c0_117 = arith.constant 0 : index
    %193 = vector.load %arg9[%c2, %c0_116, %c0_117] : memref<4x32x8xf32, #tpu.memory_space<vmem>>, vector<1x32x8xf32>
    %194 = vector.shape_cast %193 : vector<1x32x8xf32> to vector<32x8xf32>
    %cst_118 = arith.constant dense<0.000000e+00> : vector<16x8xf32>
    %195 = tpu.matmul %25, %194, %cst_118 {dimension_numbers = #tpu.dot_dimension_numbers<[1], [0], [0], [1], [0, 0, 1, 1], [], []>} : vector<16x32xf32>, vector<32x8xf32>, vector<16x8xf32> -> vector<16x8xf32>
    %c2_119 = arith.constant 2 : index
    %c0_120 = arith.constant 0 : index
    %c0_121 = arith.constant 0 : index
    %196 = vector.load %arg12[%c2_119, %c0_120, %c0_121] : memref<4x1x8xf32, #tpu.memory_space<vmem>>, vector<1x1x8xf32>
    %197 = vector.shape_cast %196 : vector<1x1x8xf32> to vector<1x8xf32>
    %198 = vector.broadcast %197 : vector<1x8xf32> to vector<16x8xf32>
    %199 = arith.addf %195, %198 : vector<16x8xf32>
    %c2_122 = arith.constant 2 : index
    %c0_123 = arith.constant 0 : index
    %c0_124 = arith.constant 0 : index
    %200 = vector.load %arg10[%c2_122, %c0_123, %c0_124] : memref<4x32x8xf32, #tpu.memory_space<vmem>>, vector<1x32x8xf32>
    %201 = vector.shape_cast %200 : vector<1x32x8xf32> to vector<32x8xf32>
    %cst_125 = arith.constant dense<0.000000e+00> : vector<16x8xf32>
    %202 = tpu.matmul %25, %201, %cst_125 {dimension_numbers = #tpu.dot_dimension_numbers<[1], [0], [0], [1], [0, 0, 1, 1], [], []>} : vector<16x32xf32>, vector<32x8xf32>, vector<16x8xf32> -> vector<16x8xf32>
    %c2_126 = arith.constant 2 : index
    %c0_127 = arith.constant 0 : index
    %c0_128 = arith.constant 0 : index
    %203 = vector.load %arg13[%c2_126, %c0_127, %c0_128] : memref<4x1x8xf32, #tpu.memory_space<vmem>>, vector<1x1x8xf32>
    %204 = vector.shape_cast %203 : vector<1x1x8xf32> to vector<1x8xf32>
    %205 = vector.broadcast %204 : vector<1x8xf32> to vector<16x8xf32>
    %206 = arith.addf %202, %205 : vector<16x8xf32>
    %c2_129 = arith.constant 2 : index
    %c0_130 = arith.constant 0 : index
    %c0_131 = arith.constant 0 : index
    %207 = vector.load %arg10[%c2_129, %c0_130, %c0_131] : memref<4x32x8xf32, #tpu.memory_space<vmem>>, vector<1x32x8xf32>
    %208 = vector.shape_cast %207 : vector<1x32x8xf32> to vector<32x8xf32>
    %cst_132 = arith.constant dense<0.000000e+00> : vector<32x8xf32>
    %209 = tpu.matmul %49, %208, %cst_132 {dimension_numbers = #tpu.dot_dimension_numbers<[1], [0], [0], [1], [0, 0, 1, 1], [], []>} : vector<32x32xf32>, vector<32x8xf32>, vector<32x8xf32> -> vector<32x8xf32>
    %c2_133 = arith.constant 2 : index
    %c0_134 = arith.constant 0 : index
    %c0_135 = arith.constant 0 : index
    %210 = vector.load %arg13[%c2_133, %c0_134, %c0_135] : memref<4x1x8xf32, #tpu.memory_space<vmem>>, vector<1x1x8xf32>
    %211 = vector.shape_cast %210 : vector<1x1x8xf32> to vector<1x8xf32>
    %212 = vector.broadcast %211 : vector<1x8xf32> to vector<32x8xf32>
    %213 = arith.addf %209, %212 : vector<32x8xf32>
    %c2_136 = arith.constant 2 : index
    %c0_137 = arith.constant 0 : index
    %c0_138 = arith.constant 0 : index
    %214 = vector.load %arg11[%c2_136, %c0_137, %c0_138] : memref<4x32x8xf32, #tpu.memory_space<vmem>>, vector<1x32x8xf32>
    %215 = vector.shape_cast %214 : vector<1x32x8xf32> to vector<32x8xf32>
    %cst_139 = arith.constant dense<0.000000e+00> : vector<16x8xf32>
    %216 = tpu.matmul %25, %215, %cst_139 {dimension_numbers = #tpu.dot_dimension_numbers<[1], [0], [0], [1], [0, 0, 1, 1], [], []>} : vector<16x32xf32>, vector<32x8xf32>, vector<16x8xf32> -> vector<16x8xf32>
    %c2_140 = arith.constant 2 : index
    %c0_141 = arith.constant 0 : index
    %c0_142 = arith.constant 0 : index
    %217 = vector.load %arg14[%c2_140, %c0_141, %c0_142] : memref<4x1x8xf32, #tpu.memory_space<vmem>>, vector<1x1x8xf32>
    %218 = vector.shape_cast %217 : vector<1x1x8xf32> to vector<1x8xf32>
    %219 = vector.broadcast %218 : vector<1x8xf32> to vector<16x8xf32>
    %220 = arith.addf %216, %219 : vector<16x8xf32>
    %c2_143 = arith.constant 2 : index
    %c0_144 = arith.constant 0 : index
    %c0_145 = arith.constant 0 : index
    %221 = vector.load %arg11[%c2_143, %c0_144, %c0_145] : memref<4x32x8xf32, #tpu.memory_space<vmem>>, vector<1x32x8xf32>
    %222 = vector.shape_cast %221 : vector<1x32x8xf32> to vector<32x8xf32>
    %cst_146 = arith.constant dense<0.000000e+00> : vector<32x8xf32>
    %223 = tpu.matmul %49, %222, %cst_146 {dimension_numbers = #tpu.dot_dimension_numbers<[1], [0], [0], [1], [0, 0, 1, 1], [], []>} : vector<32x32xf32>, vector<32x8xf32>, vector<32x8xf32> -> vector<32x8xf32>
    %c2_147 = arith.constant 2 : index
    %c0_148 = arith.constant 0 : index
    %c0_149 = arith.constant 0 : index
    %224 = vector.load %arg14[%c2_147, %c0_148, %c0_149] : memref<4x1x8xf32, #tpu.memory_space<vmem>>, vector<1x1x8xf32>
    %225 = vector.shape_cast %224 : vector<1x1x8xf32> to vector<1x8xf32>
    %226 = vector.broadcast %225 : vector<1x8xf32> to vector<32x8xf32>
    %227 = arith.addf %223, %226 : vector<32x8xf32>
    %cst_150 = arith.constant 0.353553385 : f32
    %228 = vector.broadcast %cst_150 : f32 to vector<16x8xf32>
    %229 = arith.mulf %199, %228 : vector<16x8xf32>
    %230 = vector.shape_cast %229 : vector<16x8xf32> to vector<2x8x8xf32>
    %231 = vector.shape_cast %206 : vector<16x8xf32> to vector<2x8x8xf32>
    %232 = vector.shape_cast %213 : vector<32x8xf32> to vector<2x16x8xf32>
    %233 = vector.shape_cast %220 : vector<16x8xf32> to vector<2x8x8xf32>
    %234 = vector.shape_cast %227 : vector<32x8xf32> to vector<2x16x8xf32>
    "tpu.trace_start"() <{level = 10 : i32, message = "bqd,bkd->bqk"}> : () -> ()
    %cst_151 = arith.constant dense<0.000000e+00> : vector<2x8x8xf32>
    %235 = tpu.matmul %230, %231, %cst_151 {dimension_numbers = #tpu.dot_dimension_numbers<[2], [2], [1], [1], [0, 0, 0, 1, 1, 1], [0], [0]>} : vector<2x8x8xf32>, vector<2x8x8xf32>, vector<2x8x8xf32> -> vector<2x8x8xf32>
    %cst_152 = arith.constant dense<0.000000e+00> : vector<2x8x16xf32>
    %236 = tpu.matmul %230, %232, %cst_152 {dimension_numbers = #tpu.dot_dimension_numbers<[2], [2], [1], [1], [0, 0, 0, 1, 1, 1], [0], [0]>} : vector<2x8x8xf32>, vector<2x16x8xf32>, vector<2x8x16xf32> -> vector<2x8x16xf32>
    "tpu.trace_stop"() : () -> ()
    %cst_153 = arith.constant dense<0xFF800000> : vector<2x8xf32>
    %237 = vector.multi_reduction <maximumf>, %235, %cst_153 [2] : vector<2x8x8xf32> to vector<2x8xf32>
    %238 = vector.shape_cast %237 : vector<2x8xf32> to vector<2x8x1xf32>
    %cst_154 = arith.constant dense<0xFF800000> : vector<2x8xf32>
    %239 = vector.multi_reduction <maximumf>, %236, %cst_154 [2] : vector<2x8x16xf32> to vector<2x8xf32>
    %240 = vector.shape_cast %239 : vector<2x8xf32> to vector<2x8x1xf32>
    %241 = arith.maximumf %238, %240 : vector<2x8x1xf32>
    %242 = vector.broadcast %241 : vector<2x8x1xf32> to vector<2x8x8xf32>
    %243 = arith.subf %235, %242 : vector<2x8x8xf32>
    %244 = math.exp %243 : vector<2x8x8xf32>
    %245 = vector.broadcast %241 : vector<2x8x1xf32> to vector<2x8x16xf32>
    %246 = arith.subf %236, %245 : vector<2x8x16xf32>
    %247 = math.exp %246 : vector<2x8x16xf32>
    %cst_155 = arith.constant dense<0.000000e+00> : vector<2x8xf32>
    %248 = vector.multi_reduction <add>, %244, %cst_155 [2] : vector<2x8x8xf32> to vector<2x8xf32>
    %249 = vector.shape_cast %248 : vector<2x8xf32> to vector<2x8x1xf32>
    %cst_156 = arith.constant dense<0.000000e+00> : vector<2x8xf32>
    %250 = vector.multi_reduction <add>, %247, %cst_156 [2] : vector<2x8x16xf32> to vector<2x8xf32>
    %251 = vector.shape_cast %250 : vector<2x8xf32> to vector<2x8x1xf32>
    %252 = arith.addf %249, %251 : vector<2x8x1xf32>
    %253 = tpu.reciprocal %252 {approx = true} : vector<2x8x1xf32> -> vector<2x8x1xf32>
    "tpu.trace_start"() <{level = 10 : i32, message = "bqk,bkd->bqd"}> : () -> ()
    %cst_157 = arith.constant dense<0.000000e+00> : vector<2x8x8xf32>
    %254 = tpu.matmul %244, %233, %cst_157 {dimension_numbers = #tpu.dot_dimension_numbers<[2], [1], [1], [2], [0, 0, 0, 1, 1, 2], [0], [0]>} : vector<2x8x8xf32>, vector<2x8x8xf32>, vector<2x8x8xf32> -> vector<2x8x8xf32>
    %cst_158 = arith.constant dense<0.000000e+00> : vector<2x8x8xf32>
    %255 = tpu.matmul %247, %234, %cst_158 {dimension_numbers = #tpu.dot_dimension_numbers<[2], [1], [1], [2], [0, 0, 0, 1, 1, 2], [0], [0]>} : vector<2x8x16xf32>, vector<2x16x8xf32>, vector<2x8x8xf32> -> vector<2x8x8xf32>
    "tpu.trace_stop"() : () -> ()
    %256 = arith.addf %254, %255 : vector<2x8x8xf32>
    %257 = vector.broadcast %253 : vector<2x8x1xf32> to vector<2x8x8xf32>
    %258 = arith.mulf %256, %257 : vector<2x8x8xf32>
    %259 = vector.shape_cast %258 : vector<2x8x8xf32> to vector<16x8xf32>
    %c2_159 = arith.constant 2 : index
    %c0_160 = arith.constant 0 : index
    %c0_161 = arith.constant 0 : index
    %260 = vector.load %arg15[%c2_159, %c0_160, %c0_161] : memref<4x8x32xf32, #tpu.memory_space<vmem>>, vector<1x8x32xf32>
    %261 = vector.shape_cast %260 : vector<1x8x32xf32> to vector<8x32xf32>
    %cst_162 = arith.constant dense<0.000000e+00> : vector<16x32xf32>
    %262 = tpu.matmul %259, %261, %cst_162 {dimension_numbers = #tpu.dot_dimension_numbers<[1], [0], [0], [1], [0, 0, 1, 1], [], []>} : vector<16x8xf32>, vector<8x32xf32>, vector<16x32xf32> -> vector<16x32xf32>
    %263 = arith.addf %192, %262 : vector<16x32xf32>
    %c3 = arith.constant 3 : index
    %c0_163 = arith.constant 0 : index
    %c0_164 = arith.constant 0 : index
    %264 = vector.load %arg9[%c3, %c0_163, %c0_164] : memref<4x32x8xf32, #tpu.memory_space<vmem>>, vector<1x32x8xf32>
    %265 = vector.shape_cast %264 : vector<1x32x8xf32> to vector<32x8xf32>
    %cst_165 = arith.constant dense<0.000000e+00> : vector<16x8xf32>
    %266 = tpu.matmul %25, %265, %cst_165 {dimension_numbers = #tpu.dot_dimension_numbers<[1], [0], [0], [1], [0, 0, 1, 1], [], []>} : vector<16x32xf32>, vector<32x8xf32>, vector<16x8xf32> -> vector<16x8xf32>
    %c3_166 = arith.constant 3 : index
    %c0_167 = arith.constant 0 : index
    %c0_168 = arith.constant 0 : index
    %267 = vector.load %arg12[%c3_166, %c0_167, %c0_168] : memref<4x1x8xf32, #tpu.memory_space<vmem>>, vector<1x1x8xf32>
    %268 = vector.shape_cast %267 : vector<1x1x8xf32> to vector<1x8xf32>
    %269 = vector.broadcast %268 : vector<1x8xf32> to vector<16x8xf32>
    %270 = arith.addf %266, %269 : vector<16x8xf32>
    %c3_169 = arith.constant 3 : index
    %c0_170 = arith.constant 0 : index
    %c0_171 = arith.constant 0 : index
    %271 = vector.load %arg10[%c3_169, %c0_170, %c0_171] : memref<4x32x8xf32, #tpu.memory_space<vmem>>, vector<1x32x8xf32>
    %272 = vector.shape_cast %271 : vector<1x32x8xf32> to vector<32x8xf32>
    %cst_172 = arith.constant dense<0.000000e+00> : vector<16x8xf32>
    %273 = tpu.matmul %25, %272, %cst_172 {dimension_numbers = #tpu.dot_dimension_numbers<[1], [0], [0], [1], [0, 0, 1, 1], [], []>} : vector<16x32xf32>, vector<32x8xf32>, vector<16x8xf32> -> vector<16x8xf32>
    %c3_173 = arith.constant 3 : index
    %c0_174 = arith.constant 0 : index
    %c0_175 = arith.constant 0 : index
    %274 = vector.load %arg13[%c3_173, %c0_174, %c0_175] : memref<4x1x8xf32, #tpu.memory_space<vmem>>, vector<1x1x8xf32>
    %275 = vector.shape_cast %274 : vector<1x1x8xf32> to vector<1x8xf32>
    %276 = vector.broadcast %275 : vector<1x8xf32> to vector<16x8xf32>
    %277 = arith.addf %273, %276 : vector<16x8xf32>
    %c3_176 = arith.constant 3 : index
    %c0_177 = arith.constant 0 : index
    %c0_178 = arith.constant 0 : index
    %278 = vector.load %arg10[%c3_176, %c0_177, %c0_178] : memref<4x32x8xf32, #tpu.memory_space<vmem>>, vector<1x32x8xf32>
    %279 = vector.shape_cast %278 : vector<1x32x8xf32> to vector<32x8xf32>
    %cst_179 = arith.constant dense<0.000000e+00> : vector<32x8xf32>
    %280 = tpu.matmul %49, %279, %cst_179 {dimension_numbers = #tpu.dot_dimension_numbers<[1], [0], [0], [1], [0, 0, 1, 1], [], []>} : vector<32x32xf32>, vector<32x8xf32>, vector<32x8xf32> -> vector<32x8xf32>
    %c3_180 = arith.constant 3 : index
    %c0_181 = arith.constant 0 : index
    %c0_182 = arith.constant 0 : index
    %281 = vector.load %arg13[%c3_180, %c0_181, %c0_182] : memref<4x1x8xf32, #tpu.memory_space<vmem>>, vector<1x1x8xf32>
    %282 = vector.shape_cast %281 : vector<1x1x8xf32> to vector<1x8xf32>
    %283 = vector.broadcast %282 : vector<1x8xf32> to vector<32x8xf32>
    %284 = arith.addf %280, %283 : vector<32x8xf32>
    %c3_183 = arith.constant 3 : index
    %c0_184 = arith.constant 0 : index
    %c0_185 = arith.constant 0 : index
    %285 = vector.load %arg11[%c3_183, %c0_184, %c0_185] : memref<4x32x8xf32, #tpu.memory_space<vmem>>, vector<1x32x8xf32>
    %286 = vector.shape_cast %285 : vector<1x32x8xf32> to vector<32x8xf32>
    %cst_186 = arith.constant dense<0.000000e+00> : vector<16x8xf32>
    %287 = tpu.matmul %25, %286, %cst_186 {dimension_numbers = #tpu.dot_dimension_numbers<[1], [0], [0], [1], [0, 0, 1, 1], [], []>} : vector<16x32xf32>, vector<32x8xf32>, vector<16x8xf32> -> vector<16x8xf32>
    %c3_187 = arith.constant 3 : index
    %c0_188 = arith.constant 0 : index
    %c0_189 = arith.constant 0 : index
    %288 = vector.load %arg14[%c3_187, %c0_188, %c0_189] : memref<4x1x8xf32, #tpu.memory_space<vmem>>, vector<1x1x8xf32>
    %289 = vector.shape_cast %288 : vector<1x1x8xf32> to vector<1x8xf32>
    %290 = vector.broadcast %289 : vector<1x8xf32> to vector<16x8xf32>
    %291 = arith.addf %287, %290 : vector<16x8xf32>
    %c3_190 = arith.constant 3 : index
    %c0_191 = arith.constant 0 : index
    %c0_192 = arith.constant 0 : index
    %292 = vector.load %arg11[%c3_190, %c0_191, %c0_192] : memref<4x32x8xf32, #tpu.memory_space<vmem>>, vector<1x32x8xf32>
    %293 = vector.shape_cast %292 : vector<1x32x8xf32> to vector<32x8xf32>
    %cst_193 = arith.constant dense<0.000000e+00> : vector<32x8xf32>
    %294 = tpu.matmul %49, %293, %cst_193 {dimension_numbers = #tpu.dot_dimension_numbers<[1], [0], [0], [1], [0, 0, 1, 1], [], []>} : vector<32x32xf32>, vector<32x8xf32>, vector<32x8xf32> -> vector<32x8xf32>
    %c3_194 = arith.constant 3 : index
    %c0_195 = arith.constant 0 : index
    %c0_196 = arith.constant 0 : index
    %295 = vector.load %arg14[%c3_194, %c0_195, %c0_196] : memref<4x1x8xf32, #tpu.memory_space<vmem>>, vector<1x1x8xf32>
    %296 = vector.shape_cast %295 : vector<1x1x8xf32> to vector<1x8xf32>
    %297 = vector.broadcast %296 : vector<1x8xf32> to vector<32x8xf32>
    %298 = arith.addf %294, %297 : vector<32x8xf32>
    %cst_197 = arith.constant 0.353553385 : f32
    %299 = vector.broadcast %cst_197 : f32 to vector<16x8xf32>
    %300 = arith.mulf %270, %299 : vector<16x8xf32>
    %301 = vector.shape_cast %300 : vector<16x8xf32> to vector<2x8x8xf32>
    %302 = vector.shape_cast %277 : vector<16x8xf32> to vector<2x8x8xf32>
    %303 = vector.shape_cast %284 : vector<32x8xf32> to vector<2x16x8xf32>
    %304 = vector.shape_cast %291 : vector<16x8xf32> to vector<2x8x8xf32>
    %305 = vector.shape_cast %298 : vector<32x8xf32> to vector<2x16x8xf32>
    "tpu.trace_start"() <{level = 10 : i32, message = "bqd,bkd->bqk"}> : () -> ()
    %cst_198 = arith.constant dense<0.000000e+00> : vector<2x8x8xf32>
    %306 = tpu.matmul %301, %302, %cst_198 {dimension_numbers = #tpu.dot_dimension_numbers<[2], [2], [1], [1], [0, 0, 0, 1, 1, 1], [0], [0]>} : vector<2x8x8xf32>, vector<2x8x8xf32>, vector<2x8x8xf32> -> vector<2x8x8xf32>
    %cst_199 = arith.constant dense<0.000000e+00> : vector<2x8x16xf32>
    %307 = tpu.matmul %301, %303, %cst_199 {dimension_numbers = #tpu.dot_dimension_numbers<[2], [2], [1], [1], [0, 0, 0, 1, 1, 1], [0], [0]>} : vector<2x8x8xf32>, vector<2x16x8xf32>, vector<2x8x16xf32> -> vector<2x8x16xf32>
    "tpu.trace_stop"() : () -> ()
    %cst_200 = arith.constant dense<0xFF800000> : vector<2x8xf32>
    %308 = vector.multi_reduction <maximumf>, %306, %cst_200 [2] : vector<2x8x8xf32> to vector<2x8xf32>
    %309 = vector.shape_cast %308 : vector<2x8xf32> to vector<2x8x1xf32>
    %cst_201 = arith.constant dense<0xFF800000> : vector<2x8xf32>
    %310 = vector.multi_reduction <maximumf>, %307, %cst_201 [2] : vector<2x8x16xf32> to vector<2x8xf32>
    %311 = vector.shape_cast %310 : vector<2x8xf32> to vector<2x8x1xf32>
    %312 = arith.maximumf %309, %311 : vector<2x8x1xf32>
    %313 = vector.broadcast %312 : vector<2x8x1xf32> to vector<2x8x8xf32>
    %314 = arith.subf %306, %313 : vector<2x8x8xf32>
    %315 = math.exp %314 : vector<2x8x8xf32>
    %316 = vector.broadcast %312 : vector<2x8x1xf32> to vector<2x8x16xf32>
    %317 = arith.subf %307, %316 : vector<2x8x16xf32>
    %318 = math.exp %317 : vector<2x8x16xf32>
    %cst_202 = arith.constant dense<0.000000e+00> : vector<2x8xf32>
    %319 = vector.multi_reduction <add>, %315, %cst_202 [2] : vector<2x8x8xf32> to vector<2x8xf32>
    %320 = vector.shape_cast %319 : vector<2x8xf32> to vector<2x8x1xf32>
    %cst_203 = arith.constant dense<0.000000e+00> : vector<2x8xf32>
    %321 = vector.multi_reduction <add>, %318, %cst_203 [2] : vector<2x8x16xf32> to vector<2x8xf32>
    %322 = vector.shape_cast %321 : vector<2x8xf32> to vector<2x8x1xf32>
    %323 = arith.addf %320, %322 : vector<2x8x1xf32>
    %324 = tpu.reciprocal %323 {approx = true} : vector<2x8x1xf32> -> vector<2x8x1xf32>
    "tpu.trace_start"() <{level = 10 : i32, message = "bqk,bkd->bqd"}> : () -> ()
    %cst_204 = arith.constant dense<0.000000e+00> : vector<2x8x8xf32>
    %325 = tpu.matmul %315, %304, %cst_204 {dimension_numbers = #tpu.dot_dimension_numbers<[2], [1], [1], [2], [0, 0, 0, 1, 1, 2], [0], [0]>} : vector<2x8x8xf32>, vector<2x8x8xf32>, vector<2x8x8xf32> -> vector<2x8x8xf32>
    %cst_205 = arith.constant dense<0.000000e+00> : vector<2x8x8xf32>
    %326 = tpu.matmul %318, %305, %cst_205 {dimension_numbers = #tpu.dot_dimension_numbers<[2], [1], [1], [2], [0, 0, 0, 1, 1, 2], [0], [0]>} : vector<2x8x16xf32>, vector<2x16x8xf32>, vector<2x8x8xf32> -> vector<2x8x8xf32>
    "tpu.trace_stop"() : () -> ()
    %327 = arith.addf %325, %326 : vector<2x8x8xf32>
    %328 = vector.broadcast %324 : vector<2x8x1xf32> to vector<2x8x8xf32>
    %329 = arith.mulf %327, %328 : vector<2x8x8xf32>
    %330 = vector.shape_cast %329 : vector<2x8x8xf32> to vector<16x8xf32>
    %c3_206 = arith.constant 3 : index
    %c0_207 = arith.constant 0 : index
    %c0_208 = arith.constant 0 : index
    %331 = vector.load %arg15[%c3_206, %c0_207, %c0_208] : memref<4x8x32xf32, #tpu.memory_space<vmem>>, vector<1x8x32xf32>
    %332 = vector.shape_cast %331 : vector<1x8x32xf32> to vector<8x32xf32>
    %cst_209 = arith.constant dense<0.000000e+00> : vector<16x32xf32>
    %333 = tpu.matmul %330, %332, %cst_209 {dimension_numbers = #tpu.dot_dimension_numbers<[1], [0], [0], [1], [0, 0, 1, 1], [], []>} : vector<16x8xf32>, vector<8x32xf32>, vector<16x32xf32> -> vector<16x32xf32>
    %334 = arith.addf %263, %333 : vector<16x32xf32>
    %335 = arith.addf %0, %334 : vector<16x32xf32>
    %c0_210 = arith.constant 0 : index
    %c0_211 = arith.constant 0 : index
    %336 = vector.load %arg16[%c0_210, %c0_211] : memref<1x32xf32, #tpu.memory_space<vmem>>, vector<1x32xf32>
    %337 = vector.broadcast %336 : vector<1x32xf32> to vector<16x32xf32>
    %338 = arith.addf %335, %337 : vector<16x32xf32>
    %c0_212 = arith.constant 0 : index
    %c0_213 = arith.constant 0 : index
    %339 = vector.load %arg7[%c0_212, %c0_213] : memref<1x32xf32, #tpu.memory_space<vmem>>, vector<1x32xf32>
    %c0_214 = arith.constant 0 : index
    %c0_215 = arith.constant 0 : index
    %340 = vector.load %arg8[%c0_214, %c0_215] : memref<1x32xf32, #tpu.memory_space<vmem>>, vector<1x32xf32>
    %cst_216 = arith.constant dense<0.000000e+00> : vector<16xf32>
    %341 = vector.multi_reduction <add>, %338, %cst_216 [1] : vector<16x32xf32> to vector<16xf32>
    %342 = vector.shape_cast %341 : vector<16xf32> to vector<16x1xf32>
    %cst_217 = arith.constant 3.200000e+01 : f32
    %343 = vector.broadcast %cst_217 : f32 to vector<16x1xf32>
    %344 = arith.divf %342, %343 : vector<16x1xf32>
    %345 = vector.broadcast %344 : vector<16x1xf32> to vector<16x32xf32>
    %346 = arith.subf %338, %345 : vector<16x32xf32>
    %347 = arith.mulf %346, %346 : vector<16x32xf32>
    %cst_218 = arith.constant dense<0.000000e+00> : vector<16xf32>
    %348 = vector.multi_reduction <add>, %347, %cst_218 [1] : vector<16x32xf32> to vector<16xf32>
    %349 = vector.shape_cast %348 : vector<16xf32> to vector<16x1xf32>
    %cst_219 = arith.constant 3.200000e+01 : f32
    %350 = vector.broadcast %cst_219 : f32 to vector<16x1xf32>
    %351 = arith.divf %349, %350 : vector<16x1xf32>
    %352 = vector.broadcast %344 : vector<16x1xf32> to vector<16x32xf32>
    %353 = arith.subf %338, %352 : vector<16x32xf32>
    %cst_220 = arith.constant 9.99999974E-6 : f32
    %354 = vector.broadcast %cst_220 : f32 to vector<16x1xf32>
    %355 = arith.addf %351, %354 : vector<16x1xf32>
    %356 = math.rsqrt %355 : vector<16x1xf32>
    %357 = vector.broadcast %356 : vector<16x1xf32> to vector<16x32xf32>
    %358 = arith.mulf %353, %357 : vector<16x32xf32>
    %359 = vector.broadcast %339 : vector<1x32xf32> to vector<16x32xf32>
    %360 = arith.mulf %358, %359 : vector<16x32xf32>
    %361 = vector.broadcast %340 : vector<1x32xf32> to vector<16x32xf32>
    %362 = arith.addf %360, %361 : vector<16x32xf32>
    %c0_221 = arith.constant 0 : index
    %c0_222 = arith.constant 0 : index
    %363 = vector.load %arg17[%c0_221, %c0_222] : memref<32x128xf32, #tpu.memory_space<vmem>>, vector<32x128xf32>
    %cst_223 = arith.constant dense<0.000000e+00> : vector<16x128xf32>
    %364 = tpu.matmul %362, %363, %cst_223 {dimension_numbers = #tpu.dot_dimension_numbers<[1], [0], [0], [1], [0, 0, 1, 1], [], []>} : vector<16x32xf32>, vector<32x128xf32>, vector<16x128xf32> -> vector<16x128xf32>
    %c0_224 = arith.constant 0 : index
    %c0_225 = arith.constant 0 : index
    %365 = vector.load %arg18[%c0_224, %c0_225] : memref<1x128xf32, #tpu.memory_space<vmem>>, vector<1x128xf32>
    %366 = vector.broadcast %365 : vector<1x128xf32> to vector<16x128xf32>
    %367 = arith.addf %364, %366 : vector<16x128xf32>
    %cst_226 = arith.constant 0.000000e+00 : f32
    %368 = vector.broadcast %cst_226 : f32 to vector<16x128xf32>
    %369 = arith.maximumf %367, %368 : vector<16x128xf32>
    %370 = arith.mulf %369, %369 : vector<16x128xf32>
    %c0_227 = arith.constant 0 : index
    %c0_228 = arith.constant 0 : index
    %371 = vector.load %arg19[%c0_227, %c0_228] : memref<128x32xf32, #tpu.memory_space<vmem>>, vector<128x32xf32>
    %cst_229 = arith.constant dense<0.000000e+00> : vector<16x32xf32>
    %372 = tpu.matmul %370, %371, %cst_229 {dimension_numbers = #tpu.dot_dimension_numbers<[1], [0], [0], [1], [0, 0, 1, 1], [], []>} : vector<16x128xf32>, vector<128x32xf32>, vector<16x32xf32> -> vector<16x32xf32>
    %c0_230 = arith.constant 0 : index
    %c0_231 = arith.constant 0 : index
    %373 = vector.load %arg20[%c0_230, %c0_231] : memref<1x32xf32, #tpu.memory_space<vmem>>, vector<1x32xf32>
    %374 = vector.broadcast %373 : vector<1x32xf32> to vector<16x32xf32>
    %375 = arith.addf %372, %374 : vector<16x32xf32>
    %376 = arith.addf %338, %375 : vector<16x32xf32>
    %c0_232 = arith.constant 0 : index
    %c0_233 = arith.constant 0 : index
    %377 = vector.load %arg21[%c0_232, %c0_233] : memref<16x32xf32, #tpu.memory_space<vmem>>, vector<16x32xf32>
    tpu.vector_store %arg21[%c0_232, %c0_233], %376 {strides = array<i32>} : memref<16x32xf32, #tpu.memory_space<vmem>>, vector<16x32xf32>,
    return
  }
  func.func @transform_0(%arg0: i32) -> (i32, i32) {
    %c0_i32 = arith.constant 0 : i32
    %c0_i32_0 = arith.constant 0 : i32
    return %arg0, %c0_i32 : i32, i32
  }
  func.func @transform_1(%arg0: i32) -> (i32, i32) {
    %c0_i32 = arith.constant 0 : i32
    %c0_i32_0 = arith.constant 0 : i32
    return %arg0, %c0_i32 : i32, i32
  }
  func.func @transform_2(%arg0: i32) -> (i32, i32) {
    %c0_i32 = arith.constant 0 : i32
    %c0_i32_0 = arith.constant 0 : i32
    %c0_i32_1 = arith.constant 0 : i32
    return %c0_i32, %c0_i32_0 : i32, i32
  }
  func.func @transform_3(%arg0: i32) -> (i32, i32) {
    %c0_i32 = arith.constant 0 : i32
    %c0_i32_0 = arith.constant 0 : i32
    %c0_i32_1 = arith.constant 0 : i32
    return %c0_i32, %c0_i32_0 : i32, i32
  }
  func.func @transform_4(%arg0: i32) -> (i32, i32) {
    %c0_i32 = arith.constant 0 : i32
    %c0_i32_0 = arith.constant 0 : i32
    %c0_i32_1 = arith.constant 0 : i32
    return %c0_i32, %c0_i32_0 : i32, i32
  }
  func.func @transform_5(%arg0: i32) -> (i32, i32) {
    %c0_i32 = arith.constant 0 : i32
    %c0_i32_0 = arith.constant 0 : i32
    %c0_i32_1 = arith.constant 0 : i32
    return %c0_i32, %c0_i32_0 : i32, i32
  }
  func.func @transform_6(%arg0: i32) -> (i32, i32) {
    %c0_i32 = arith.constant 0 : i32
    %c0_i32_0 = arith.constant 0 : i32
    %c0_i32_1 = arith.constant 0 : i32
    return %c0_i32, %c0_i32_0 : i32, i32
  }
  func.func @transform_7(%arg0: i32) -> (i32, i32) {
    %c0_i32 = arith.constant 0 : i32
    %c0_i32_0 = arith.constant 0 : i32
    %c0_i32_1 = arith.constant 0 : i32
    return %c0_i32, %c0_i32_0 : i32, i32
  }
  func.func @transform_8(%arg0: i32) -> (i32, i32, i32) {
    %c0_i32 = arith.constant 0 : i32
    %c0_i32_0 = arith.constant 0 : i32
    %c0_i32_1 = arith.constant 0 : i32
    %c0_i32_2 = arith.constant 0 : i32
    return %c0_i32, %c0_i32_0, %c0_i32_1 : i32, i32, i32
  }
  func.func @transform_9(%arg0: i32) -> (i32, i32, i32) {
    %c0_i32 = arith.constant 0 : i32
    %c0_i32_0 = arith.constant 0 : i32
    %c0_i32_1 = arith.constant 0 : i32
    %c0_i32_2 = arith.constant 0 : i32
    return %c0_i32, %c0_i32_0, %c0_i32_1 : i32, i32, i32
  }
  func.func @transform_10(%arg0: i32) -> (i32, i32, i32) {
    %c0_i32 = arith.constant 0 : i32
    %c0_i32_0 = arith.constant 0 : i32
    %c0_i32_1 = arith.constant 0 : i32
    %c0_i32_2 = arith.constant 0 : i32
    return %c0_i32, %c0_i32_0, %c0_i32_1 : i32, i32, i32
  }
  func.func @transform_11(%arg0: i32) -> (i32, i32, i32) {
    %c0_i32 = arith.constant 0 : i32
    %c0_i32_0 = arith.constant 0 : i32
    %c0_i32_1 = arith.constant 0 : i32
    %c0_i32_2 = arith.constant 0 : i32
    return %c0_i32, %c0_i32_0, %c0_i32_1 : i32, i32, i32
  }
  func.func @transform_12(%arg0: i32) -> (i32, i32, i32) {
    %c0_i32 = arith.constant 0 : i32
    %c0_i32_0 = arith.constant 0 : i32
    %c0_i32_1 = arith.constant 0 : i32
    %c0_i32_2 = arith.constant 0 : i32
    return %c0_i32, %c0_i32_0, %c0_i32_1 : i32, i32, i32
  }
  func.func @transform_13(%arg0: i32) -> (i32, i32, i32) {
    %c0_i32 = arith.constant 0 : i32
    %c0_i32_0 = arith.constant 0 : i32
    %c0_i32_1 = arith.constant 0 : i32
    %c0_i32_2 = arith.constant 0 : i32
    return %c0_i32, %c0_i32_0, %c0_i32_1 : i32, i32, i32
  }
  func.func @transform_14(%arg0: i32) -> (i32, i32, i32) {
    %c0_i32 = arith.constant 0 : i32
    %c0_i32_0 = arith.constant 0 : i32
    %c0_i32_1 = arith.constant 0 : i32
    %c0_i32_2 = arith.constant 0 : i32
    return %c0_i32, %c0_i32_0, %c0_i32_1 : i32, i32, i32
  }
  func.func @transform_15(%arg0: i32) -> (i32, i32) {
    %c0_i32 = arith.constant 0 : i32
    %c0_i32_0 = arith.constant 0 : i32
    %c0_i32_1 = arith.constant 0 : i32
    return %c0_i32, %c0_i32_0 : i32, i32
  }
  func.func @transform_16(%arg0: i32) -> (i32, i32) {
    %c0_i32 = arith.constant 0 : i32
    %c0_i32_0 = arith.constant 0 : i32
    %c0_i32_1 = arith.constant 0 : i32
    return %c0_i32, %c0_i32_0 : i32, i32
  }
  func.func @transform_17(%arg0: i32) -> (i32, i32) {
    %c0_i32 = arith.constant 0 : i32
    %c0_i32_0 = arith.constant 0 : i32
    %c0_i32_1 = arith.constant 0 : i32
    return %c0_i32, %c0_i32_0 : i32, i32
  }
  func.func @transform_18(%arg0: i32) -> (i32, i32) {
    %c0_i32 = arith.constant 0 : i32
    %c0_i32_0 = arith.constant 0 : i32
    %c0_i32_1 = arith.constant 0 : i32
    return %c0_i32, %c0_i32_0 : i32, i32
  }
  func.func @transform_19(%arg0: i32) -> (i32, i32) {
    %c0_i32 = arith.constant 0 : i32
    %c0_i32_0 = arith.constant 0 : i32
    %c0_i32_1 = arith.constant 0 : i32
    return %c0_i32, %c0_i32_0 : i32, i32
  }
  func.func @transform_20(%arg0: i32) -> (i32, i32) {
    %c0_i32 = arith.constant 0 : i32
    %c0_i32_0 = arith.constant 0 : i32
    return %arg0, %c0_i32 : i32, i32
  }
}

</mosaic_0001>

<llo_original>
// kernel: tpu_custom_call.1
$region0: #{tpu_custom_call.1}
  #allocation0 [shape = 'u32[]', space=smem, size = 0x4, offset = 0x4, fixed_abs, tag = 'smem constant byte address 0x4 - core index']
  #allocation1 [shape = 'u32[72,128]{1,0:T(1,128)}', space=vmem, size = 0x9000, scoped, tag = 'internal scratch']
  %s0 = inlined_call_operand.vmem [shape: f32[16,32], index: 0, kind: input, shape index: {}]
  %s1 = inlined_call_operand.vmem [shape: f32[32,32], index: 1, kind: input, shape index: {}]
  %s2 = inlined_call_operand.vmem [shape: f32[1,32], index: 2, kind: input, shape index: {}]
  %s3 = inlined_call_operand.vmem [shape: f32[1,32], index: 3, kind: input, shape index: {}]
  %s4 = inlined_call_operand.vmem [shape: f32[1,32], index: 4, kind: input, shape index: {}]
  %s5 = inlined_call_operand.vmem [shape: f32[1,32], index: 5, kind: input, shape index: {}]
  %s6 = inlined_call_operand.vmem [shape: f32[1,32], index: 6, kind: input, shape index: {}]
  %s7 = inlined_call_operand.vmem [shape: f32[1,32], index: 7, kind: input, shape index: {}]
  %s8 = inlined_call_operand.vmem [shape: f32[4,32,8], index: 8, kind: input, shape index: {}]
  %s9 = inlined_call_operand.vmem [shape: f32[4,32,8], index: 9, kind: input, shape index: {}]
  %s10 = inlined_call_operand.vmem [shape: f32[4,32,8], index: 10, kind: input, shape index: {}]
  %s11 = inlined_call_operand.vmem [shape: f32[4,1,8], index: 11, kind: input, shape index: {}]
  %s12 = inlined_call_operand.vmem [shape: f32[4,1,8], index: 12, kind: input, shape index: {}]
  %s13 = inlined_call_operand.vmem [shape: f32[4,1,8], index: 13, kind: input, shape index: {}]
  %s14 = inlined_call_operand.vmem [shape: f32[4,8,32], index: 14, kind: input, shape index: {}]
  %s15 = inlined_call_operand.vmem [shape: f32[1,32], index: 15, kind: input, shape index: {}]
  %s16 = inlined_call_operand.vmem [shape: f32[32,128], index: 16, kind: input, shape index: {}]
  %s17 = inlined_call_operand.vmem [shape: f32[1,128], index: 17, kind: input, shape index: {}]
  %s18 = inlined_call_operand.vmem [shape: f32[128,32], index: 18, kind: input, shape index: {}]
  %s19 = inlined_call_operand.vmem [shape: f32[1,32], index: 19, kind: input, shape index: {}]
  %s20 = inlined_call_operand.hbm [shape: f32[16,32], index: 20, kind: output, shape index: {}]
  %s21 = sld [smem:[#allocation0]]
  $region90: #{tpu_custom_call.1} parent=0
    _
  %s23 = ssub.s32 1, %s21
  %s24 = scalar_select 0, %s23, %s21
  $region1: #{tpu_custom_call.1} parent=0
    #allocation2 [shape = 'u8[8192]{0}', space=vmem, size = 0x2000, scoped, tag = 'output window, operand 0, single buffered']
    #allocation3 [shape = 's32[1]{0}', space=sflag, size = 0x4, scoped, tag = 'scoped memory for tpu_custom_call.1']
    %25 = vsyncpa [#allocation3], 0
    // Predicated region
    $region2: #{tpu_custom_call.1} parent=1 // pred_check
      _
    $region3: #{tpu_custom_call.1} parent=1 // pred_check_branch
      %27 = sbr.rel (0) target = $region5
    $region4: #{tpu_custom_call.1} parent=1 // pred_region
      _
    $region5: #{tpu_custom_call.1} parent=1 // pred_fallthru
      _
    // Predicated region
    $region6: #{tpu_custom_call.1} parent=1 // pred_check
      _
    $region7: #{tpu_custom_call.1} parent=1 // pred_check_branch
      %29 = sbr.rel (0) target = $region9
    $region8: #{tpu_custom_call.1} parent=1 // pred_region
      _
    $region9: #{tpu_custom_call.1} parent=1 // pred_fallthru
      _
    // Predicated region
    $region10: #{tpu_custom_call.1} parent=1 // pred_check
      _
    $region11: #{tpu_custom_call.1} parent=1 // pred_check_branch
      %31 = sbr.rel (0) target = $region13
    $region12: #{tpu_custom_call.1} parent=1 // pred_region
      _
    $region13: #{tpu_custom_call.1} parent=1 // pred_fallthru
      _
    // Predicated region
    $region14: #{tpu_custom_call.1} parent=1 // pred_check
      _
    $region15: #{tpu_custom_call.1} parent=1 // pred_check_branch
      %33 = sbr.rel (0) target = $region17
    $region16: #{tpu_custom_call.1} parent=1 // pred_region
      _
    $region17: #{tpu_custom_call.1} parent=1 // pred_fallthru
      _
    // Predicated region
    $region18: #{tpu_custom_call.1} parent=1 // pred_check
      _
    $region19: #{tpu_custom_call.1} parent=1 // pred_check_branch
      %35 = sbr.rel (0) target = $region21
    $region20: #{tpu_custom_call.1} parent=1 // pred_region
      _
    $region21: #{tpu_custom_call.1} parent=1 // pred_fallthru
      _
    // Predicated region
    $region22: #{tpu_custom_call.1} parent=1 // pred_check
      _
    $region23: #{tpu_custom_call.1} parent=1 // pred_check_branch
      %37 = sbr.rel (0) target = $region25
    $region24: #{tpu_custom_call.1} parent=1 // pred_region
      _
    $region25: #{tpu_custom_call.1} parent=1 // pred_fallthru
      _
    // Predicated region
    $region26: #{tpu_custom_call.1} parent=1 // pred_check
      _
    $region27: #{tpu_custom_call.1} parent=1 // pred_check_branch
      %39 = sbr.rel (0) target = $region29
    $region28: #{tpu_custom_call.1} parent=1 // pred_region
      _
    $region29: #{tpu_custom_call.1} parent=1 // pred_fallthru
      _
    // Predicated region
    $region30: #{tpu_custom_call.1} parent=1 // pred_check
      _
    $region31: #{tpu_custom_call.1} parent=1 // pred_check_branch
      %41 = sbr.rel (0) target = $region33
    $region32: #{tpu_custom_call.1} parent=1 // pred_region
      _
    $region33: #{tpu_custom_call.1} parent=1 // pred_fallthru
      _
    // Predicated region
    $region34: #{tpu_custom_call.1} parent=1 // pred_check
      _
    $region35: #{tpu_custom_call.1} parent=1 // pred_check_branch
      %43 = sbr.rel (0) target = $region37
    $region36: #{tpu_custom_call.1} parent=1 // pred_region
      _
    $region37: #{tpu_custom_call.1} parent=1 // pred_fallthru
      _
    // Predicated region
    $region38: #{tpu_custom_call.1} parent=1 // pred_check
      _
    $region39: #{tpu_custom_call.1} parent=1 // pred_check_branch
      %45 = sbr.rel (0) target = $region41
    $region40: #{tpu_custom_call.1} parent=1 // pred_region
      _
    $region41: #{tpu_custom_call.1} parent=1 // pred_fallthru
      _
    // Predicated region
    $region42: #{tpu_custom_call.1} parent=1 // pred_check
      _
    $region43: #{tpu_custom_call.1} parent=1 // pred_check_branch
      %47 = sbr.rel (0) target = $region45
    $region44: #{tpu_custom_call.1} parent=1 // pred_region
      _
    $region45: #{tpu_custom_call.1} parent=1 // pred_fallthru
      _
    // Predicated region
    $region46: #{tpu_custom_call.1} parent=1 // pred_check
      _
    $region47: #{tpu_custom_call.1} parent=1 // pred_check_branch
      %49 = sbr.rel (0) target = $region49
    $region48: #{tpu_custom_call.1} parent=1 // pred_region
      _
    $region49: #{tpu_custom_call.1} parent=1 // pred_fallthru
      _
    // Predicated region
    $region50: #{tpu_custom_call.1} parent=1 // pred_check
      _
    $region51: #{tpu_custom_call.1} parent=1 // pred_check_branch
      %51 = sbr.rel (0) target = $region53
    $region52: #{tpu_custom_call.1} parent=1 // pred_region
      _
    $region53: #{tpu_custom_call.1} parent=1 // pred_fallthru
      _
    // Predicated region
    $region54: #{tpu_custom_call.1} parent=1 // pred_check
      _
    $region55: #{tpu_custom_call.1} parent=1 // pred_check_branch
      %53 = sbr.rel (0) target = $region57
    $region56: #{tpu_custom_call.1} parent=1 // pred_region
      _
    $region57: #{tpu_custom_call.1} parent=1 // pred_fallthru
      _
    // Predicated region
    $region58: #{tpu_custom_call.1} parent=1 // pred_check
      _
    $region59: #{tpu_custom_call.1} parent=1 // pred_check_branch
      %55 = sbr.rel (0) target = $region61
    $region60: #{tpu_custom_call.1} parent=1 // pred_region
      _
    $region61: #{tpu_custom_call.1} parent=1 // pred_fallthru
      _
    // Predicated region
    $region62: #{tpu_custom_call.1} parent=1 // pred_check
      _
    $region63: #{tpu_custom_call.1} parent=1 // pred_check_branch
      %57 = sbr.rel (0) target = $region65
    $region64: #{tpu_custom_call.1} parent=1 // pred_region
      _
    $region65: #{tpu_custom_call.1} parent=1 // pred_fallthru
      _
    // Predicated region
    $region66: #{tpu_custom_call.1} parent=1 // pred_check
      _
    $region67: #{tpu_custom_call.1} parent=1 // pred_check_branch
      %59 = sbr.rel (0) target = $region69
    $region68: #{tpu_custom_call.1} parent=1 // pred_region
      _
    $region69: #{tpu_custom_call.1} parent=1 // pred_fallthru
      _
    // Predicated region
    $region70: #{tpu_custom_call.1} parent=1 // pred_check
      _
    $region71: #{tpu_custom_call.1} parent=1 // pred_check_branch
      %61 = sbr.rel (0) target = $region73
    $region72: #{tpu_custom_call.1} parent=1 // pred_region
      _
    $region73: #{tpu_custom_call.1} parent=1 // pred_fallthru
      _
    // Predicated region
    $region74: #{tpu_custom_call.1} parent=1 // pred_check
      _
    $region75: #{tpu_custom_call.1} parent=1 // pred_check_branch
      %63 = sbr.rel (0) target = $region77
    $region76: #{tpu_custom_call.1} parent=1 // pred_region
      _
    $region77: #{tpu_custom_call.1} parent=1 // pred_fallthru
      _
    // Predicated region
    $region78: #{tpu_custom_call.1} parent=1 // pred_check
      _
    $region79: #{tpu_custom_call.1} parent=1 // pred_check_branch
      %65 = sbr.rel (0) target = $region81
    $region80: #{tpu_custom_call.1} parent=1 // pred_region
      _
    $region81: #{tpu_custom_call.1} parent=1 // pred_fallthru
      _
    %v66 = vld [vmem:[%s0] sm:$0xff]
    %v67 = vld [vmem:[%s0 + $0x8] sm:$0xff]
    %v68 = vld [vmem:[%s1] sm:$0xff]
    %v69 = vld [vmem:[%s1 + $0x8] sm:$0xff]
    %v70 = vld [vmem:[%s1 + $0x10] sm:$0xff]
    %v71 = vld [vmem:[%s1 + $0x18] sm:$0xff]
    %v72 = vld [vmem:[%s2] sm:$0x1]
    %v73 = vld [vmem:[%s3] sm:$0x1]
    %vm74 = vcmask 261120
    %v75 = vsel %vm74, %v66, 0.0
    %76 = vadd.xlane.f32.xlu0 %v75
    %v77 = vpop.xlane.xlu0 %76
    %v78 = vsel %vm74, %v67, 0.0
    %79 = vadd.xlane.f32.xlu0 %v78
    %v80 = vpop.xlane.xlu0 %79
    %v81 = vrcp.pop 32.0
    %v82 = vmul.f32 32.0, %v81
    %v83 = vsub.f32 1.0, %v82
    %v84 = vmul.f32 %v81, %v83
    %v85 = vadd.f32 %v81, %v84
    %vm86 = vweird.f32 %v81
    %v87 = vsel %vm86, %v81, %v85
    %v88 = vmul.f32 %v77, %v87
    %v89 = vmul.f32 %v80, %v87
    %v90 = vsub.f32 %v66, %v88
    %v91 = vsub.f32 %v67, %v89
    %v92 = vmul.f32 %v90, %v90
    %v93 = vmul.f32 %v91, %v91
    %v94 = vsel %vm74, %v92, 0.0
    %95 = vadd.xlane.f32.xlu0 %v94
    %v96 = vpop.xlane.xlu0 %95
    %v97 = vsel %vm74, %v93, 0.0
    %98 = vadd.xlane.f32.xlu0 %v97
    %v99 = vpop.xlane.xlu0 %98
    %v100 = vmul.f32 %v96, %v87
    %v101 = vmul.f32 %v99, %v87
    %v102 = vadd.f32 %v100, 1e-05
    %v103 = vadd.f32 %v101, 1e-05
    %v104 = vrsqrt.pop %v102
    %v105 = vmul.f32 %v104, %v102
    %v106 = vmul.f32 %v105, %v104
    %v107 = vmul.f32 0.5, %v106
    %v108 = vsub.f32 1.5, %v107
    %v109 = vmul.f32 %v104, %v108
    %vm110 = vweird.f32 %v102
    %vm111 = vweird.f32 %v104
    %vm112 = vmor %vm110, %vm111
    %v113 = vsel %vm112, %v104, %v109
    %v114 = vrsqrt.pop %v103
    %v115 = vmul.f32 %v114, %v103
    %v116 = vmul.f32 %v115, %v114
    %v117 = vmul.f32 0.5, %v116
    %v118 = vsub.f32 1.5, %v117
    %v119 = vmul.f32 %v114, %v118
    %vm120 = vweird.f32 %v103
    %vm121 = vweird.f32 %v114
    %vm122 = vmor %vm120, %vm121
    %v123 = vsel %vm122, %v114, %v119
    %v124 = vmul.f32 %v90, %v113
    %v125 = vmul.f32 %v91, %v123
    %v127 = vperm.slane %v72, 0
    %v129 = vmul.f32 %v124, %v127
    %v130 = vmul.f32 %v125, %v127
    %v132 = vperm.slane %v73, 0
    %v134 = vadd.f32 %v129, %v132
    %v135 = vadd.f32 %v130, %v132
    %v136 = vld [vmem:[%s4] sm:$0x1]
    %v137 = vld [vmem:[%s5] sm:$0x1]
    %v138 = vsel %vm74, %v68, 0.0
    %139 = vadd.xlane.f32.xlu0 %v138
    %v140 = vpop.xlane.xlu0 %139
    %v141 = vsel %vm74, %v69, 0.0
    %142 = vadd.xlane.f32.xlu0 %v141
    %v143 = vpop.xlane.xlu0 %142
    %v144 = vsel %vm74, %v70, 0.0
    %145 = vadd.xlane.f32.xlu0 %v144
    %v146 = vpop.xlane.xlu0 %145
    %v147 = vsel %vm74, %v71, 0.0
    %148 = vadd.xlane.f32.xlu0 %v147
    %v149 = vpop.xlane.xlu0 %148
    %v150 = vmul.f32 %v140, %v87
    %v151 = vmul.f32 %v143, %v87
    %v152 = vmul.f32 %v146, %v87
    %v153 = vmul.f32 %v149, %v87
    %v154 = vsub.f32 %v68, %v150
    %v155 = vsub.f32 %v69, %v151
    %v156 = vsub.f32 %v70, %v152
    %v157 = vsub.f32 %v71, %v153
    %v158 = vmul.f32 %v154, %v154
    %v159 = vmul.f32 %v155, %v155
    %v160 = vmul.f32 %v156, %v156
    %v161 = vmul.f32 %v157, %v157
    %v162 = vsel %vm74, %v158, 0.0
    %163 = vadd.xlane.f32.xlu0 %v162
    %v164 = vpop.xlane.xlu0 %163
    %v165 = vsel %vm74, %v159, 0.0
    %166 = vadd.xlane.f32.xlu0 %v165
    %v167 = vpop.xlane.xlu0 %166
    %v168 = vsel %vm74, %v160, 0.0
    %169 = vadd.xlane.f32.xlu0 %v168
    %v170 = vpop.xlane.xlu0 %169
    %v171 = vsel %vm74, %v161, 0.0
    %172 = vadd.xlane.f32.xlu0 %v171
    %v173 = vpop.xlane.xlu0 %172
    %v174 = vmul.f32 %v164, %v87
    %v175 = vmul.f32 %v167, %v87
    %v176 = vmul.f32 %v170, %v87
    %v177 = vmul.f32 %v173, %v87
    %v178 = vadd.f32 %v174, 1e-05
    %v179 = vadd.f32 %v175, 1e-05
    %v180 = vadd.f32 %v176, 1e-05
    %v181 = vadd.f32 %v177, 1e-05
    %v182 = vrsqrt.pop %v178
    %v183 = vmul.f32 %v182, %v178
    %v184 = vmul.f32 %v183, %v182
    %v185 = vmul.f32 0.5, %v184
    %v186 = vsub.f32 1.5, %v185
    %v187 = vmul.f32 %v182, %v186
    %vm188 = vweird.f32 %v178
    %vm189 = vweird.f32 %v182
    %vm190 = vmor %vm188, %vm189
    %v191 = vsel %vm190, %v182, %v187
    %v192 = vrsqrt.pop %v179
    %v193 = vmul.f32 %v192, %v179
    %v194 = vmul.f32 %v193, %v192
    %v195 = vmul.f32 0.5, %v194
    %v196 = vsub.f32 1.5, %v195
    %v197 = vmul.f32 %v192, %v196
    %vm198 = vweird.f32 %v179
    %vm199 = vweird.f32 %v192
    %vm200 = vmor %vm198, %vm199
    %v201 = vsel %vm200, %v192, %v197
    %v202 = vrsqrt.pop %v180
    %v203 = vmul.f32 %v202, %v180
    %v204 = vmul.f32 %v203, %v202
    %v205 = vmul.f32 0.5, %v204
    %v206 = vsub.f32 1.5, %v205
    %v207 = vmul.f32 %v202, %v206
    %vm208 = vweird.f32 %v180
    %vm209 = vweird.f32 %v202
    %vm210 = vmor %vm208, %vm209
    %v211 = vsel %vm210, %v202, %v207
    %v212 = vrsqrt.pop %v181
    %v213 = vmul.f32 %v212, %v181
    %v214 = vmul.f32 %v213, %v212
    %v215 = vmul.f32 0.5, %v214
    %v216 = vsub.f32 1.5, %v215
    %v217 = vmul.f32 %v212, %v216
    %vm218 = vweird.f32 %v181
    %vm219 = vweird.f32 %v212
    %vm220 = vmor %vm218, %vm219
    %v221 = vsel %vm220, %v212, %v217
    %v222 = vmul.f32 %v154, %v191
    %v223 = vmul.f32 %v155, %v201
    %v224 = vmul.f32 %v156, %v211
    %v225 = vmul.f32 %v157, %v221
    %v227 = vperm.slane %v136, 0
    %v229 = vmul.f32 %v222, %v227
    %v230 = vmul.f32 %v223, %v227
    %v231 = vmul.f32 %v224, %v227
    %v232 = vmul.f32 %v225, %v227
    %v234 = vperm.slane %v137, 0
    %v236 = vadd.f32 %v229, %v234
    %v237 = vadd.f32 %v230, %v234
    %v238 = vadd.f32 %v231, %v234
    %v239 = vadd.f32 %v232, %v234
    %v240 = vld [vmem:[%s8] sm:$0xff]
    %v241 = vld [vmem:[%s8 + $0x8] sm:$0xff]
    %v242 = vld [vmem:[%s8 + $0x10] sm:$0xff]
    %v243 = vld [vmem:[%s8 + $0x18] sm:$0xff]
    %v244 = vld [vmem:[%s11] sm:$0x1]
    %v246 = vperm.slane %v244, 0
    %v249 = vsel %vm74, %v134, 0
    %v252 = vsel %vm74, %v135, 0
    %254 = vmatpush.msra.mxu0 0.0
    %255 = vmatpush.msra.mxu0 0.0
    %256 = vmatpush.msra.mxu0 0.0
    %257 = vmatpush.msra.mxu0 0.0
    %258 = vmatpush.msra.mxu0 0.0
    %259 = vmatpush.msra.mxu0 0.0
    %260 = vmatpush.msra.mxu0 0.0
    %261 = vmatpush.msra.mxu0 0.0
    %262 = vmatpush.msra.mxu0 0.0
    %263 = vmatpush.msra.mxu0 0.0
    %264 = vmatpush.msra.mxu0 0.0
    %265 = vmatpush.msra.mxu0 0.0
    %266 = vmatpush.msra.mxu0 %v243
    %267 = vmatpush.msra.mxu0 %v242
    %268 = vmatpush.msra.mxu0 %v241
    %269 = vmatpush.msra.mxu0 %v240
    %270 = vmatmul.f32.gmra.mxu0 %v249
    %v271 = vpop.f32.mrf.mxu0
    %v272 = vadd.f32 %v246, %v271
    %273 = vmatmul.f32.gmra.mxu0 %v252
    %v274 = vpop.f32.mrf.mxu0
    %v275 = vadd.f32 %v246, %v274
    %276 = vdwg.mxu0
    %v277 = vld [vmem:[%s9] sm:$0xff]
    %v278 = vld [vmem:[%s9 + $0x8] sm:$0xff]
    %v279 = vld [vmem:[%s9 + $0x10] sm:$0xff]
    %v280 = vld [vmem:[%s9 + $0x18] sm:$0xff]
    %v281 = vld [vmem:[%s12] sm:$0x1]
    %v283 = vperm.slane %v281, 0
    %285 = vmatpush.msra.mxu0 0.0
    %286 = vmatpush.msra.mxu0 0.0
    %287 = vmatpush.msra.mxu0 0.0
    %288 = vmatpush.msra.mxu0 0.0
    %289 = vmatpush.msra.mxu0 0.0
    %290 = vmatpush.msra.mxu0 0.0
    %291 = vmatpush.msra.mxu0 0.0
    %292 = vmatpush.msra.mxu0 0.0
    %293 = vmatpush.msra.mxu0 0.0
    %294 = vmatpush.msra.mxu0 0.0
    %295 = vmatpush.msra.mxu0 0.0
    %296 = vmatpush.msra.mxu0 0.0
    %297 = vmatpush.msra.mxu0 %v280
    %298 = vmatpush.msra.mxu0 %v279
    %299 = vmatpush.msra.mxu0 %v278
    %300 = vmatpush.msra.mxu0 %v277
    %301 = vmatmul.f32.gmra.mxu0 %v249
    %v302 = vpop.f32.mrf.mxu0
    %v303 = vadd.f32 %v283, %v302
    %304 = vmatmul.f32.gmra.mxu0 %v252
    %v305 = vpop.f32.mrf.mxu0
    %v306 = vadd.f32 %v283, %v305
    %307 = vdwg.mxu0
    %v309 = vsel %vm74, %v236, 0
    %v312 = vsel %vm74, %v237, 0
    %v315 = vsel %vm74, %v238, 0
    %v318 = vsel %vm74, %v239, 0
    %320 = vmatpush.msra.mxu0 0.0
    %321 = vmatpush.msra.mxu0 0.0
    %322 = vmatpush.msra.mxu0 0.0
    %323 = vmatpush.msra.mxu0 0.0
    %324 = vmatpush.msra.mxu0 0.0
    %325 = vmatpush.msra.mxu0 0.0
    %326 = vmatpush.msra.mxu0 0.0
    %327 = vmatpush.msra.mxu0 0.0
    %328 = vmatpush.msra.mxu0 0.0
    %329 = vmatpush.msra.mxu0 0.0
    %330 = vmatpush.msra.mxu0 0.0
    %331 = vmatpush.msra.mxu0 0.0
    %332 = vmatpush.msra.mxu0 %v280
    %333 = vmatpush.msra.mxu0 %v279
    %334 = vmatpush.msra.mxu0 %v278
    %335 = vmatpush.msra.mxu0 %v277
    %336 = vmatmul.f32.gmra.mxu0 %v309
    %v337 = vpop.f32.mrf.mxu0
    %v338 = vadd.f32 %v283, %v337
    %339 = vmatmul.f32.gmra.mxu0 %v312
    %v340 = vpop.f32.mrf.mxu0
    %v341 = vadd.f32 %v283, %v340
    %342 = vmatmul.f32.gmra.mxu0 %v315
    %v343 = vpop.f32.mrf.mxu0
    %v344 = vadd.f32 %v283, %v343
    %345 = vmatmul.f32.gmra.mxu0 %v318
    %v346 = vpop.f32.mrf.mxu0
    %v347 = vadd.f32 %v283, %v346
    %348 = vdwg.mxu0
    %v349 = vld [vmem:[%s10] sm:$0xff]
    %v350 = vld [vmem:[%s10 + $0x8] sm:$0xff]
    %v351 = vld [vmem:[%s10 + $0x10] sm:$0xff]
    %v352 = vld [vmem:[%s10 + $0x18] sm:$0xff]
    %v353 = vld [vmem:[%s13] sm:$0x1]
    %v355 = vperm.slane %v353, 0
    %357 = vmatpush.msra.mxu0 0.0
    %358 = vmatpush.msra.mxu0 0.0
    %359 = vmatpush.msra.mxu0 0.0
    %360 = vmatpush.msra.mxu0 0.0
    %361 = vmatpush.msra.mxu0 0.0
    %362 = vmatpush.msra.mxu0 0.0
    %363 = vmatpush.msra.mxu0 0.0
    %364 = vmatpush.msra.mxu0 0.0
    %365 = vmatpush.msra.mxu0 0.0
    %366 = vmatpush.msra.mxu0 0.0
    %367 = vmatpush.msra.mxu0 0.0
    %368 = vmatpush.msra.mxu0 0.0
    %369 = vmatpush.msra.mxu0 %v352
    %370 = vmatpush.msra.mxu0 %v351
    %371 = vmatpush.msra.mxu0 %v350
    %372 = vmatpush.msra.mxu0 %v349
    %373 = vmatmul.f32.gmra.mxu0 %v249
    %v374 = vpop.f32.mrf.mxu0
    %v375 = vadd.f32 %v355, %v374
    %376 = vmatmul.f32.gmra.mxu0 %v252
    %v377 = vpop.f32.mrf.mxu0
    %v378 = vadd.f32 %v355, %v377
    %379 = vdwg.mxu0
    %380 = vmatpush.msra.mxu0 0.0
    %381 = vmatpush.msra.mxu0 0.0
    %382 = vmatpush.msra.mxu0 0.0
    %383 = vmatpush.msra.mxu0 0.0
    %384 = vmatpush.msra.mxu0 0.0
    %385 = vmatpush.msra.mxu0 0.0
    %386 = vmatpush.msra.mxu0 0.0
    %387 = vmatpush.msra.mxu0 0.0
    %388 = vmatpush.msra.mxu0 0.0
    %389 = vmatpush.msra.mxu0 0.0
    %390 = vmatpush.msra.mxu0 0.0
    %391 = vmatpush.msra.mxu0 0.0
    %392 = vmatpush.msra.mxu0 %v352
    %393 = vmatpush.msra.mxu0 %v351
    %394 = vmatpush.msra.mxu0 %v350
    %395 = vmatpush.msra.mxu0 %v349
    %396 = vmatmul.f32.gmra.mxu0 %v309
    %v397 = vpop.f32.mrf.mxu0
    %v398 = vadd.f32 %v355, %v397
    %399 = vmatmul.f32.gmra.mxu0 %v312
    %v400 = vpop.f32.mrf.mxu0
    %v401 = vadd.f32 %v355, %v400
    %402 = vmatmul.f32.gmra.mxu0 %v315
    %v403 = vpop.f32.mrf.mxu0
    %v404 = vadd.f32 %v355, %v403
    %405 = vmatmul.f32.gmra.mxu0 %v318
    %v406 = vpop.f32.mrf.mxu0
    %v407 = vadd.f32 %v355, %v406
    %408 = vdwg.mxu0
    %v409 = vmul.f32 %v272, 0.35355338
    %v410 = vmul.f32 %v275, 0.35355338
    %vm411 = vcmask 64512
    %v413 = vsel %vm411, %v409, 0
    %v416 = vsel %vm411, %v303, 0
    %418 = vmatpush.xpose.msra.mxu0 0.0
    %419 = vmatpush.xpose.msra.mxu0 0.0
    %420 = vmatpush.xpose.msra.mxu0 0.0
    %421 = vmatpush.xpose.msra.mxu0 0.0
    %422 = vmatpush.xpose.msra.mxu0 0.0
    %423 = vmatpush.xpose.msra.mxu0 0.0
    %424 = vmatpush.xpose.msra.mxu0 0.0
    %425 = vmatpush.xpose.msra.mxu0 0.0
    %426 = vmatpush.xpose.msra.mxu0 0.0
    %427 = vmatpush.xpose.msra.mxu0 0.0
    %428 = vmatpush.xpose.msra.mxu0 0.0
    %429 = vmatpush.xpose.msra.mxu0 0.0
    %430 = vmatpush.xpose.msra.mxu0 0.0
    %431 = vmatpush.xpose.msra.mxu0 0.0
    %432 = vmatpush.xpose.msra.mxu0 0.0
    %433 = vmatpush.xpose.msra.mxu0 %v416
    %434 = vmatmul.f32.gmra.mxu0 %v413
    %v435 = vpop.f32.mrf.mxu0
    %v436 = vadd.f32 0.0, %v435
    %437 = vdwg.mxu0
    %v439 = vsel %vm411, %v410, 0
    %v442 = vsel %vm411, %v306, 0
    %444 = vmatpush.xpose.msra.mxu0 0.0
    %445 = vmatpush.xpose.msra.mxu0 0.0
    %446 = vmatpush.xpose.msra.mxu0 0.0
    %447 = vmatpush.xpose.msra.mxu0 0.0
    %448 = vmatpush.xpose.msra.mxu0 0.0
    %449 = vmatpush.xpose.msra.mxu0 0.0
    %450 = vmatpush.xpose.msra.mxu0 0.0
    %451 = vmatpush.xpose.msra.mxu0 0.0
    %452 = vmatpush.xpose.msra.mxu0 0.0
    %453 = vmatpush.xpose.msra.mxu0 0.0
    %454 = vmatpush.xpose.msra.mxu0 0.0
    %455 = vmatpush.xpose.msra.mxu0 0.0
    %456 = vmatpush.xpose.msra.mxu0 0.0
    %457 = vmatpush.xpose.msra.mxu0 0.0
    %458 = vmatpush.xpose.msra.mxu0 0.0
    %459 = vmatpush.xpose.msra.mxu0 %v442
    %460 = vmatmul.f32.gmra.mxu0 %v439
    %v461 = vpop.f32.mrf.mxu0
    %v462 = vadd.f32 0.0, %v461
    %463 = vdwg.mxu0
    %v465 = vsel %vm411, %v338, 0
    %v468 = vsel %vm411, %v341, 0
    %470 = vmatpush.xpose.msra.mxu0 0.0
    %471 = vmatpush.xpose.msra.mxu0 0.0
    %472 = vmatpush.xpose.msra.mxu0 0.0
    %473 = vmatpush.xpose.msra.mxu0 0.0
    %474 = vmatpush.xpose.msra.mxu0 0.0
    %475 = vmatpush.xpose.msra.mxu0 0.0
    %476 = vmatpush.xpose.msra.mxu0 0.0
    %477 = vmatpush.xpose.msra.mxu0 0.0
    %478 = vmatpush.xpose.msra.mxu0 0.0
    %479 = vmatpush.xpose.msra.mxu0 0.0
    %480 = vmatpush.xpose.msra.mxu0 0.0
    %481 = vmatpush.xpose.msra.mxu0 0.0
    %482 = vmatpush.xpose.msra.mxu0 0.0
    %483 = vmatpush.xpose.msra.mxu0 0.0
    %484 = vmatpush.xpose.msra.mxu0 %v468
    %485 = vmatpush.xpose.msra.mxu0 %v465
    %486 = vmatmul.f32.gmra.mxu0 %v413
    %v487 = vpop.f32.mrf.mxu0
    %v488 = vadd.f32 0.0, %v487
    %489 = vdwg.mxu0
    %v491 = vsel %vm411, %v344, 0
    %v494 = vsel %vm411, %v347, 0
    %496 = vmatpush.xpose.msra.mxu0 0.0
    %497 = vmatpush.xpose.msra.mxu0 0.0
    %498 = vmatpush.xpose.msra.mxu0 0.0
    %499 = vmatpush.xpose.msra.mxu0 0.0
    %500 = vmatpush.xpose.msra.mxu0 0.0
    %501 = vmatpush.xpose.msra.mxu0 0.0
    %502 = vmatpush.xpose.msra.mxu0 0.0
    %503 = vmatpush.xpose.msra.mxu0 0.0
    %504 = vmatpush.xpose.msra.mxu0 0.0
    %505 = vmatpush.xpose.msra.mxu0 0.0
    %506 = vmatpush.xpose.msra.mxu0 0.0
    %507 = vmatpush.xpose.msra.mxu0 0.0
    %508 = vmatpush.xpose.msra.mxu0 0.0
    %509 = vmatpush.xpose.msra.mxu0 0.0
    %510 = vmatpush.xpose.msra.mxu0 %v494
    %511 = vmatpush.xpose.msra.mxu0 %v491
    %512 = vmatmul.f32.gmra.mxu0 %v439
    %v513 = vpop.f32.mrf.mxu0
    %v514 = vadd.f32 0.0, %v513
    %515 = vdwg.mxu0
    %v516 = vsel %vm411, %v436, -inf
    %517 = vmax.xlane.f32.xlu0 %v516
    %v518 = vpop.xlane.xlu0 %517
    %v519 = vsel %vm411, %v462, -inf
    %520 = vmax.xlane.f32.xlu0 %v519
    %v521 = vpop.xlane.xlu0 %520
    %vm522 = vcmask 130048
    %v523 = vsel %vm522, %v488, -inf
    %524 = vmax.xlane.f32.xlu0 %v523
    %v525 = vpop.xlane.xlu0 %524
    %v526 = vsel %vm522, %v514, -inf
    %527 = vmax.xlane.f32.xlu0 %v526
    %v528 = vpop.xlane.xlu0 %527
    %v529 = vmax.f32 %v518, %v525
    %v530 = vmax.f32 %v521, %v528
    %v531 = vsub.f32 %v436, %v529
    %v532 = vsub.f32 %v462, %v530
    %v533 = vmul.f32 %v531, 1.442695
    %v534 = vpow.pop %v533
    %v535 = vmul.f32 %v532, 1.442695
    %v536 = vpow.pop %v535
    %v537 = vsub.f32 %v488, %v529
    %v538 = vsub.f32 %v514, %v530
    %v539 = vmul.f32 %v537, 1.442695
    %v540 = vpow.pop %v539
    %v541 = vmul.f32 %v538, 1.442695
    %v542 = vpow.pop %v541
    %v543 = vsel %vm411, %v534, 0.0
    %544 = vadd.xlane.f32.xlu0 %v543
    %v545 = vpop.xlane.xlu0 %544
    %v546 = vsel %vm411, %v536, 0.0
    %547 = vadd.xlane.f32.xlu0 %v546
    %v548 = vpop.xlane.xlu0 %547
    %v549 = vsel %vm522, %v540, 0.0
    %550 = vadd.xlane.f32.xlu0 %v549
    %v551 = vpop.xlane.xlu0 %550
    %v552 = vsel %vm522, %v542, 0.0
    %553 = vadd.xlane.f32.xlu0 %v552
    %v554 = vpop.xlane.xlu0 %553
    %v555 = vadd.f32 %v545, %v551
    %v556 = vadd.f32 %v548, %v554
    %v557 = vrcp.pop %v555
    %v558 = vrcp.pop %v556
    %v560 = vsel %vm522, %v540, 0
    %562 = vmatpush.msra.mxu0 0.0
    %563 = vmatpush.msra.mxu0 0.0
    %564 = vmatpush.msra.mxu0 0.0
    %565 = vmatpush.msra.mxu0 0.0
    %566 = vmatpush.msra.mxu0 0.0
    %567 = vmatpush.msra.mxu0 0.0
    %568 = vmatpush.msra.mxu0 0.0
    %569 = vmatpush.msra.mxu0 0.0
    %570 = vmatpush.msra.mxu0 0.0
    %571 = vmatpush.msra.mxu0 0.0
    %572 = vmatpush.msra.mxu0 0.0
    %573 = vmatpush.msra.mxu0 0.0
    %574 = vmatpush.msra.mxu0 0.0
    %575 = vmatpush.msra.mxu0 0.0
    %576 = vmatpush.msra.mxu0 %v401
    %577 = vmatpush.msra.mxu0 %v398
    %578 = vmatmul.f32.gmra.mxu0 %v560
    %v579 = vpop.f32.mrf.mxu0
    %v580 = vadd.f32 0.0, %v579
    %581 = vdwg.mxu0
    %v583 = vsel %vm522, %v542, 0
    %585 = vmatpush.msra.mxu0 0.0
    %586 = vmatpush.msra.mxu0 0.0
    %587 = vmatpush.msra.mxu0 0.0
    %588 = vmatpush.msra.mxu0 0.0
    %589 = vmatpush.msra.mxu0 0.0
    %590 = vmatpush.msra.mxu0 0.0
    %591 = vmatpush.msra.mxu0 0.0
    %592 = vmatpush.msra.mxu0 0.0
    %593 = vmatpush.msra.mxu0 0.0
    %594 = vmatpush.msra.mxu0 0.0
    %595 = vmatpush.msra.mxu0 0.0
    %596 = vmatpush.msra.mxu0 0.0
    %597 = vmatpush.msra.mxu0 0.0
    %598 = vmatpush.msra.mxu0 0.0
    %599 = vmatpush.msra.mxu0 %v407
    %600 = vmatpush.msra.mxu0 %v404
    %601 = vmatmul.f32.gmra.mxu0 %v583
    %v602 = vpop.f32.mrf.mxu0
    %v603 = vadd.f32 0.0, %v602
    %604 = vdwg.mxu0
    %v606 = vsel %vm411, %v534, 0
    %608 = vmatpush.msra.mxu0 0.0
    %609 = vmatpush.msra.mxu0 0.0
    %610 = vmatpush.msra.mxu0 0.0
    %611 = vmatpush.msra.mxu0 0.0
    %612 = vmatpush.msra.mxu0 0.0
    %613 = vmatpush.msra.mxu0 0.0
    %614 = vmatpush.msra.mxu0 0.0
    %615 = vmatpush.msra.mxu0 0.0
    %616 = vmatpush.msra.mxu0 0.0
    %617 = vmatpush.msra.mxu0 0.0
    %618 = vmatpush.msra.mxu0 0.0
    %619 = vmatpush.msra.mxu0 0.0
    %620 = vmatpush.msra.mxu0 0.0
    %621 = vmatpush.msra.mxu0 0.0
    %622 = vmatpush.msra.mxu0 0.0
    %623 = vmatpush.msra.mxu0 %v375
    %624 = vmatmul.f32.gmra.mxu0 %v606
    %v625 = vpop.f32.mrf.mxu0
    %v626 = vadd.f32 %v580, %v625
    %627 = vdwg.mxu0
    %v629 = vsel %vm411, %v536, 0
    %631 = vmatpush.msra.mxu0 0.0
    %632 = vmatpush.msra.mxu0 0.0
    %633 = vmatpush.msra.mxu0 0.0
    %634 = vmatpush.msra.mxu0 0.0
    %635 = vmatpush.msra.mxu0 0.0
    %636 = vmatpush.msra.mxu0 0.0
    %637 = vmatpush.msra.mxu0 0.0
    %638 = vmatpush.msra.mxu0 0.0
    %639 = vmatpush.msra.mxu0 0.0
    %640 = vmatpush.msra.mxu0 0.0
    %641 = vmatpush.msra.mxu0 0.0
    %642 = vmatpush.msra.mxu0 0.0
    %643 = vmatpush.msra.mxu0 0.0
    %644 = vmatpush.msra.mxu0 0.0
    %645 = vmatpush.msra.mxu0 0.0
    %646 = vmatpush.msra.mxu0 %v378
    %647 = vmatmul.f32.gmra.mxu0 %v629
    %v648 = vpop.f32.mrf.mxu0
    %v649 = vadd.f32 %v603, %v648
    %650 = vdwg.mxu0
    %v651 = vmul.f32 %v626, %v557
    %v652 = vmul.f32 %v649, %v558
    %v653 = vld [vmem:[%s14] sm:$0xff]
    %s654 = scalar_lea.vmem %s8, 32
    %v655 = vld [vmem:[%s654] sm:$0xff]
    %v656 = vld [vmem:[%s654 + $0x8] sm:$0xff]
    %v657 = vld [vmem:[%s654 + $0x10] sm:$0xff]
    %v658 = vld [vmem:[%s654 + $0x18] sm:$0xff]
    %s659 = scalar_lea.vmem %s11, 1
    %v660 = vld [vmem:[%s659] sm:$0x1]
    %v662 = vperm.slane %v660, 0
    %664 = vmatpush.msra.mxu0 0.0
    %665 = vmatpush.msra.mxu0 0.0
    %666 = vmatpush.msra.mxu0 0.0
    %667 = vmatpush.msra.mxu0 0.0
    %668 = vmatpush.msra.mxu0 0.0
    %669 = vmatpush.msra.mxu0 0.0
    %670 = vmatpush.msra.mxu0 0.0
    %671 = vmatpush.msra.mxu0 0.0
    %672 = vmatpush.msra.mxu0 0.0
    %673 = vmatpush.msra.mxu0 0.0
    %674 = vmatpush.msra.mxu0 0.0
    %675 = vmatpush.msra.mxu0 0.0
    %676 = vmatpush.msra.mxu0 %v658
    %677 = vmatpush.msra.mxu0 %v657
    %678 = vmatpush.msra.mxu0 %v656
    %679 = vmatpush.msra.mxu0 %v655
    %680 = vmatmul.f32.gmra.mxu0 %v249
    %v681 = vpop.f32.mrf.mxu0
    %v682 = vadd.f32 %v662, %v681
    %683 = vmatmul.f32.gmra.mxu0 %v252
    %v684 = vpop.f32.mrf.mxu0
    %v685 = vadd.f32 %v662, %v684
    %686 = vdwg.mxu0
    %s687 = scalar_lea.vmem %s9, 32
    %v688 = vld [vmem:[%s687] sm:$0xff]
    %v689 = vld [vmem:[%s687 + $0x8] sm:$0xff]
    %v690 = vld [vmem:[%s687 + $0x10] sm:$0xff]
    %v691 = vld [vmem:[%s687 + $0x18] sm:$0xff]
    %s692 = scalar_lea.vmem %s12, 1
    %v693 = vld [vmem:[%s692] sm:$0x1]
    %v695 = vperm.slane %v693, 0
    %697 = vmatpush.msra.mxu0 0.0
    %698 = vmatpush.msra.mxu0 0.0
    %699 = vmatpush.msra.mxu0 0.0
    %700 = vmatpush.msra.mxu0 0.0
    %701 = vmatpush.msra.mxu0 0.0
    %702 = vmatpush.msra.mxu0 0.0
    %703 = vmatpush.msra.mxu0 0.0
    %704 = vmatpush.msra.mxu0 0.0
    %705 = vmatpush.msra.mxu0 0.0
    %706 = vmatpush.msra.mxu0 0.0
    %707 = vmatpush.msra.mxu0 0.0
    %708 = vmatpush.msra.mxu0 0.0
    %709 = vmatpush.msra.mxu0 %v691
    %710 = vmatpush.msra.mxu0 %v690
    %711 = vmatpush.msra.mxu0 %v689
    %712 = vmatpush.msra.mxu0 %v688
    %713 = vmatmul.f32.gmra.mxu0 %v249
    %v714 = vpop.f32.mrf.mxu0
    %v715 = vadd.f32 %v695, %v714
    %716 = vmatmul.f32.gmra.mxu0 %v252
    %v717 = vpop.f32.mrf.mxu0
    %v718 = vadd.f32 %v695, %v717
    %719 = vdwg.mxu0
    %720 = vmatpush.msra.mxu0 0.0
    %721 = vmatpush.msra.mxu0 0.0
    %722 = vmatpush.msra.mxu0 0.0
    %723 = vmatpush.msra.mxu0 0.0
    %724 = vmatpush.msra.mxu0 0.0
    %725 = vmatpush.msra.mxu0 0.0
    %726 = vmatpush.msra.mxu0 0.0
    %727 = vmatpush.msra.mxu0 0.0
    %728 = vmatpush.msra.mxu0 0.0
    %729 = vmatpush.msra.mxu0 0.0
    %730 = vmatpush.msra.mxu0 0.0
    %731 = vmatpush.msra.mxu0 0.0
    %732 = vmatpush.msra.mxu0 %v691
    %733 = vmatpush.msra.mxu0 %v690
    %734 = vmatpush.msra.mxu0 %v689
    %735 = vmatpush.msra.mxu0 %v688
    %736 = vmatmul.f32.gmra.mxu0 %v309
    %v737 = vpop.f32.mrf.mxu0
    %v738 = vadd.f32 %v695, %v737
    %739 = vmatmul.f32.gmra.mxu0 %v312
    %v740 = vpop.f32.mrf.mxu0
    %v741 = vadd.f32 %v695, %v740
    %742 = vmatmul.f32.gmra.mxu0 %v315
    %v743 = vpop.f32.mrf.mxu0
    %v744 = vadd.f32 %v695, %v743
    %745 = vmatmul.f32.gmra.mxu0 %v318
    %v746 = vpop.f32.mrf.mxu0
    %v747 = vadd.f32 %v695, %v746
    %748 = vdwg.mxu0
    %s749 = scalar_lea.vmem %s10, 32
    %v750 = vld [vmem:[%s749] sm:$0xff]
    %v751 = vld [vmem:[%s749 + $0x8] sm:$0xff]
    %v752 = vld [vmem:[%s749 + $0x10] sm:$0xff]
    %v753 = vld [vmem:[%s749 + $0x18] sm:$0xff]
    %s754 = scalar_lea.vmem %s13, 1
    %v755 = vld [vmem:[%s754] sm:$0x1]
    %v757 = vperm.slane %v755, 0
    %759 = vmatpush.msra.mxu0 0.0
    %760 = vmatpush.msra.mxu0 0.0
    %761 = vmatpush.msra.mxu0 0.0
    %762 = vmatpush.msra.mxu0 0.0
    %763 = vmatpush.msra.mxu0 0.0
    %764 = vmatpush.msra.mxu0 0.0
    %765 = vmatpush.msra.mxu0 0.0
    %766 = vmatpush.msra.mxu0 0.0
    %767 = vmatpush.msra.mxu0 0.0
    %768 = vmatpush.msra.mxu0 0.0
    %769 = vmatpush.msra.mxu0 0.0
    %770 = vmatpush.msra.mxu0 0.0
    %771 = vmatpush.msra.mxu0 %v753
    %772 = vmatpush.msra.mxu0 %v752
    %773 = vmatpush.msra.mxu0 %v751
    %774 = vmatpush.msra.mxu0 %v750
    %775 = vmatmul.f32.gmra.mxu0 %v249
    %v776 = vpop.f32.mrf.mxu0
    %v777 = vadd.f32 %v757, %v776
    %778 = vmatmul.f32.gmra.mxu0 %v252
    %v779 = vpop.f32.mrf.mxu0
    %v780 = vadd.f32 %v757, %v779
    %781 = vdwg.mxu0
    %782 = vmatpush.msra.mxu0 0.0
    %783 = vmatpush.msra.mxu0 0.0
    %784 = vmatpush.msra.mxu0 0.0
    %785 = vmatpush.msra.mxu0 0.0
    %786 = vmatpush.msra.mxu0 0.0
    %787 = vmatpush.msra.mxu0 0.0
    %788 = vmatpush.msra.mxu0 0.0
    %789 = vmatpush.msra.mxu0 0.0
    %790 = vmatpush.msra.mxu0 0.0
    %791 = vmatpush.msra.mxu0 0.0
    %792 = vmatpush.msra.mxu0 0.0
    %793 = vmatpush.msra.mxu0 0.0
    %794 = vmatpush.msra.mxu0 %v753
    %795 = vmatpush.msra.mxu0 %v752
    %796 = vmatpush.msra.mxu0 %v751
    %797 = vmatpush.msra.mxu0 %v750
    %798 = vmatmul.f32.gmra.mxu0 %v309
    %v799 = vpop.f32.mrf.mxu0
    %v800 = vadd.f32 %v757, %v799
    %801 = vmatmul.f32.gmra.mxu0 %v312
    %v802 = vpop.f32.mrf.mxu0
    %v803 = vadd.f32 %v757, %v802
    %804 = vmatmul.f32.gmra.mxu0 %v315
    %v805 = vpop.f32.mrf.mxu0
    %v806 = vadd.f32 %v757, %v805
    %807 = vmatmul.f32.gmra.mxu0 %v318
    %v808 = vpop.f32.mrf.mxu0
    %v809 = vadd.f32 %v757, %v808
    %810 = vdwg.mxu0
    %v811 = vmul.f32 %v682, 0.35355338
    %v812 = vmul.f32 %v685, 0.35355338
    %v814 = vsel %vm411, %v811, 0
    %v817 = vsel %vm411, %v715, 0
    %819 = vmatpush.xpose.msra.mxu0 0.0
    %820 = vmatpush.xpose.msra.mxu0 0.0
    %821 = vmatpush.xpose.msra.mxu0 0.0
    %822 = vmatpush.xpose.msra.mxu0 0.0
    %823 = vmatpush.xpose.msra.mxu0 0.0
    %824 = vmatpush.xpose.msra.mxu0 0.0
    %825 = vmatpush.xpose.msra.mxu0 0.0
    %826 = vmatpush.xpose.msra.mxu0 0.0
    %827 = vmatpush.xpose.msra.mxu0 0.0
    %828 = vmatpush.xpose.msra.mxu0 0.0
    %829 = vmatpush.xpose.msra.mxu0 0.0
    %830 = vmatpush.xpose.msra.mxu0 0.0
    %831 = vmatpush.xpose.msra.mxu0 0.0
    %832 = vmatpush.xpose.msra.mxu0 0.0
    %833 = vmatpush.xpose.msra.mxu0 0.0
    %834 = vmatpush.xpose.msra.mxu0 %v817
    %835 = vmatmul.f32.gmra.mxu0 %v814
    %v836 = vpop.f32.mrf.mxu0
    %v837 = vadd.f32 0.0, %v836
    %838 = vdwg.mxu0
    %v840 = vsel %vm411, %v812, 0
    %v843 = vsel %vm411, %v718, 0
    %845 = vmatpush.xpose.msra.mxu0 0.0
    %846 = vmatpush.xpose.msra.mxu0 0.0
    %847 = vmatpush.xpose.msra.mxu0 0.0
    %848 = vmatpush.xpose.msra.mxu0 0.0
    %849 = vmatpush.xpose.msra.mxu0 0.0
    %850 = vmatpush.xpose.msra.mxu0 0.0
    %851 = vmatpush.xpose.msra.mxu0 0.0
    %852 = vmatpush.xpose.msra.mxu0 0.0
    %853 = vmatpush.xpose.msra.mxu0 0.0
    %854 = vmatpush.xpose.msra.mxu0 0.0
    %855 = vmatpush.xpose.msra.mxu0 0.0
    %856 = vmatpush.xpose.msra.mxu0 0.0
    %857 = vmatpush.xpose.msra.mxu0 0.0
    %858 = vmatpush.xpose.msra.mxu0 0.0
    %859 = vmatpush.xpose.msra.mxu0 0.0
    %860 = vmatpush.xpose.msra.mxu0 %v843
    %861 = vmatmul.f32.gmra.mxu0 %v840
    %v862 = vpop.f32.mrf.mxu0
    %v863 = vadd.f32 0.0, %v862
    %864 = vdwg.mxu0
    %v866 = vsel %vm411, %v738, 0
    %v869 = vsel %vm411, %v741, 0
    %871 = vmatpush.xpose.msra.mxu0 0.0
    %872 = vmatpush.xpose.msra.mxu0 0.0
    %873 = vmatpush.xpose.msra.mxu0 0.0
    %874 = vmatpush.xpose.msra.mxu0 0.0
    %875 = vmatpush.xpose.msra.mxu0 0.0
    %876 = vmatpush.xpose.msra.mxu0 0.0
    %877 = vmatpush.xpose.msra.mxu0 0.0
    %878 = vmatpush.xpose.msra.mxu0 0.0
    %879 = vmatpush.xpose.msra.mxu0 0.0
    %880 = vmatpush.xpose.msra.mxu0 0.0
    %881 = vmatpush.xpose.msra.mxu0 0.0
    %882 = vmatpush.xpose.msra.mxu0 0.0
    %883 = vmatpush.xpose.msra.mxu0 0.0
    %884 = vmatpush.xpose.msra.mxu0 0.0
    %885 = vmatpush.xpose.msra.mxu0 %v869
    %886 = vmatpush.xpose.msra.mxu0 %v866
    %887 = vmatmul.f32.gmra.mxu0 %v814
    %v888 = vpop.f32.mrf.mxu0
    %v889 = vadd.f32 0.0, %v888
    %890 = vdwg.mxu0
    %v892 = vsel %vm411, %v744, 0
    %v895 = vsel %vm411, %v747, 0
    %897 = vmatpush.xpose.msra.mxu0 0.0
    %898 = vmatpush.xpose.msra.mxu0 0.0
    %899 = vmatpush.xpose.msra.mxu0 0.0
    %900 = vmatpush.xpose.msra.mxu0 0.0
    %901 = vmatpush.xpose.msra.mxu0 0.0
    %902 = vmatpush.xpose.msra.mxu0 0.0
    %903 = vmatpush.xpose.msra.mxu0 0.0
    %904 = vmatpush.xpose.msra.mxu0 0.0
    %905 = vmatpush.xpose.msra.mxu0 0.0
    %906 = vmatpush.xpose.msra.mxu0 0.0
    %907 = vmatpush.xpose.msra.mxu0 0.0
    %908 = vmatpush.xpose.msra.mxu0 0.0
    %909 = vmatpush.xpose.msra.mxu0 0.0
    %910 = vmatpush.xpose.msra.mxu0 0.0
    %911 = vmatpush.xpose.msra.mxu0 %v895
    %912 = vmatpush.xpose.msra.mxu0 %v892
    %913 = vmatmul.f32.gmra.mxu0 %v840
    %v914 = vpop.f32.mrf.mxu0
    %v915 = vadd.f32 0.0, %v914
    %916 = vdwg.mxu0
    %v917 = vsel %vm411, %v837, -inf
    %918 = vmax.xlane.f32.xlu0 %v917
    %v919 = vpop.xlane.xlu0 %918
    %v920 = vsel %vm411, %v863, -inf
    %921 = vmax.xlane.f32.xlu0 %v920
    %v922 = vpop.xlane.xlu0 %921
    %v923 = vsel %vm522, %v889, -inf
    %924 = vmax.xlane.f32.xlu0 %v923
    %v925 = vpop.xlane.xlu0 %924
    %v926 = vsel %vm522, %v915, -inf
    %927 = vmax.xlane.f32.xlu0 %v926
    %v928 = vpop.xlane.xlu0 %927
    %v929 = vmax.f32 %v919, %v925
    %v930 = vmax.f32 %v922, %v928
    %v931 = vsub.f32 %v837, %v929
    %v932 = vsub.f32 %v863, %v930
    %v933 = vmul.f32 %v931, 1.442695
    %v934 = vpow.pop %v933
    %v935 = vmul.f32 %v932, 1.442695
    %v936 = vpow.pop %v935
    %v937 = vsub.f32 %v889, %v929
    %v938 = vsub.f32 %v915, %v930
    %v939 = vmul.f32 %v937, 1.442695
    %v940 = vpow.pop %v939
    %v941 = vmul.f32 %v938, 1.442695
    %v942 = vpow.pop %v941
    %v943 = vsel %vm411, %v934, 0.0
    %944 = vadd.xlane.f32.xlu0 %v943
    %v945 = vpop.xlane.xlu0 %944
    %v946 = vsel %vm411, %v936, 0.0
    %947 = vadd.xlane.f32.xlu0 %v946
    %v948 = vpop.xlane.xlu0 %947
    %v949 = vsel %vm522, %v940, 0.0
    %950 = vadd.xlane.f32.xlu0 %v949
    %v951 = vpop.xlane.xlu0 %950
    %v952 = vsel %vm522, %v942, 0.0
    %953 = vadd.xlane.f32.xlu0 %v952
    %v954 = vpop.xlane.xlu0 %953
    %v955 = vadd.f32 %v945, %v951
    %v956 = vadd.f32 %v948, %v954
    %v957 = vrcp.pop %v955
    %v958 = vrcp.pop %v956
    %v960 = vsel %vm522, %v940, 0
    %962 = vmatpush.msra.mxu0 0.0
    %963 = vmatpush.msra.mxu0 0.0
    %964 = vmatpush.msra.mxu0 0.0
    %965 = vmatpush.msra.mxu0 0.0
    %966 = vmatpush.msra.mxu0 0.0
    %967 = vmatpush.msra.mxu0 0.0
    %968 = vmatpush.msra.mxu0 0.0
    %969 = vmatpush.msra.mxu0 0.0
    %970 = vmatpush.msra.mxu0 0.0
    %971 = vmatpush.msra.mxu0 0.0
    %972 = vmatpush.msra.mxu0 0.0
    %973 = vmatpush.msra.mxu0 0.0
    %974 = vmatpush.msra.mxu0 0.0
    %975 = vmatpush.msra.mxu0 0.0
    %976 = vmatpush.msra.mxu0 %v803
    %977 = vmatpush.msra.mxu0 %v800
    %978 = vmatmul.f32.gmra.mxu0 %v960
    %v979 = vpop.f32.mrf.mxu0
    %v980 = vadd.f32 0.0, %v979
    %981 = vdwg.mxu0
    %v983 = vsel %vm522, %v942, 0
    %985 = vmatpush.msra.mxu0 0.0
    %986 = vmatpush.msra.mxu0 0.0
    %987 = vmatpush.msra.mxu0 0.0
    %988 = vmatpush.msra.mxu0 0.0
    %989 = vmatpush.msra.mxu0 0.0
    %990 = vmatpush.msra.mxu0 0.0
    %991 = vmatpush.msra.mxu0 0.0
    %992 = vmatpush.msra.mxu0 0.0
    %993 = vmatpush.msra.mxu0 0.0
    %994 = vmatpush.msra.mxu0 0.0
    %995 = vmatpush.msra.mxu0 0.0
    %996 = vmatpush.msra.mxu0 0.0
    %997 = vmatpush.msra.mxu0 0.0
    %998 = vmatpush.msra.mxu0 0.0
    %999 = vmatpush.msra.mxu0 %v809
    %1000 = vmatpush.msra.mxu0 %v806
    %1001 = vmatmul.f32.gmra.mxu0 %v983
    %v1002 = vpop.f32.mrf.mxu0
    %v1003 = vadd.f32 0.0, %v1002
    %1004 = vdwg.mxu0
    %v1006 = vsel %vm411, %v934, 0
    %1008 = vmatpush.msra.mxu0 0.0
    %1009 = vmatpush.msra.mxu0 0.0
    %1010 = vmatpush.msra.mxu0 0.0
    %1011 = vmatpush.msra.mxu0 0.0
    %1012 = vmatpush.msra.mxu0 0.0
    %1013 = vmatpush.msra.mxu0 0.0
    %1014 = vmatpush.msra.mxu0 0.0
    %1015 = vmatpush.msra.mxu0 0.0
    %1016 = vmatpush.msra.mxu0 0.0
    %1017 = vmatpush.msra.mxu0 0.0
    %1018 = vmatpush.msra.mxu0 0.0
    %1019 = vmatpush.msra.mxu0 0.0
    %1020 = vmatpush.msra.mxu0 0.0
    %1021 = vmatpush.msra.mxu0 0.0
    %1022 = vmatpush.msra.mxu0 0.0
    %1023 = vmatpush.msra.mxu0 %v777
    %1024 = vmatmul.f32.gmra.mxu0 %v1006
    %v1025 = vpop.f32.mrf.mxu0
    %v1026 = vadd.f32 %v980, %v1025
    %1027 = vdwg.mxu0
    %v1029 = vsel %vm411, %v936, 0
    %1031 = vmatpush.msra.mxu0 0.0
    %1032 = vmatpush.msra.mxu0 0.0
    %1033 = vmatpush.msra.mxu0 0.0
    %1034 = vmatpush.msra.mxu0 0.0
    %1035 = vmatpush.msra.mxu0 0.0
    %1036 = vmatpush.msra.mxu0 0.0
    %1037 = vmatpush.msra.mxu0 0.0
    %1038 = vmatpush.msra.mxu0 0.0
    %1039 = vmatpush.msra.mxu0 0.0
    %1040 = vmatpush.msra.mxu0 0.0
    %1041 = vmatpush.msra.mxu0 0.0
    %1042 = vmatpush.msra.mxu0 0.0
    %1043 = vmatpush.msra.mxu0 0.0
    %1044 = vmatpush.msra.mxu0 0.0
    %1045 = vmatpush.msra.mxu0 0.0
    %1046 = vmatpush.msra.mxu0 %v780
    %1047 = vmatmul.f32.gmra.mxu0 %v1029
    %v1048 = vpop.f32.mrf.mxu0
    %v1049 = vadd.f32 %v1003, %v1048
    %1050 = vdwg.mxu0
    %v1051 = vmul.f32 %v1026, %v957
    %v1052 = vmul.f32 %v1049, %v958
    %s1053 = scalar_lea.vmem %s14, 8
    %v1054 = vld [vmem:[%s1053] sm:$0xff]
    %v1056 = vsel %vm411, %v1051, 0
    %v1059 = vsel %vm411, %v1052, 0
    %1061 = vmatpush.msra.mxu0 0.0
    %1062 = vmatpush.msra.mxu0 0.0
    %1063 = vmatpush.msra.mxu0 0.0
    %1064 = vmatpush.msra.mxu0 0.0
    %1065 = vmatpush.msra.mxu0 0.0
    %1066 = vmatpush.msra.mxu0 0.0
    %1067 = vmatpush.msra.mxu0 0.0
    %1068 = vmatpush.msra.mxu0 0.0
    %1069 = vmatpush.msra.mxu0 0.0
    %1070 = vmatpush.msra.mxu0 0.0
    %1071 = vmatpush.msra.mxu0 0.0
    %1072 = vmatpush.msra.mxu0 0.0
    %1073 = vmatpush.msra.mxu0 0.0
    %1074 = vmatpush.msra.mxu0 0.0
    %1075 = vmatpush.msra.mxu0 0.0
    %1076 = vmatpush.msra.mxu0 %v1054
    %1077 = vmatmul.f32.gmra.mxu0 %v1056
    %v1078 = vpop.f32.mrf.mxu0
    %v1079 = vadd.f32 0.0, %v1078
    %1080 = vmatmul.f32.gmra.mxu0 %v1059
    %v1081 = vpop.f32.mrf.mxu0
    %v1082 = vadd.f32 0.0, %v1081
    %1083 = vdwg.mxu0
    %v1085 = vsel %vm411, %v651, 0
    %v1088 = vsel %vm411, %v652, 0
    %1090 = vmatpush.msra.mxu0 0.0
    %1091 = vmatpush.msra.mxu0 0.0
    %1092 = vmatpush.msra.mxu0 0.0
    %1093 = vmatpush.msra.mxu0 0.0
    %1094 = vmatpush.msra.mxu0 0.0
    %1095 = vmatpush.msra.mxu0 0.0
    %1096 = vmatpush.msra.mxu0 0.0
    %1097 = vmatpush.msra.mxu0 0.0
    %1098 = vmatpush.msra.mxu0 0.0
    %1099 = vmatpush.msra.mxu0 0.0
    %1100 = vmatpush.msra.mxu0 0.0
    %1101 = vmatpush.msra.mxu0 0.0
    %1102 = vmatpush.msra.mxu0 0.0
    %1103 = vmatpush.msra.mxu0 0.0
    %1104 = vmatpush.msra.mxu0 0.0
    %1105 = vmatpush.msra.mxu0 %v653
    %1106 = vmatmul.f32.gmra.mxu0 %v1085
    %v1107 = vpop.f32.mrf.mxu0
    %v1108 = vadd.f32 %v1079, %v1107
    %1109 = vmatmul.f32.gmra.mxu0 %v1088
    %v1110 = vpop.f32.mrf.mxu0
    %v1111 = vadd.f32 %v1082, %v1110
    %1112 = vdwg.mxu0
    %s1113 = scalar_lea.vmem %s8, 64
    %v1114 = vld [vmem:[%s1113] sm:$0xff]
    %v1115 = vld [vmem:[%s1113 + $0x8] sm:$0xff]
    %v1116 = vld [vmem:[%s1113 + $0x10] sm:$0xff]
    %v1117 = vld [vmem:[%s1113 + $0x18] sm:$0xff]
    %s1118 = scalar_lea.vmem %s11, 2
    %v1119 = vld [vmem:[%s1118] sm:$0x1]
    %v1121 = vperm.slane %v1119, 0
    %1123 = vmatpush.msra.mxu0 0.0
    %1124 = vmatpush.msra.mxu0 0.0
    %1125 = vmatpush.msra.mxu0 0.0
    %1126 = vmatpush.msra.mxu0 0.0
    %1127 = vmatpush.msra.mxu0 0.0
    %1128 = vmatpush.msra.mxu0 0.0
    %1129 = vmatpush.msra.mxu0 0.0
    %1130 = vmatpush.msra.mxu0 0.0
    %1131 = vmatpush.msra.mxu0 0.0
    %1132 = vmatpush.msra.mxu0 0.0
    %1133 = vmatpush.msra.mxu0 0.0
    %1134 = vmatpush.msra.mxu0 0.0
    %1135 = vmatpush.msra.mxu0 %v1117
    %1136 = vmatpush.msra.mxu0 %v1116
    %1137 = vmatpush.msra.mxu0 %v1115
    %1138 = vmatpush.msra.mxu0 %v1114
    %1139 = vmatmul.f32.gmra.mxu0 %v249
    %v1140 = vpop.f32.mrf.mxu0
    %v1141 = vadd.f32 %v1121, %v1140
    %1142 = vmatmul.f32.gmra.mxu0 %v252
    %v1143 = vpop.f32.mrf.mxu0
    %v1144 = vadd.f32 %v1121, %v1143
    %1145 = vdwg.mxu0
    %s1146 = scalar_lea.vmem %s9, 64
    %v1147 = vld [vmem:[%s1146] sm:$0xff]
    %v1148 = vld [vmem:[%s1146 + $0x8] sm:$0xff]
    %v1149 = vld [vmem:[%s1146 + $0x10] sm:$0xff]
    %v1150 = vld [vmem:[%s1146 + $0x18] sm:$0xff]
    %s1151 = scalar_lea.vmem %s12, 2
    %v1152 = vld [vmem:[%s1151] sm:$0x1]
    %v1154 = vperm.slane %v1152, 0
    %1156 = vmatpush.msra.mxu0 0.0
    %1157 = vmatpush.msra.mxu0 0.0
    %1158 = vmatpush.msra.mxu0 0.0
    %1159 = vmatpush.msra.mxu0 0.0
    %1160 = vmatpush.msra.mxu0 0.0
    %1161 = vmatpush.msra.mxu0 0.0
    %1162 = vmatpush.msra.mxu0 0.0
    %1163 = vmatpush.msra.mxu0 0.0
    %1164 = vmatpush.msra.mxu0 0.0
    %1165 = vmatpush.msra.mxu0 0.0
    %1166 = vmatpush.msra.mxu0 0.0
    %1167 = vmatpush.msra.mxu0 0.0
    %1168 = vmatpush.msra.mxu0 %v1150
    %1169 = vmatpush.msra.mxu0 %v1149
    %1170 = vmatpush.msra.mxu0 %v1148
    %1171 = vmatpush.msra.mxu0 %v1147
    %1172 = vmatmul.f32.gmra.mxu0 %v249
    %v1173 = vpop.f32.mrf.mxu0
    %v1174 = vadd.f32 %v1154, %v1173
    %1175 = vmatmul.f32.gmra.mxu0 %v252
    %v1176 = vpop.f32.mrf.mxu0
    %v1177 = vadd.f32 %v1154, %v1176
    %1178 = vdwg.mxu0
    %1179 = vmatpush.msra.mxu0 0.0
    %1180 = vmatpush.msra.mxu0 0.0
    %1181 = vmatpush.msra.mxu0 0.0
    %1182 = vmatpush.msra.mxu0 0.0
    %1183 = vmatpush.msra.mxu0 0.0
    %1184 = vmatpush.msra.mxu0 0.0
    %1185 = vmatpush.msra.mxu0 0.0
    %1186 = vmatpush.msra.mxu0 0.0
    %1187 = vmatpush.msra.mxu0 0.0
    %1188 = vmatpush.msra.mxu0 0.0
    %1189 = vmatpush.msra.mxu0 0.0
    %1190 = vmatpush.msra.mxu0 0.0
    %1191 = vmatpush.msra.mxu0 %v1150
    %1192 = vmatpush.msra.mxu0 %v1149
    %1193 = vmatpush.msra.mxu0 %v1148
    %1194 = vmatpush.msra.mxu0 %v1147
    %1195 = vmatmul.f32.gmra.mxu0 %v309
    %v1196 = vpop.f32.mrf.mxu0
    %v1197 = vadd.f32 %v1154, %v1196
    %1198 = vmatmul.f32.gmra.mxu0 %v312
    %v1199 = vpop.f32.mrf.mxu0
    %v1200 = vadd.f32 %v1154, %v1199
    %1201 = vmatmul.f32.gmra.mxu0 %v315
    %v1202 = vpop.f32.mrf.mxu0
    %v1203 = vadd.f32 %v1154, %v1202
    %1204 = vmatmul.f32.gmra.mxu0 %v318
    %v1205 = vpop.f32.mrf.mxu0
    %v1206 = vadd.f32 %v1154, %v1205
    %1207 = vdwg.mxu0
    %s1208 = scalar_lea.vmem %s10, 64
    %v1209 = vld [vmem:[%s1208] sm:$0xff]
    %v1210 = vld [vmem:[%s1208 + $0x8] sm:$0xff]
    %v1211 = vld [vmem:[%s1208 + $0x10] sm:$0xff]
    %v1212 = vld [vmem:[%s1208 + $0x18] sm:$0xff]
    %s1213 = scalar_lea.vmem %s13, 2
    %v1214 = vld [vmem:[%s1213] sm:$0x1]
    %v1216 = vperm.slane %v1214, 0
    %1218 = vmatpush.msra.mxu0 0.0
    %1219 = vmatpush.msra.mxu0 0.0
    %1220 = vmatpush.msra.mxu0 0.0
    %1221 = vmatpush.msra.mxu0 0.0
    %1222 = vmatpush.msra.mxu0 0.0
    %1223 = vmatpush.msra.mxu0 0.0
    %1224 = vmatpush.msra.mxu0 0.0
    %1225 = vmatpush.msra.mxu0 0.0
    %1226 = vmatpush.msra.mxu0 0.0
    %1227 = vmatpush.msra.mxu0 0.0
    %1228 = vmatpush.msra.mxu0 0.0
    %1229 = vmatpush.msra.mxu0 0.0
    %1230 = vmatpush.msra.mxu0 %v1212
    %1231 = vmatpush.msra.mxu0 %v1211
    %1232 = vmatpush.msra.mxu0 %v1210
    %1233 = vmatpush.msra.mxu0 %v1209
    %1234 = vmatmul.f32.gmra.mxu0 %v249
    %v1235 = vpop.f32.mrf.mxu0
    %v1236 = vadd.f32 %v1216, %v1235
    %1237 = vmatmul.f32.gmra.mxu0 %v252
    %v1238 = vpop.f32.mrf.mxu0
    %v1239 = vadd.f32 %v1216, %v1238
    %1240 = vdwg.mxu0
    %1241 = vmatpush.msra.mxu0 0.0
    %1242 = vmatpush.msra.mxu0 0.0
    %1243 = vmatpush.msra.mxu0 0.0
    %1244 = vmatpush.msra.mxu0 0.0
    %1245 = vmatpush.msra.mxu0 0.0
    %1246 = vmatpush.msra.mxu0 0.0
    %1247 = vmatpush.msra.mxu0 0.0
    %1248 = vmatpush.msra.mxu0 0.0
    %1249 = vmatpush.msra.mxu0 0.0
    %1250 = vmatpush.msra.mxu0 0.0
    %1251 = vmatpush.msra.mxu0 0.0
    %1252 = vmatpush.msra.mxu0 0.0
    %1253 = vmatpush.msra.mxu0 %v1212
    %1254 = vmatpush.msra.mxu0 %v1211
    %1255 = vmatpush.msra.mxu0 %v1210
    %1256 = vmatpush.msra.mxu0 %v1209
    %1257 = vmatmul.f32.gmra.mxu0 %v309
    %v1258 = vpop.f32.mrf.mxu0
    %v1259 = vadd.f32 %v1216, %v1258
    %1260 = vmatmul.f32.gmra.mxu0 %v312
    %v1261 = vpop.f32.mrf.mxu0
    %v1262 = vadd.f32 %v1216, %v1261
    %1263 = vmatmul.f32.gmra.mxu0 %v315
    %v1264 = vpop.f32.mrf.mxu0
    %v1265 = vadd.f32 %v1216, %v1264
    %1266 = vmatmul.f32.gmra.mxu0 %v318
    %v1267 = vpop.f32.mrf.mxu0
    %v1268 = vadd.f32 %v1216, %v1267
    %1269 = vdwg.mxu0
    %v1270 = vmul.f32 %v1141, 0.35355338
    %v1271 = vmul.f32 %v1144, 0.35355338
    %v1273 = vsel %vm411, %v1270, 0
    %v1276 = vsel %vm411, %v1174, 0
    %1278 = vmatpush.xpose.msra.mxu0 0.0
    %1279 = vmatpush.xpose.msra.mxu0 0.0
    %1280 = vmatpush.xpose.msra.mxu0 0.0
    %1281 = vmatpush.xpose.msra.mxu0 0.0
    %1282 = vmatpush.xpose.msra.mxu0 0.0
    %1283 = vmatpush.xpose.msra.mxu0 0.0
    %1284 = vmatpush.xpose.msra.mxu0 0.0
    %1285 = vmatpush.xpose.msra.mxu0 0.0
    %1286 = vmatpush.xpose.msra.mxu0 0.0
    %1287 = vmatpush.xpose.msra.mxu0 0.0
    %1288 = vmatpush.xpose.msra.mxu0 0.0
    %1289 = vmatpush.xpose.msra.mxu0 0.0
    %1290 = vmatpush.xpose.msra.mxu0 0.0
    %1291 = vmatpush.xpose.msra.mxu0 0.0
    %1292 = vmatpush.xpose.msra.mxu0 0.0
    %1293 = vmatpush.xpose.msra.mxu0 %v1276
    %1294 = vmatmul.f32.gmra.mxu0 %v1273
    %v1295 = vpop.f32.mrf.mxu0
    %v1296 = vadd.f32 0.0, %v1295
    %1297 = vdwg.mxu0
    %v1299 = vsel %vm411, %v1271, 0
    %v1302 = vsel %vm411, %v1177, 0
    %1304 = vmatpush.xpose.msra.mxu0 0.0
    %1305 = vmatpush.xpose.msra.mxu0 0.0
    %1306 = vmatpush.xpose.msra.mxu0 0.0
    %1307 = vmatpush.xpose.msra.mxu0 0.0
    %1308 = vmatpush.xpose.msra.mxu0 0.0
    %1309 = vmatpush.xpose.msra.mxu0 0.0
    %1310 = vmatpush.xpose.msra.mxu0 0.0
    %1311 = vmatpush.xpose.msra.mxu0 0.0
    %1312 = vmatpush.xpose.msra.mxu0 0.0
    %1313 = vmatpush.xpose.msra.mxu0 0.0
    %1314 = vmatpush.xpose.msra.mxu0 0.0
    %1315 = vmatpush.xpose.msra.mxu0 0.0
    %1316 = vmatpush.xpose.msra.mxu0 0.0
    %1317 = vmatpush.xpose.msra.mxu0 0.0
    %1318 = vmatpush.xpose.msra.mxu0 0.0
    %1319 = vmatpush.xpose.msra.mxu0 %v1302
    %1320 = vmatmul.f32.gmra.mxu0 %v1299
    %v1321 = vpop.f32.mrf.mxu0
    %v1322 = vadd.f32 0.0, %v1321
    %1323 = vdwg.mxu0
    %v1325 = vsel %vm411, %v1197, 0
    %v1328 = vsel %vm411, %v1200, 0
    %1330 = vmatpush.xpose.msra.mxu0 0.0
    %1331 = vmatpush.xpose.msra.mxu0 0.0
    %1332 = vmatpush.xpose.msra.mxu0 0.0
    %1333 = vmatpush.xpose.msra.mxu0 0.0
    %1334 = vmatpush.xpose.msra.mxu0 0.0
    %1335 = vmatpush.xpose.msra.mxu0 0.0
    %1336 = vmatpush.xpose.msra.mxu0 0.0
    %1337 = vmatpush.xpose.msra.mxu0 0.0
    %1338 = vmatpush.xpose.msra.mxu0 0.0
    %1339 = vmatpush.xpose.msra.mxu0 0.0
    %1340 = vmatpush.xpose.msra.mxu0 0.0
    %1341 = vmatpush.xpose.msra.mxu0 0.0
    %1342 = vmatpush.xpose.msra.mxu0 0.0
    %1343 = vmatpush.xpose.msra.mxu0 0.0
    %1344 = vmatpush.xpose.msra.mxu0 %v1328
    %1345 = vmatpush.xpose.msra.mxu0 %v1325
    %1346 = vmatmul.f32.gmra.mxu0 %v1273
    %v1347 = vpop.f32.mrf.mxu0
    %v1348 = vadd.f32 0.0, %v1347
    %1349 = vdwg.mxu0
    %v1351 = vsel %vm411, %v1203, 0
    %v1354 = vsel %vm411, %v1206, 0
    %1356 = vmatpush.xpose.msra.mxu0 0.0
    %1357 = vmatpush.xpose.msra.mxu0 0.0
    %1358 = vmatpush.xpose.msra.mxu0 0.0
    %1359 = vmatpush.xpose.msra.mxu0 0.0
    %1360 = vmatpush.xpose.msra.mxu0 0.0
    %1361 = vmatpush.xpose.msra.mxu0 0.0
    %1362 = vmatpush.xpose.msra.mxu0 0.0
    %1363 = vmatpush.xpose.msra.mxu0 0.0
    %1364 = vmatpush.xpose.msra.mxu0 0.0
    %1365 = vmatpush.xpose.msra.mxu0 0.0
    %1366 = vmatpush.xpose.msra.mxu0 0.0
    %1367 = vmatpush.xpose.msra.mxu0 0.0
    %1368 = vmatpush.xpose.msra.mxu0 0.0
    %1369 = vmatpush.xpose.msra.mxu0 0.0
    %1370 = vmatpush.xpose.msra.mxu0 %v1354
    %1371 = vmatpush.xpose.msra.mxu0 %v1351
    %1372 = vmatmul.f32.gmra.mxu0 %v1299
    %v1373 = vpop.f32.mrf.mxu0
    %v1374 = vadd.f32 0.0, %v1373
    %1375 = vdwg.mxu0
    %v1376 = vsel %vm411, %v1296, -inf
    %1377 = vmax.xlane.f32.xlu0 %v1376
    %v1378 = vpop.xlane.xlu0 %1377
    %v1379 = vsel %vm411, %v1322, -inf
    %1380 = vmax.xlane.f32.xlu0 %v1379
    %v1381 = vpop.xlane.xlu0 %1380
    %v1382 = vsel %vm522, %v1348, -inf
    %1383 = vmax.xlane.f32.xlu0 %v1382
    %v1384 = vpop.xlane.xlu0 %1383
    %v1385 = vsel %vm522, %v1374, -inf
    %1386 = vmax.xlane.f32.xlu0 %v1385
    %v1387 = vpop.xlane.xlu0 %1386
    %v1388 = vmax.f32 %v1378, %v1384
    %v1389 = vmax.f32 %v1381, %v1387
    %v1390 = vsub.f32 %v1296, %v1388
    %v1391 = vsub.f32 %v1322, %v1389
    %v1392 = vmul.f32 %v1390, 1.442695
    %v1393 = vpow.pop %v1392
    %v1394 = vmul.f32 %v1391, 1.442695
    %v1395 = vpow.pop %v1394
    %v1396 = vsub.f32 %v1348, %v1388
    %v1397 = vsub.f32 %v1374, %v1389
    %v1398 = vmul.f32 %v1396, 1.442695
    %v1399 = vpow.pop %v1398
    %v1400 = vmul.f32 %v1397, 1.442695
    %v1401 = vpow.pop %v1400
    %v1402 = vsel %vm411, %v1393, 0.0
    %1403 = vadd.xlane.f32.xlu0 %v1402
    %v1404 = vpop.xlane.xlu0 %1403
    %v1405 = vsel %vm411, %v1395, 0.0
    %1406 = vadd.xlane.f32.xlu0 %v1405
    %v1407 = vpop.xlane.xlu0 %1406
    %v1408 = vsel %vm522, %v1399, 0.0
    %1409 = vadd.xlane.f32.xlu0 %v1408
    %v1410 = vpop.xlane.xlu0 %1409
    %v1411 = vsel %vm522, %v1401, 0.0
    %1412 = vadd.xlane.f32.xlu0 %v1411
    %v1413 = vpop.xlane.xlu0 %1412
    %v1414 = vadd.f32 %v1404, %v1410
    %v1415 = vadd.f32 %v1407, %v1413
    %v1416 = vrcp.pop %v1414
    %v1417 = vrcp.pop %v1415
    %v1419 = vsel %vm522, %v1399, 0
    %1421 = vmatpush.msra.mxu0 0.0
    %1422 = vmatpush.msra.mxu0 0.0
    %1423 = vmatpush.msra.mxu0 0.0
    %1424 = vmatpush.msra.mxu0 0.0
    %1425 = vmatpush.msra.mxu0 0.0
    %1426 = vmatpush.msra.mxu0 0.0
    %1427 = vmatpush.msra.mxu0 0.0
    %1428 = vmatpush.msra.mxu0 0.0
    %1429 = vmatpush.msra.mxu0 0.0
    %1430 = vmatpush.msra.mxu0 0.0
    %1431 = vmatpush.msra.mxu0 0.0
    %1432 = vmatpush.msra.mxu0 0.0
    %1433 = vmatpush.msra.mxu0 0.0
    %1434 = vmatpush.msra.mxu0 0.0
    %1435 = vmatpush.msra.mxu0 %v1262
    %1436 = vmatpush.msra.mxu0 %v1259
    %1437 = vmatmul.f32.gmra.mxu0 %v1419
    %v1438 = vpop.f32.mrf.mxu0
    %v1439 = vadd.f32 0.0, %v1438
    %1440 = vdwg.mxu0
    %v1442 = vsel %vm522, %v1401, 0
    %1444 = vmatpush.msra.mxu0 0.0
    %1445 = vmatpush.msra.mxu0 0.0
    %1446 = vmatpush.msra.mxu0 0.0
    %1447 = vmatpush.msra.mxu0 0.0
    %1448 = vmatpush.msra.mxu0 0.0
    %1449 = vmatpush.msra.mxu0 0.0
    %1450 = vmatpush.msra.mxu0 0.0
    %1451 = vmatpush.msra.mxu0 0.0
    %1452 = vmatpush.msra.mxu0 0.0
    %1453 = vmatpush.msra.mxu0 0.0
    %1454 = vmatpush.msra.mxu0 0.0
    %1455 = vmatpush.msra.mxu0 0.0
    %1456 = vmatpush.msra.mxu0 0.0
    %1457 = vmatpush.msra.mxu0 0.0
    %1458 = vmatpush.msra.mxu0 %v1268
    %1459 = vmatpush.msra.mxu0 %v1265
    %1460 = vmatmul.f32.gmra.mxu0 %v1442
    %v1461 = vpop.f32.mrf.mxu0
    %v1462 = vadd.f32 0.0, %v1461
    %1463 = vdwg.mxu0
    %v1465 = vsel %vm411, %v1393, 0
    %1467 = vmatpush.msra.mxu0 0.0
    %1468 = vmatpush.msra.mxu0 0.0
    %1469 = vmatpush.msra.mxu0 0.0
    %1470 = vmatpush.msra.mxu0 0.0
    %1471 = vmatpush.msra.mxu0 0.0
    %1472 = vmatpush.msra.mxu0 0.0
    %1473 = vmatpush.msra.mxu0 0.0
    %1474 = vmatpush.msra.mxu0 0.0
    %1475 = vmatpush.msra.mxu0 0.0
    %1476 = vmatpush.msra.mxu0 0.0
    %1477 = vmatpush.msra.mxu0 0.0
    %1478 = vmatpush.msra.mxu0 0.0
    %1479 = vmatpush.msra.mxu0 0.0
    %1480 = vmatpush.msra.mxu0 0.0
    %1481 = vmatpush.msra.mxu0 0.0
    %1482 = vmatpush.msra.mxu0 %v1236
    %1483 = vmatmul.f32.gmra.mxu0 %v1465
    %v1484 = vpop.f32.mrf.mxu0
    %v1485 = vadd.f32 %v1439, %v1484
    %1486 = vdwg.mxu0
    %v1488 = vsel %vm411, %v1395, 0
    %1490 = vmatpush.msra.mxu0 0.0
    %1491 = vmatpush.msra.mxu0 0.0
    %1492 = vmatpush.msra.mxu0 0.0
    %1493 = vmatpush.msra.mxu0 0.0
    %1494 = vmatpush.msra.mxu0 0.0
    %1495 = vmatpush.msra.mxu0 0.0
    %1496 = vmatpush.msra.mxu0 0.0
    %1497 = vmatpush.msra.mxu0 0.0
    %1498 = vmatpush.msra.mxu0 0.0
    %1499 = vmatpush.msra.mxu0 0.0
    %1500 = vmatpush.msra.mxu0 0.0
    %1501 = vmatpush.msra.mxu0 0.0
    %1502 = vmatpush.msra.mxu0 0.0
    %1503 = vmatpush.msra.mxu0 0.0
    %1504 = vmatpush.msra.mxu0 0.0
    %1505 = vmatpush.msra.mxu0 %v1239
    %1506 = vmatmul.f32.gmra.mxu0 %v1488
    %v1507 = vpop.f32.mrf.mxu0
    %v1508 = vadd.f32 %v1462, %v1507
    %1509 = vdwg.mxu0
    %v1510 = vmul.f32 %v1485, %v1416
    %v1511 = vmul.f32 %v1508, %v1417
    %s1512 = scalar_lea.vmem %s14, 16
    %v1513 = vld [vmem:[%s1512] sm:$0xff]
    %v1515 = vsel %vm411, %v1510, 0
    %v1518 = vsel %vm411, %v1511, 0
    %1520 = vmatpush.msra.mxu0 0.0
    %1521 = vmatpush.msra.mxu0 0.0
    %1522 = vmatpush.msra.mxu0 0.0
    %1523 = vmatpush.msra.mxu0 0.0
    %1524 = vmatpush.msra.mxu0 0.0
    %1525 = vmatpush.msra.mxu0 0.0
    %1526 = vmatpush.msra.mxu0 0.0
    %1527 = vmatpush.msra.mxu0 0.0
    %1528 = vmatpush.msra.mxu0 0.0
    %1529 = vmatpush.msra.mxu0 0.0
    %1530 = vmatpush.msra.mxu0 0.0
    %1531 = vmatpush.msra.mxu0 0.0
    %1532 = vmatpush.msra.mxu0 0.0
    %1533 = vmatpush.msra.mxu0 0.0
    %1534 = vmatpush.msra.mxu0 0.0
    %1535 = vmatpush.msra.mxu0 %v1513
    %1536 = vmatmul.f32.gmra.mxu0 %v1515
    %v1537 = vpop.f32.mrf.mxu0
    %v1538 = vadd.f32 0.0, %v1537
    %1539 = vmatmul.f32.gmra.mxu0 %v1518
    %v1540 = vpop.f32.mrf.mxu0
    %v1541 = vadd.f32 0.0, %v1540
    %1542 = vdwg.mxu0
    %v1543 = vadd.f32 %v1108, %v1538
    %v1544 = vadd.f32 %v1111, %v1541
    %s1545 = scalar_lea.vmem %s8, 96
    %v1546 = vld [vmem:[%s1545] sm:$0xff]
    %v1547 = vld [vmem:[%s1545 + $0x8] sm:$0xff]
    %v1548 = vld [vmem:[%s1545 + $0x10] sm:$0xff]
    %v1549 = vld [vmem:[%s1545 + $0x18] sm:$0xff]
    %s1550 = scalar_lea.vmem %s11, 3
    %v1551 = vld [vmem:[%s1550] sm:$0x1]
    %v1553 = vperm.slane %v1551, 0
    %1555 = vmatpush.msra.mxu0 0.0
    %1556 = vmatpush.msra.mxu0 0.0
    %1557 = vmatpush.msra.mxu0 0.0
    %1558 = vmatpush.msra.mxu0 0.0
    %1559 = vmatpush.msra.mxu0 0.0
    %1560 = vmatpush.msra.mxu0 0.0
    %1561 = vmatpush.msra.mxu0 0.0
    %1562 = vmatpush.msra.mxu0 0.0
    %1563 = vmatpush.msra.mxu0 0.0
    %1564 = vmatpush.msra.mxu0 0.0
    %1565 = vmatpush.msra.mxu0 0.0
    %1566 = vmatpush.msra.mxu0 0.0
    %1567 = vmatpush.msra.mxu0 %v1549
    %1568 = vmatpush.msra.mxu0 %v1548
    %1569 = vmatpush.msra.mxu0 %v1547
    %1570 = vmatpush.msra.mxu0 %v1546
    %1571 = vmatmul.f32.gmra.mxu0 %v249
    %v1572 = vpop.f32.mrf.mxu0
    %v1573 = vadd.f32 %v1553, %v1572
    %1574 = vmatmul.f32.gmra.mxu0 %v252
    %v1575 = vpop.f32.mrf.mxu0
    %v1576 = vadd.f32 %v1553, %v1575
    %1577 = vdwg.mxu0
    %s1578 = scalar_lea.vmem %s9, 96
    %v1579 = vld [vmem:[%s1578] sm:$0xff]
    %v1580 = vld [vmem:[%s1578 + $0x8] sm:$0xff]
    %v1581 = vld [vmem:[%s1578 + $0x10] sm:$0xff]
    %v1582 = vld [vmem:[%s1578 + $0x18] sm:$0xff]
    %s1583 = scalar_lea.vmem %s12, 3
    %v1584 = vld [vmem:[%s1583] sm:$0x1]
    %v1586 = vperm.slane %v1584, 0
    %1588 = vmatpush.msra.mxu0 0.0
    %1589 = vmatpush.msra.mxu0 0.0
    %1590 = vmatpush.msra.mxu0 0.0
    %1591 = vmatpush.msra.mxu0 0.0
    %1592 = vmatpush.msra.mxu0 0.0
    %1593 = vmatpush.msra.mxu0 0.0
    %1594 = vmatpush.msra.mxu0 0.0
    %1595 = vmatpush.msra.mxu0 0.0
    %1596 = vmatpush.msra.mxu0 0.0
    %1597 = vmatpush.msra.mxu0 0.0
    %1598 = vmatpush.msra.mxu0 0.0
    %1599 = vmatpush.msra.mxu0 0.0
    %1600 = vmatpush.msra.mxu0 %v1582
    %1601 = vmatpush.msra.mxu0 %v1581
    %1602 = vmatpush.msra.mxu0 %v1580
    %1603 = vmatpush.msra.mxu0 %v1579
    %1604 = vmatmul.f32.gmra.mxu0 %v249
    %v1605 = vpop.f32.mrf.mxu0
    %v1606 = vadd.f32 %v1586, %v1605
    %1607 = vmatmul.f32.gmra.mxu0 %v252
    %v1608 = vpop.f32.mrf.mxu0
    %v1609 = vadd.f32 %v1586, %v1608
    %1610 = vdwg.mxu0
    %1611 = vmatpush.msra.mxu0 0.0
    %1612 = vmatpush.msra.mxu0 0.0
    %1613 = vmatpush.msra.mxu0 0.0
    %1614 = vmatpush.msra.mxu0 0.0
    %1615 = vmatpush.msra.mxu0 0.0
    %1616 = vmatpush.msra.mxu0 0.0
    %1617 = vmatpush.msra.mxu0 0.0
    %1618 = vmatpush.msra.mxu0 0.0
    %1619 = vmatpush.msra.mxu0 0.0
    %1620 = vmatpush.msra.mxu0 0.0
    %1621 = vmatpush.msra.mxu0 0.0
    %1622 = vmatpush.msra.mxu0 0.0
    %1623 = vmatpush.msra.mxu0 %v1582
    %1624 = vmatpush.msra.mxu0 %v1581
    %1625 = vmatpush.msra.mxu0 %v1580
    %1626 = vmatpush.msra.mxu0 %v1579
    %1627 = vmatmul.f32.gmra.mxu0 %v309
    %v1628 = vpop.f32.mrf.mxu0
    %v1629 = vadd.f32 %v1586, %v1628
    %1630 = vmatmul.f32.gmra.mxu0 %v312
    %v1631 = vpop.f32.mrf.mxu0
    %v1632 = vadd.f32 %v1586, %v1631
    %1633 = vmatmul.f32.gmra.mxu0 %v315
    %v1634 = vpop.f32.mrf.mxu0
    %v1635 = vadd.f32 %v1586, %v1634
    %1636 = vmatmul.f32.gmra.mxu0 %v318
    %v1637 = vpop.f32.mrf.mxu0
    %v1638 = vadd.f32 %v1586, %v1637
    %1639 = vdwg.mxu0
    %s1640 = scalar_lea.vmem %s10, 96
    %v1641 = vld [vmem:[%s1640] sm:$0xff]
    %v1642 = vld [vmem:[%s1640 + $0x8] sm:$0xff]
    %v1643 = vld [vmem:[%s1640 + $0x10] sm:$0xff]
    %v1644 = vld [vmem:[%s1640 + $0x18] sm:$0xff]
    %s1645 = scalar_lea.vmem %s13, 3
    %v1646 = vld [vmem:[%s1645] sm:$0x1]
    %v1648 = vperm.slane %v1646, 0
    %1650 = vmatpush.msra.mxu0 0.0
    %1651 = vmatpush.msra.mxu0 0.0
    %1652 = vmatpush.msra.mxu0 0.0
    %1653 = vmatpush.msra.mxu0 0.0
    %1654 = vmatpush.msra.mxu0 0.0
    %1655 = vmatpush.msra.mxu0 0.0
    %1656 = vmatpush.msra.mxu0 0.0
    %1657 = vmatpush.msra.mxu0 0.0
    %1658 = vmatpush.msra.mxu0 0.0
    %1659 = vmatpush.msra.mxu0 0.0
    %1660 = vmatpush.msra.mxu0 0.0
    %1661 = vmatpush.msra.mxu0 0.0
    %1662 = vmatpush.msra.mxu0 %v1644
    %1663 = vmatpush.msra.mxu0 %v1643
    %1664 = vmatpush.msra.mxu0 %v1642
    %1665 = vmatpush.msra.mxu0 %v1641
    %1666 = vmatmul.f32.gmra.mxu0 %v249
    %v1667 = vpop.f32.mrf.mxu0
    %v1668 = vadd.f32 %v1648, %v1667
    %1669 = vmatmul.f32.gmra.mxu0 %v252
    %v1670 = vpop.f32.mrf.mxu0
    %v1671 = vadd.f32 %v1648, %v1670
    %1672 = vdwg.mxu0
    %1673 = vmatpush.msra.mxu0 0.0
    %1674 = vmatpush.msra.mxu0 0.0
    %1675 = vmatpush.msra.mxu0 0.0
    %1676 = vmatpush.msra.mxu0 0.0
    %1677 = vmatpush.msra.mxu0 0.0
    %1678 = vmatpush.msra.mxu0 0.0
    %1679 = vmatpush.msra.mxu0 0.0
    %1680 = vmatpush.msra.mxu0 0.0
    %1681 = vmatpush.msra.mxu0 0.0
    %1682 = vmatpush.msra.mxu0 0.0
    %1683 = vmatpush.msra.mxu0 0.0
    %1684 = vmatpush.msra.mxu0 0.0
    %1685 = vmatpush.msra.mxu0 %v1644
    %1686 = vmatpush.msra.mxu0 %v1643
    %1687 = vmatpush.msra.mxu0 %v1642
    %1688 = vmatpush.msra.mxu0 %v1641
    %1689 = vmatmul.f32.gmra.mxu0 %v309
    %v1690 = vpop.f32.mrf.mxu0
    %v1691 = vadd.f32 %v1648, %v1690
    %1692 = vmatmul.f32.gmra.mxu0 %v312
    %v1693 = vpop.f32.mrf.mxu0
    %v1694 = vadd.f32 %v1648, %v1693
    %1695 = vmatmul.f32.gmra.mxu0 %v315
    %v1696 = vpop.f32.mrf.mxu0
    %v1697 = vadd.f32 %v1648, %v1696
    %1698 = vmatmul.f32.gmra.mxu0 %v318
    %v1699 = vpop.f32.mrf.mxu0
    %v1700 = vadd.f32 %v1648, %v1699
    %1701 = vdwg.mxu0
    %v1702 = vmul.f32 %v1573, 0.35355338
    %v1703 = vmul.f32 %v1576, 0.35355338
    %v1705 = vsel %vm411, %v1702, 0
    %v1708 = vsel %vm411, %v1606, 0
    %1710 = vmatpush.xpose.msra.mxu0 0.0
    %1711 = vmatpush.xpose.msra.mxu0 0.0
    %1712 = vmatpush.xpose.msra.mxu0 0.0
    %1713 = vmatpush.xpose.msra.mxu0 0.0
    %1714 = vmatpush.xpose.msra.mxu0 0.0
    %1715 = vmatpush.xpose.msra.mxu0 0.0
    %1716 = vmatpush.xpose.msra.mxu0 0.0
    %1717 = vmatpush.xpose.msra.mxu0 0.0
    %1718 = vmatpush.xpose.msra.mxu0 0.0
    %1719 = vmatpush.xpose.msra.mxu0 0.0
    %1720 = vmatpush.xpose.msra.mxu0 0.0
    %1721 = vmatpush.xpose.msra.mxu0 0.0
    %1722 = vmatpush.xpose.msra.mxu0 0.0
    %1723 = vmatpush.xpose.msra.mxu0 0.0
    %1724 = vmatpush.xpose.msra.mxu0 0.0
    %1725 = vmatpush.xpose.msra.mxu0 %v1708
    %1726 = vmatmul.f32.gmra.mxu0 %v1705
    %v1727 = vpop.f32.mrf.mxu0
    %v1728 = vadd.f32 0.0, %v1727
    %1729 = vdwg.mxu0
    %v1731 = vsel %vm411, %v1703, 0
    %v1734 = vsel %vm411, %v1609, 0
    %1736 = vmatpush.xpose.msra.mxu0 0.0
    %1737 = vmatpush.xpose.msra.mxu0 0.0
    %1738 = vmatpush.xpose.msra.mxu0 0.0
    %1739 = vmatpush.xpose.msra.mxu0 0.0
    %1740 = vmatpush.xpose.msra.mxu0 0.0
    %1741 = vmatpush.xpose.msra.mxu0 0.0
    %1742 = vmatpush.xpose.msra.mxu0 0.0
    %1743 = vmatpush.xpose.msra.mxu0 0.0
    %1744 = vmatpush.xpose.msra.mxu0 0.0
    %1745 = vmatpush.xpose.msra.mxu0 0.0
    %1746 = vmatpush.xpose.msra.mxu0 0.0
    %1747 = vmatpush.xpose.msra.mxu0 0.0
    %1748 = vmatpush.xpose.msra.mxu0 0.0
    %1749 = vmatpush.xpose.msra.mxu0 0.0
    %1750 = vmatpush.xpose.msra.mxu0 0.0
    %1751 = vmatpush.xpose.msra.mxu0 %v1734
    %1752 = vmatmul.f32.gmra.mxu0 %v1731
    %v1753 = vpop.f32.mrf.mxu0
    %v1754 = vadd.f32 0.0, %v1753
    %1755 = vdwg.mxu0
    %v1757 = vsel %vm411, %v1629, 0
    %v1760 = vsel %vm411, %v1632, 0
    %1762 = vmatpush.xpose.msra.mxu0 0.0
    %1763 = vmatpush.xpose.msra.mxu0 0.0
    %1764 = vmatpush.xpose.msra.mxu0 0.0
    %1765 = vmatpush.xpose.msra.mxu0 0.0
    %1766 = vmatpush.xpose.msra.mxu0 0.0
    %1767 = vmatpush.xpose.msra.mxu0 0.0
    %1768 = vmatpush.xpose.msra.mxu0 0.0
    %1769 = vmatpush.xpose.msra.mxu0 0.0
    %1770 = vmatpush.xpose.msra.mxu0 0.0
    %1771 = vmatpush.xpose.msra.mxu0 0.0
    %1772 = vmatpush.xpose.msra.mxu0 0.0
    %1773 = vmatpush.xpose.msra.mxu0 0.0
    %1774 = vmatpush.xpose.msra.mxu0 0.0
    %1775 = vmatpush.xpose.msra.mxu0 0.0
    %1776 = vmatpush.xpose.msra.mxu0 %v1760
    %1777 = vmatpush.xpose.msra.mxu0 %v1757
    %1778 = vmatmul.f32.gmra.mxu0 %v1705
    %v1779 = vpop.f32.mrf.mxu0
    %v1780 = vadd.f32 0.0, %v1779
    %1781 = vdwg.mxu0
    %v1783 = vsel %vm411, %v1635, 0
    %v1786 = vsel %vm411, %v1638, 0
    %1788 = vmatpush.xpose.msra.mxu0 0.0
    %1789 = vmatpush.xpose.msra.mxu0 0.0
    %1790 = vmatpush.xpose.msra.mxu0 0.0
    %1791 = vmatpush.xpose.msra.mxu0 0.0
    %1792 = vmatpush.xpose.msra.mxu0 0.0
    %1793 = vmatpush.xpose.msra.mxu0 0.0
    %1794 = vmatpush.xpose.msra.mxu0 0.0
    %1795 = vmatpush.xpose.msra.mxu0 0.0
    %1796 = vmatpush.xpose.msra.mxu0 0.0
    %1797 = vmatpush.xpose.msra.mxu0 0.0
    %1798 = vmatpush.xpose.msra.mxu0 0.0
    %1799 = vmatpush.xpose.msra.mxu0 0.0
    %1800 = vmatpush.xpose.msra.mxu0 0.0
    %1801 = vmatpush.xpose.msra.mxu0 0.0
    %1802 = vmatpush.xpose.msra.mxu0 %v1786
    %1803 = vmatpush.xpose.msra.mxu0 %v1783
    %1804 = vmatmul.f32.gmra.mxu0 %v1731
    %v1805 = vpop.f32.mrf.mxu0
    %v1806 = vadd.f32 0.0, %v1805
    %1807 = vdwg.mxu0
    %v1808 = vsel %vm411, %v1728, -inf
    %1809 = vmax.xlane.f32.xlu0 %v1808
    %v1810 = vpop.xlane.xlu0 %1809
    %v1811 = vsel %vm411, %v1754, -inf
    %1812 = vmax.xlane.f32.xlu0 %v1811
    %v1813 = vpop.xlane.xlu0 %1812
    %v1814 = vsel %vm522, %v1780, -inf
    %1815 = vmax.xlane.f32.xlu0 %v1814
    %v1816 = vpop.xlane.xlu0 %1815
    %v1817 = vsel %vm522, %v1806, -inf
    %1818 = vmax.xlane.f32.xlu0 %v1817
    %v1819 = vpop.xlane.xlu0 %1818
    %v1820 = vmax.f32 %v1810, %v1816
    %v1821 = vmax.f32 %v1813, %v1819
    %v1822 = vsub.f32 %v1728, %v1820
    %v1823 = vsub.f32 %v1754, %v1821
    %v1824 = vmul.f32 %v1822, 1.442695
    %v1825 = vpow.pop %v1824
    %v1826 = vmul.f32 %v1823, 1.442695
    %v1827 = vpow.pop %v1826
    %v1828 = vsub.f32 %v1780, %v1820
    %v1829 = vsub.f32 %v1806, %v1821
    %v1830 = vmul.f32 %v1828, 1.442695
    %v1831 = vpow.pop %v1830
    %v1832 = vmul.f32 %v1829, 1.442695
    %v1833 = vpow.pop %v1832
    %v1834 = vsel %vm411, %v1825, 0.0
    %1835 = vadd.xlane.f32.xlu0 %v1834
    %v1836 = vpop.xlane.xlu0 %1835
    %v1837 = vsel %vm411, %v1827, 0.0
    %1838 = vadd.xlane.f32.xlu0 %v1837
    %v1839 = vpop.xlane.xlu0 %1838
    %v1840 = vsel %vm522, %v1831, 0.0
    %1841 = vadd.xlane.f32.xlu0 %v1840
    %v1842 = vpop.xlane.xlu0 %1841
    %v1843 = vsel %vm522, %v1833, 0.0
    %1844 = vadd.xlane.f32.xlu0 %v1843
    %v1845 = vpop.xlane.xlu0 %1844
    %v1846 = vadd.f32 %v1836, %v1842
    %v1847 = vadd.f32 %v1839, %v1845
    %v1848 = vrcp.pop %v1846
    %v1849 = vrcp.pop %v1847
    %v1851 = vsel %vm522, %v1831, 0
    %1853 = vmatpush.msra.mxu0 0.0
    %1854 = vmatpush.msra.mxu0 0.0
    %1855 = vmatpush.msra.mxu0 0.0
    %1856 = vmatpush.msra.mxu0 0.0
    %1857 = vmatpush.msra.mxu0 0.0
    %1858 = vmatpush.msra.mxu0 0.0
    %1859 = vmatpush.msra.mxu0 0.0
    %1860 = vmatpush.msra.mxu0 0.0
    %1861 = vmatpush.msra.mxu0 0.0
    %1862 = vmatpush.msra.mxu0 0.0
    %1863 = vmatpush.msra.mxu0 0.0
    %1864 = vmatpush.msra.mxu0 0.0
    %1865 = vmatpush.msra.mxu0 0.0
    %1866 = vmatpush.msra.mxu0 0.0
    %1867 = vmatpush.msra.mxu0 %v1694
    %1868 = vmatpush.msra.mxu0 %v1691
    %1869 = vmatmul.f32.gmra.mxu0 %v1851
    %v1870 = vpop.f32.mrf.mxu0
    %v1871 = vadd.f32 0.0, %v1870
    %1872 = vdwg.mxu0
    %v1874 = vsel %vm522, %v1833, 0
    %1876 = vmatpush.msra.mxu0 0.0
    %1877 = vmatpush.msra.mxu0 0.0
    %1878 = vmatpush.msra.mxu0 0.0
    %1879 = vmatpush.msra.mxu0 0.0
    %1880 = vmatpush.msra.mxu0 0.0
    %1881 = vmatpush.msra.mxu0 0.0
    %1882 = vmatpush.msra.mxu0 0.0
    %1883 = vmatpush.msra.mxu0 0.0
    %1884 = vmatpush.msra.mxu0 0.0
    %1885 = vmatpush.msra.mxu0 0.0
    %1886 = vmatpush.msra.mxu0 0.0
    %1887 = vmatpush.msra.mxu0 0.0
    %1888 = vmatpush.msra.mxu0 0.0
    %1889 = vmatpush.msra.mxu0 0.0
    %1890 = vmatpush.msra.mxu0 %v1700
    %1891 = vmatpush.msra.mxu0 %v1697
    %1892 = vmatmul.f32.gmra.mxu0 %v1874
    %v1893 = vpop.f32.mrf.mxu0
    %v1894 = vadd.f32 0.0, %v1893
    %1895 = vdwg.mxu0
    %v1897 = vsel %vm411, %v1825, 0
    %1899 = vmatpush.msra.mxu0 0.0
    %1900 = vmatpush.msra.mxu0 0.0
    %1901 = vmatpush.msra.mxu0 0.0
    %1902 = vmatpush.msra.mxu0 0.0
    %1903 = vmatpush.msra.mxu0 0.0
    %1904 = vmatpush.msra.mxu0 0.0
    %1905 = vmatpush.msra.mxu0 0.0
    %1906 = vmatpush.msra.mxu0 0.0
    %1907 = vmatpush.msra.mxu0 0.0
    %1908 = vmatpush.msra.mxu0 0.0
    %1909 = vmatpush.msra.mxu0 0.0
    %1910 = vmatpush.msra.mxu0 0.0
    %1911 = vmatpush.msra.mxu0 0.0
    %1912 = vmatpush.msra.mxu0 0.0
    %1913 = vmatpush.msra.mxu0 0.0
    %1914 = vmatpush.msra.mxu0 %v1668
    %1915 = vmatmul.f32.gmra.mxu0 %v1897
    %v1916 = vpop.f32.mrf.mxu0
    %v1917 = vadd.f32 %v1871, %v1916
    %1918 = vdwg.mxu0
    %v1920 = vsel %vm411, %v1827, 0
    %1922 = vmatpush.msra.mxu0 0.0
    %1923 = vmatpush.msra.mxu0 0.0
    %1924 = vmatpush.msra.mxu0 0.0
    %1925 = vmatpush.msra.mxu0 0.0
    %1926 = vmatpush.msra.mxu0 0.0
    %1927 = vmatpush.msra.mxu0 0.0
    %1928 = vmatpush.msra.mxu0 0.0
    %1929 = vmatpush.msra.mxu0 0.0
    %1930 = vmatpush.msra.mxu0 0.0
    %1931 = vmatpush.msra.mxu0 0.0
    %1932 = vmatpush.msra.mxu0 0.0
    %1933 = vmatpush.msra.mxu0 0.0
    %1934 = vmatpush.msra.mxu0 0.0
    %1935 = vmatpush.msra.mxu0 0.0
    %1936 = vmatpush.msra.mxu0 0.0
    %1937 = vmatpush.msra.mxu0 %v1671
    %1938 = vmatmul.f32.gmra.mxu0 %v1920
    %v1939 = vpop.f32.mrf.mxu0
    %v1940 = vadd.f32 %v1894, %v1939
    %1941 = vdwg.mxu0
    %v1942 = vmul.f32 %v1917, %v1848
    %v1943 = vmul.f32 %v1940, %v1849
    %s1944 = scalar_lea.vmem %s14, 24
    %v1945 = vld [vmem:[%s1944] sm:$0xff]
    %v1947 = vsel %vm411, %v1942, 0
    %v1950 = vsel %vm411, %v1943, 0
    %1952 = vmatpush.msra.mxu0 0.0
    %1953 = vmatpush.msra.mxu0 0.0
    %1954 = vmatpush.msra.mxu0 0.0
    %1955 = vmatpush.msra.mxu0 0.0
    %1956 = vmatpush.msra.mxu0 0.0
    %1957 = vmatpush.msra.mxu0 0.0
    %1958 = vmatpush.msra.mxu0 0.0
    %1959 = vmatpush.msra.mxu0 0.0
    %1960 = vmatpush.msra.mxu0 0.0
    %1961 = vmatpush.msra.mxu0 0.0
    %1962 = vmatpush.msra.mxu0 0.0
    %1963 = vmatpush.msra.mxu0 0.0
    %1964 = vmatpush.msra.mxu0 0.0
    %1965 = vmatpush.msra.mxu0 0.0
    %1966 = vmatpush.msra.mxu0 0.0
    %1967 = vmatpush.msra.mxu0 %v1945
    %1968 = vmatmul.f32.gmra.mxu0 %v1947
    %v1969 = vpop.f32.mrf.mxu0
    %v1970 = vadd.f32 0.0, %v1969
    %1971 = vmatmul.f32.gmra.mxu0 %v1950
    %v1972 = vpop.f32.mrf.mxu0
    %v1973 = vadd.f32 0.0, %v1972
    %1974 = vdwg.mxu0
    %v1975 = vadd.f32 %v1543, %v1970
    %v1976 = vadd.f32 %v1544, %v1973
    %v1977 = vadd.f32 %v66, %v1975
    %v1978 = vadd.f32 %v67, %v1976
    %v1979 = vld [vmem:[%s15] sm:$0x1]
    %v1981 = vperm.slane %v1979, 0
    %v1983 = vadd.f32 %v1977, %v1981
    %v1984 = vadd.f32 %v1978, %v1981
    %v1985 = vld [vmem:[%s6] sm:$0x1]
    %v1986 = vld [vmem:[%s7] sm:$0x1]
    %v1987 = vsel %vm74, %v1983, 0.0
    %1988 = vadd.xlane.f32.xlu0 %v1987
    %v1989 = vpop.xlane.xlu0 %1988
    %v1990 = vsel %vm74, %v1984, 0.0
    %1991 = vadd.xlane.f32.xlu0 %v1990
    %v1992 = vpop.xlane.xlu0 %1991
    %v1993 = vmul.f32 %v1989, %v87
    %v1994 = vmul.f32 %v1992, %v87
    %v1995 = vsub.f32 %v1983, %v1993
    %v1996 = vsub.f32 %v1984, %v1994
    %v1997 = vmul.f32 %v1995, %v1995
    %v1998 = vmul.f32 %v1996, %v1996
    %v1999 = vsel %vm74, %v1997, 0.0
    %2000 = vadd.xlane.f32.xlu0 %v1999
    %v2001 = vpop.xlane.xlu0 %2000
    %v2002 = vsel %vm74, %v1998, 0.0
    %2003 = vadd.xlane.f32.xlu0 %v2002
    %v2004 = vpop.xlane.xlu0 %2003
    %v2005 = vmul.f32 %v2001, %v87
    %v2006 = vmul.f32 %v2004, %v87
    %v2007 = vadd.f32 %v2005, 1e-05
    %v2008 = vadd.f32 %v2006, 1e-05
    %v2009 = vrsqrt.pop %v2007
    %v2010 = vmul.f32 %v2009, %v2007
    %v2011 = vmul.f32 %v2010, %v2009
    %v2012 = vmul.f32 0.5, %v2011
    %v2013 = vsub.f32 1.5, %v2012
    %v2014 = vmul.f32 %v2009, %v2013
    %vm2015 = vweird.f32 %v2007
    %vm2016 = vweird.f32 %v2009
    %vm2017 = vmor %vm2015, %vm2016
    %v2018 = vsel %vm2017, %v2009, %v2014
    %v2019 = vrsqrt.pop %v2008
    %v2020 = vmul.f32 %v2019, %v2008
    %v2021 = vmul.f32 %v2020, %v2019
    %v2022 = vmul.f32 0.5, %v2021
    %v2023 = vsub.f32 1.5, %v2022
    %v2024 = vmul.f32 %v2019, %v2023
    %vm2025 = vweird.f32 %v2008
    %vm2026 = vweird.f32 %v2019
    %vm2027 = vmor %vm2025, %vm2026
    %v2028 = vsel %vm2027, %v2019, %v2024
    %v2029 = vmul.f32 %v1995, %v2018
    %v2030 = vmul.f32 %v1996, %v2028
    %v2032 = vperm.slane %v1985, 0
    %v2034 = vmul.f32 %v2029, %v2032
    %v2035 = vmul.f32 %v2030, %v2032
    %v2037 = vperm.slane %v1986, 0
    %v2039 = vadd.f32 %v2034, %v2037
    %v2040 = vadd.f32 %v2035, %v2037
    %v2041 = vld [vmem:[%s16] sm:$0xff]
    %v2042 = vld [vmem:[%s16 + $0x8] sm:$0xff]
    %v2043 = vld [vmem:[%s16 + $0x10] sm:$0xff]
    %v2044 = vld [vmem:[%s16 + $0x18] sm:$0xff]
    %v2045 = vld [vmem:[%s17] sm:$0x1]
    %v2047 = vperm.slane %v2045, 0
    %v2050 = vsel %vm74, %v2039, 0
    %v2053 = vsel %vm74, %v2040, 0
    %2055 = vmatpush.msra.mxu0 0.0
    %2056 = vmatpush.msra.mxu0 0.0
    %2057 = vmatpush.msra.mxu0 0.0
    %2058 = vmatpush.msra.mxu0 0.0
    %2059 = vmatpush.msra.mxu0 0.0
    %2060 = vmatpush.msra.mxu0 0.0
    %2061 = vmatpush.msra.mxu0 0.0
    %2062 = vmatpush.msra.mxu0 0.0
    %2063 = vmatpush.msra.mxu0 0.0
    %2064 = vmatpush.msra.mxu0 0.0
    %2065 = vmatpush.msra.mxu0 0.0
    %2066 = vmatpush.msra.mxu0 0.0
    %2067 = vmatpush.msra.mxu0 %v2044
    %2068 = vmatpush.msra.mxu0 %v2043
    %2069 = vmatpush.msra.mxu0 %v2042
    %2070 = vmatpush.msra.mxu0 %v2041
    %2071 = vmatmul.f32.gmra.mxu0 %v2050
    %v2072 = vpop.f32.mrf.mxu0
    %v2073 = vadd.f32 %v2047, %v2072
    %2074 = vmatmul.f32.gmra.mxu0 %v2053
    %v2075 = vpop.f32.mrf.mxu0
    %v2076 = vadd.f32 %v2047, %v2075
    %2077 = vdwg.mxu0
    %v2078 = vmax.f32 %v2073, 0.0
    %v2079 = vmax.f32 %v2076, 0.0
    %v2080 = vmul.f32 %v2078, %v2078
    %v2081 = vmul.f32 %v2079, %v2079
    %v2082 = vld [vmem:[%s18] sm:$0xff]
    %v2083 = vld [vmem:[%s18 + $0x8] sm:$0xff]
    %v2084 = vld [vmem:[%s18 + $0x10] sm:$0xff]
    %v2085 = vld [vmem:[%s18 + $0x18] sm:$0xff]
    %v2086 = vld [vmem:[%s18 + $0x20] sm:$0xff]
    %v2087 = vld [vmem:[%s18 + $0x28] sm:$0xff]
    %v2088 = vld [vmem:[%s18 + $0x30] sm:$0xff]
    %v2089 = vld [vmem:[%s18 + $0x38] sm:$0xff]
    %v2090 = vld [vmem:[%s18 + $0x40] sm:$0xff]
    %v2091 = vld [vmem:[%s18 + $0x48] sm:$0xff]
    %v2092 = vld [vmem:[%s18 + $0x50] sm:$0xff]
    %v2093 = vld [vmem:[%s18 + $0x58] sm:$0xff]
    %v2094 = vld [vmem:[%s18 + $0x60] sm:$0xff]
    %v2095 = vld [vmem:[%s18 + $0x68] sm:$0xff]
    %v2096 = vld [vmem:[%s18 + $0x70] sm:$0xff]
    %v2097 = vld [vmem:[%s18 + $0x78] sm:$0xff]
    %v2098 = vld [vmem:[%s19] sm:$0x1]
    %v2100 = vperm.slane %v2098, 0
    %2102 = vmatpush.msra.mxu0 %v2097
    %2103 = vmatpush.msra.mxu0 %v2096
    %2104 = vmatpush.msra.mxu0 %v2095
    %2105 = vmatpush.msra.mxu0 %v2094
    %2106 = vmatpush.msra.mxu0 %v2093
    %2107 = vmatpush.msra.mxu0 %v2092
    %2108 = vmatpush.msra.mxu0 %v2091
    %2109 = vmatpush.msra.mxu0 %v2090
    %2110 = vmatpush.msra.mxu0 %v2089
    %2111 = vmatpush.msra.mxu0 %v2088
    %2112 = vmatpush.msra.mxu0 %v2087
    %2113 = vmatpush.msra.mxu0 %v2086
    %2114 = vmatpush.msra.mxu0 %v2085
    %2115 = vmatpush.msra.mxu0 %v2084
    %2116 = vmatpush.msra.mxu0 %v2083
    %2117 = vmatpush.msra.mxu0 %v2082
    %2118 = vmatmul.f32.gmra.mxu0 %v2080
    %v2119 = vpop.f32.mrf.mxu0
    %v2120 = vadd.f32 %v2100, %v2119
    %2121 = vmatmul.f32.gmra.mxu0 %v2081
    %v2122 = vpop.f32.mrf.mxu0
    %v2123 = vadd.f32 %v2100, %v2122
    %2124 = vdwg.mxu0
    %v2125 = vadd.f32 %v1983, %v2120
    %v2126 = vadd.f32 %v1984, %v2123
    %2127 = vst.msk [vmem:[#allocation2] sm:$0xff] %vm74, %v2125
    %2128 = vst.msk [vmem:[#allocation2 + $0x8] sm:$0xff] %vm74, %v2126
    // Predicated region
    $region82: #{tpu_custom_call.1} parent=1 // pred_check
      _
    $region83: #{tpu_custom_call.1} parent=1 // pred_check_branch
      %2130 = sbr.rel (0) target = $region85
    $region84: #{tpu_custom_call.1} parent=1 // pred_region
      %2132 = vsyncadd [#allocation3], 0
      %s2133 = sshll.u32 [#allocation2], 4
      %s2134 = int_to_ptr.vmem [resolvable:$true] %s2133
      %s2135 = sshll.u32 %s20, 4
      %s2136 = int_to_ptr.hbm [resolvable:$true] %s2135
      %2141 = dma.vmem_to_hbm [thread:$0]  %s2134, 256, %s2136, [#allocation3], 128, 128, 8
    $region85: #{tpu_custom_call.1} parent=1 // pred_fallthru
      _
    // Predicated region
    $region86: #{tpu_custom_call.1} parent=1 // pred_check
      _
    $region87: #{tpu_custom_call.1} parent=1 // pred_check_branch
      %2143 = sbr.rel (0) target = $region89
    $region88: #{tpu_custom_call.1} parent=1 // pred_region
      %2145 = dma.done [#allocation3], 256
    $region89: #{tpu_custom_call.1} parent=1 // pred_fallthru
      _
    %2146 = vsyncpa [#allocation3], 1

</llo_original>
